<compile_context>
chip_gen: v5e
topology: v5e:2x2
jax: 0.10.0
libtpu: 0.0.40
codegen_flags: <defaults>
</compile_context>

<pallas_src>
import functools

import jax
import jax.numpy as jnp
from jax import lax
from jax.experimental import pallas as pl
from jax.experimental.pallas import tpu as pltpu

BF16 = jnp.bfloat16
F32 = jnp.float32


def _dot(a, b):
    return jnp.dot(a, b, preferred_element_type=jnp.float32)


def _round_up(x, m):
    return ((x + m - 1) // m) * m


# -------- Fused kernel: edge-MLP prologue + times x (NNConv(mean)->ReLU->GRU) --------
def conv_gru_kernel(times,
                    out0_ref, ea_ref, s_ref, a_ref, invdeg_ref, t_ref, r_ref,
                    wn1_ref, bn1_ref, wn2_ref, bn2_ref,
                    wroot_ref, bconv_ref, wi_ref, wh_ref, bi_ref, bh_ref,
                    out_ref):
    N, hp = out0_ref.shape          # hp = h_dim padded to a multiple of 128

    # ---- Prologue: edge network nn(edge_attr) -> per-edge weights [E, h*h] ----
    e1 = jnp.maximum(_dot(ea_ref[...], wn1_ref[...]) + bn1_ref[...], 0.0)
    w_edge = (_dot(e1.astype(BF16), wn2_ref[...]) + bn2_ref[...]).astype(BF16)

    s_src = s_ref[...]              # [E, N]  bf16 exact one-hot gather
    a_inc = a_ref[...]              # [N, E]  bf16 exact 0/1 incidence
    t_exp = t_ref[...]              # [hp, h*h] bf16 lane-expansion constant
    r_red = r_ref[...]              # [h*h, hp] bf16 lane-reduction constant
    wroot = wroot_ref[...]          # [hp, hp]  bf16
    wi = wi_ref[...]                # [hp, 3hp] bf16 fused input gates
    wh = wh_ref[...]                # [hp, 3hp] bf16 fused hidden gates

    # Loop-invariant broadcasts hoisted (JAX does not CSE broadcast_in_dim).
    inv_deg = jnp.broadcast_to(invdeg_ref[...], (N, hp))       # f32 1/deg
    bconv = jnp.broadcast_to(bconv_ref[...], (N, hp))
    bi = jnp.broadcast_to(bi_ref[...], (N, 3 * hp))
    bh = jnp.broadcast_to(bh_ref[...], (N, 3 * hp))

    def body(_, h):
        h_b = h.astype(BF16)
        # gather source node features per edge:  x_j = S @ h           [E, hp]
        xsrc = _dot(s_src, h_b)
        # per-edge message, lane-dense:  ((x_j @ T) * W_e) @ R         [E, hp]
        xk = _dot(xsrc.astype(BF16), t_exp).astype(BF16)              # [E, h*h]
        msg = _dot(xk * w_edge, r_red)                                # [E, hp]
        # mean aggregation (f32 1/deg) + root weight + bias, ReLU
        agg = _dot(a_inc, msg.astype(BF16)) * inv_deg                 # [N, hp]
        m = jnp.maximum(agg + _dot(h_b, wroot) + bconv, 0.0)
        # fused GRU gates (PyTorch GRU equations); slices on vreg boundaries
        gi = _dot(m.astype(BF16), wi) + bi                            # [N, 3hp]
        gh = _dot(h_b, wh) + bh                                       # [N, 3hp]
        r = jax.nn.sigmoid(gi[:, :hp] + gh[:, :hp])
        z = jax.nn.sigmoid(gi[:, hp:2 * hp] + gh[:, hp:2 * hp])
        n = jnp.tanh(gi[:, 2 * hp:] + r * gh[:, 2 * hp:])
        return (1.0 - z) * n + z * h

    out_ref[...] = lax.fori_loop(0, times, body, out0_ref[...], unroll=True)


# ----------------------------------- Wrapper ----------------------------------
def conv_layer_forward(out, edge_index, edge_attr, params, *, h_dim, times):
    N = out.shape[0]
    E, e_dim = edge_attr.shape
    src, dst = edge_index[0], edge_index[1]

    h_pad = _round_up(h_dim, 128)
    e_pad = _round_up(e_dim, 128)

    # Exact 0/1 gather / incidence matrices (bf16); mean via f32 1/deg scale.
    # TODO(synk): index-based gather + segment-sum would remove the O(E*N) term.
    s_src = jax.nn.one_hot(src, N, dtype=F32).astype(BF16)            # [E, N]
    a_inc_f32 = jax.nn.one_hot(dst, N, dtype=F32).T                   # [N, E]
    deg = a_inc_f32.sum(axis=1, keepdims=True)
    inv_deg = 1.0 / jnp.maximum(deg, 1.0)                             # [N, 1] f32
    a_inc = a_inc_f32.astype(BF16)

    # Constant lane-expansion / reduction matrices (padded lanes are zero rows/cols).
    j = jnp.arange(h_dim * h_dim)
    t_exp = (j[None, :] // h_dim == jnp.arange(h_pad)[:, None]).astype(BF16)  # [hp, h*h]
    r_red = (j[:, None] % h_dim == jnp.arange(h_pad)[None, :]).astype(BF16)   # [h*h, hp]

    def pad2(x, r, c):
        return jnp.pad(x, ((0, r - x.shape[0]), (0, c - x.shape[1])))

    # Edge MLP weights (padded lanes contribute zeros end-to-end).
    wn1 = pad2(params["wn1"], e_pad, h_pad).astype(BF16)
    bn1 = pad2(params["bn1"], 1, h_pad)
    wn2 = pad2(params["wn2"], h_pad, h_dim * h_dim).astype(BF16)
    bn2 = params["bn2"]
    # Conv root + bias.
    wroot = pad2(params["wroot"], h_pad, h_pad).astype(BF16)
    bconv = pad2(params["bconv"], 1, h_pad)
    # Fused GRU weights / biases (each gate block padded so slices are vreg-aligned).
    wi = jnp.concatenate([pad2(params["wir"], h_pad, h_pad),
                          pad2(params["wiz"], h_pad, h_pad),
                          pad2(params["win"], h_pad, h_pad)], 1).astype(BF16)
    wh = jnp.concatenate([pad2(params["whr"], h_pad, h_pad),
                          pad2(params["whz"], h_pad, h_pad),
                          pad2(params["whn"], h_pad, h_pad)], 1).astype(BF16)
    bi = jnp.concatenate([pad2(params["bir"], 1, h_pad),
                          pad2(params["biz"], 1, h_pad),
                          pad2(params["bin"], 1, h_pad)], 1)
    bh = jnp.concatenate([pad2(params["bhr"], 1, h_pad),
                          pad2(params["bhz"], 1, h_pad),
                          pad2(params["bhn"], 1, h_pad)], 1)

    out0 = pad2(out, N, h_pad)
    ea = pad2(edge_attr, E, e_pad).astype(BF16)

    vmem = pl.BlockSpec(memory_space=pltpu.MemorySpace.VMEM)
    args = (out0, ea, s_src, a_inc, inv_deg, t_exp, r_red,
            wn1, bn1, wn2, bn2, wroot, bconv, wi, wh, bi, bh)
    out_pad = pl.pallas_call(
        functools.partial(conv_gru_kernel, times),
        out_shape=jax.ShapeDtypeStruct((N, h_pad), F32),
        in_specs=[vmem] * len(args),
        out_specs=vmem,
        compiler_params=pltpu.CompilerParams(
            vmem_limit_bytes=32 * 1024 * 1024),
    )(*args)
    return out_pad[:, :h_dim]


# ----------------------------- Pure-JAX reference -----------------------------
def reference_forward(out, edge_index, edge_attr, params, *, h_dim, times):
    src, dst = edge_index[0], edge_index[1]
    N = out.shape[0]
    h = out
    e1 = jnp.maximum(edge_attr @ params["wn1"] + params["bn1"], 0.0)
    w_edge = (e1 @ params["wn2"] + params["bn2"]).reshape(-1, h_dim, h_dim)
    for _ in range(times):
        xsrc = out[src]
        msg = jnp.einsum("ek,eko->eo", xsrc, w_edge)
        summed = jnp.zeros((N, h_dim), F32).at[dst].add(msg)
        deg = jnp.zeros((N,), F32).at[dst].add(1.0)
        agg = summed / jnp.maximum(deg, 1.0)[:, None]
        m = jnp.maximum(agg + out @ params["wroot"] + params["bconv"], 0.0)
        r = jax.nn.sigmoid(m @ params["wir"] + params["bir"]
                           + h @ params["whr"] + params["bhr"])
        z = jax.nn.sigmoid(m @ params["wiz"] + params["biz"]
                           + h @ params["whz"] + params["bhz"])
        n = jnp.tanh(m @ params["win"] + params["bin"]
                     + r * (h @ params["whn"] + params["bhn"]))
        h = (1.0 - z) * n + z * h
        out = h
    return out


# ------------------------------------ Main ------------------------------------
if __name__ == "__main__":
    N, E = 16, 32                       # nodes, edges
    H_DIM, E_DIM, TIMES = 32, 8, 3

    key = jax.random.PRNGKey(0)
    ks = jax.random.split(key, 32)

    def w(k, shape, scale=0.1):
        return (scale * jax.random.normal(k, shape)).astype(F32)

    params = {
        "wn1": w(ks[0], (E_DIM, H_DIM)),            "bn1": w(ks[1], (1, H_DIM)),
        "wn2": w(ks[2], (H_DIM, H_DIM * H_DIM)),    "bn2": w(ks[3], (1, H_DIM * H_DIM)),
        "wroot": w(ks[4], (H_DIM, H_DIM)),          "bconv": w(ks[5], (1, H_DIM)),
        "wir": w(ks[6], (H_DIM, H_DIM)),            "wiz": w(ks[7], (H_DIM, H_DIM)),
        "win": w(ks[8], (H_DIM, H_DIM)),
        "whr": w(ks[9], (H_DIM, H_DIM)),            "whz": w(ks[10], (H_DIM, H_DIM)),
        "whn": w(ks[11], (H_DIM, H_DIM)),
        "bir": w(ks[12], (1, H_DIM)),               "biz": w(ks[13], (1, H_DIM)),
        "bin": w(ks[14], (1, H_DIM)),
        "bhr": w(ks[15], (1, H_DIM)),               "bhz": w(ks[16], (1, H_DIM)),
        "bhn": w(ks[17], (1, H_DIM)),
    }

    out0 = w(ks[18], (N, H_DIM), scale=1.0)          # node features (already h_dim)
    edge_attr = w(ks[19], (E, E_DIM), scale=1.0)
    edge_index = jnp.stack([
        jax.random.randint(ks[20], (E,), 0, N),
        jax.random.randint(ks[21], (E,), 0, N),
    ]).astype(jnp.int32)

    out = conv_layer_forward(out0, edge_index, edge_attr, params,
                             h_dim=H_DIM, times=TIMES)
    out = jax.block_until_ready(out)

    ref = reference_forward(out0, edge_index, edge_attr, params,
                            h_dim=H_DIM, times=TIMES)
    assert out.shape == (N, H_DIM)
    assert jnp.allclose(out, ref, atol=3e-2, rtol=3e-2), \
        float(jnp.max(jnp.abs(out - ref)))

    print("KERNEL_OK")
</pallas_src>

<mosaic_0001>
module attributes {stable_mosaic.version = 11 : i64} {
  func.func @conv_gru_kernel(%arg0: memref<16x128xf32, #tpu.memory_space<vmem>>, %arg1: memref<32x128xbf16, #tpu.memory_space<vmem>>, %arg2: memref<32x16xbf16, #tpu.memory_space<vmem>>, %arg3: memref<16x32xbf16, #tpu.memory_space<vmem>>, %arg4: memref<16x1xf32, #tpu.memory_space<vmem>>, %arg5: memref<128x1024xbf16, #tpu.memory_space<vmem>>, %arg6: memref<1024x128xbf16, #tpu.memory_space<vmem>>, %arg7: memref<128x128xbf16, #tpu.memory_space<vmem>>, %arg8: memref<1x128xf32, #tpu.memory_space<vmem>>, %arg9: memref<128x1024xbf16, #tpu.memory_space<vmem>>, %arg10: memref<1x1024xf32, #tpu.memory_space<vmem>>, %arg11: memref<128x128xbf16, #tpu.memory_space<vmem>>, %arg12: memref<1x128xf32, #tpu.memory_space<vmem>>, %arg13: memref<128x384xbf16, #tpu.memory_space<vmem>>, %arg14: memref<128x384xbf16, #tpu.memory_space<vmem>>, %arg15: memref<1x384xf32, #tpu.memory_space<vmem>>, %arg16: memref<1x384xf32, #tpu.memory_space<vmem>>, %arg17: memref<16x128xf32, #tpu.memory_space<vmem>>) attributes {dimension_semantics = [], scalar_prefetch = 0 : i64, scratch_operands = 0 : i64, tpu.core_type = #tpu.core_type<tc>} {
    %c0 = arith.constant 0 : index
    %c0_0 = arith.constant 0 : index
    %0 = vector.load %arg1[%c0, %c0_0] : memref<32x128xbf16, #tpu.memory_space<vmem>>, vector<32x128xbf16>
    %c0_1 = arith.constant 0 : index
    %c0_2 = arith.constant 0 : index
    %1 = vector.load %arg7[%c0_1, %c0_2] : memref<128x128xbf16, #tpu.memory_space<vmem>>, vector<128x128xbf16>
    %cst = arith.constant dense<0.000000e+00> : vector<32x128xf32>
    %2 = tpu.matmul %0, %1, %cst {dimension_numbers = #tpu.dot_dimension_numbers<[1], [0], [0], [1], [0, 0, 1, 1], [], []>} : vector<32x128xbf16>, vector<128x128xbf16>, vector<32x128xf32> -> vector<32x128xf32>
    %c0_3 = arith.constant 0 : index
    %c0_4 = arith.constant 0 : index
    %3 = vector.load %arg8[%c0_3, %c0_4] : memref<1x128xf32, #tpu.memory_space<vmem>>, vector<1x128xf32>
    %4 = vector.broadcast %3 : vector<1x128xf32> to vector<32x128xf32>
    %5 = arith.addf %2, %4 : vector<32x128xf32>
    %cst_5 = arith.constant 0.000000e+00 : f32
    %6 = vector.broadcast %cst_5 : f32 to vector<32x128xf32>
    %7 = arith.maximumf %5, %6 : vector<32x128xf32>
    %8 = arith.truncf %7 : vector<32x128xf32> to vector<32x128xbf16>
    %c0_6 = arith.constant 0 : index
    %c0_7 = arith.constant 0 : index
    %9 = vector.load %arg9[%c0_6, %c0_7] : memref<128x1024xbf16, #tpu.memory_space<vmem>>, vector<128x1024xbf16>
    %cst_8 = arith.constant dense<0.000000e+00> : vector<32x1024xf32>
    %10 = tpu.matmul %8, %9, %cst_8 {dimension_numbers = #tpu.dot_dimension_numbers<[1], [0], [0], [1], [0, 0, 1, 1], [], []>} : vector<32x128xbf16>, vector<128x1024xbf16>, vector<32x1024xf32> -> vector<32x1024xf32>
    %c0_9 = arith.constant 0 : index
    %c0_10 = arith.constant 0 : index
    %11 = vector.load %arg10[%c0_9, %c0_10] : memref<1x1024xf32, #tpu.memory_space<vmem>>, vector<1x1024xf32>
    %12 = vector.broadcast %11 : vector<1x1024xf32> to vector<32x1024xf32>
    %13 = arith.addf %10, %12 : vector<32x1024xf32>
    %14 = arith.truncf %13 : vector<32x1024xf32> to vector<32x1024xbf16>
    %c0_11 = arith.constant 0 : index
    %c0_12 = arith.constant 0 : index
    %15 = vector.load %arg2[%c0_11, %c0_12] : memref<32x16xbf16, #tpu.memory_space<vmem>>, vector<32x16xbf16>
    %c0_13 = arith.constant 0 : index
    %c0_14 = arith.constant 0 : index
    %16 = vector.load %arg3[%c0_13, %c0_14] : memref<16x32xbf16, #tpu.memory_space<vmem>>, vector<16x32xbf16>
    %c0_15 = arith.constant 0 : index
    %c0_16 = arith.constant 0 : index
    %17 = vector.load %arg5[%c0_15, %c0_16] : memref<128x1024xbf16, #tpu.memory_space<vmem>>, vector<128x1024xbf16>
    %c0_17 = arith.constant 0 : index
    %c0_18 = arith.constant 0 : index
    %18 = vector.load %arg6[%c0_17, %c0_18] : memref<1024x128xbf16, #tpu.memory_space<vmem>>, vector<1024x128xbf16>
    %c0_19 = arith.constant 0 : index
    %c0_20 = arith.constant 0 : index
    %19 = vector.load %arg11[%c0_19, %c0_20] : memref<128x128xbf16, #tpu.memory_space<vmem>>, vector<128x128xbf16>
    %c0_21 = arith.constant 0 : index
    %c0_22 = arith.constant 0 : index
    %20 = vector.load %arg13[%c0_21, %c0_22] : memref<128x384xbf16, #tpu.memory_space<vmem>>, vector<128x384xbf16>
    %c0_23 = arith.constant 0 : index
    %c0_24 = arith.constant 0 : index
    %21 = vector.load %arg14[%c0_23, %c0_24] : memref<128x384xbf16, #tpu.memory_space<vmem>>, vector<128x384xbf16>
    %c0_25 = arith.constant 0 : index
    %c0_26 = arith.constant 0 : index
    %22 = vector.load %arg4[%c0_25, %c0_26] : memref<16x1xf32, #tpu.memory_space<vmem>>, vector<16x1xf32>
    %23 = vector.shape_cast %22 : vector<16x1xf32> to vector<16x1xf32>
    %24 = vector.broadcast %23 : vector<16x1xf32> to vector<16x128xf32>
    %c0_27 = arith.constant 0 : index
    %c0_28 = arith.constant 0 : index
    %25 = vector.load %arg12[%c0_27, %c0_28] : memref<1x128xf32, #tpu.memory_space<vmem>>, vector<1x128xf32>
    %26 = vector.shape_cast %25 : vector<1x128xf32> to vector<1x128xf32>
    %27 = vector.broadcast %26 : vector<1x128xf32> to vector<16x128xf32>
    %c0_29 = arith.constant 0 : index
    %c0_30 = arith.constant 0 : index
    %28 = vector.load %arg15[%c0_29, %c0_30] : memref<1x384xf32, #tpu.memory_space<vmem>>, vector<1x384xf32>
    %29 = vector.shape_cast %28 : vector<1x384xf32> to vector<1x384xf32>
    %30 = vector.broadcast %29 : vector<1x384xf32> to vector<16x384xf32>
    %c0_31 = arith.constant 0 : index
    %c0_32 = arith.constant 0 : index
    %31 = vector.load %arg16[%c0_31, %c0_32] : memref<1x384xf32, #tpu.memory_space<vmem>>, vector<1x384xf32>
    %32 = vector.shape_cast %31 : vector<1x384xf32> to vector<1x384xf32>
    %33 = vector.broadcast %32 : vector<1x384xf32> to vector<16x384xf32>
    %c0_33 = arith.constant 0 : index
    %c0_34 = arith.constant 0 : index
    %34 = vector.load %arg0[%c0_33, %c0_34] : memref<16x128xf32, #tpu.memory_space<vmem>>, vector<16x128xf32>
    %c0_i32 = arith.constant 0 : i32
    %35 = arith.truncf %34 : vector<16x128xf32> to vector<16x128xbf16>
    %cst_35 = arith.constant dense<0.000000e+00> : vector<32x128xf32>
    %36 = tpu.matmul %15, %35, %cst_35 {dimension_numbers = #tpu.dot_dimension_numbers<[1], [0], [0], [1], [0, 0, 1, 1], [], []>} : vector<32x16xbf16>, vector<16x128xbf16>, vector<32x128xf32> -> vector<32x128xf32>
    %37 = arith.truncf %36 : vector<32x128xf32> to vector<32x128xbf16>
    %cst_36 = arith.constant dense<0.000000e+00> : vector<32x1024xf32>
    %38 = tpu.matmul %37, %17, %cst_36 {dimension_numbers = #tpu.dot_dimension_numbers<[1], [0], [0], [1], [0, 0, 1, 1], [], []>} : vector<32x128xbf16>, vector<128x1024xbf16>, vector<32x1024xf32> -> vector<32x1024xf32>
    %39 = arith.truncf %38 : vector<32x1024xf32> to vector<32x1024xbf16>
    %40 = arith.mulf %39, %14 : vector<32x1024xbf16>
    %cst_37 = arith.constant dense<0.000000e+00> : vector<32x128xf32>
    %41 = tpu.matmul %40, %18, %cst_37 {dimension_numbers = #tpu.dot_dimension_numbers<[1], [0], [0], [1], [0, 0, 1, 1], [], []>} : vector<32x1024xbf16>, vector<1024x128xbf16>, vector<32x128xf32> -> vector<32x128xf32>
    %42 = arith.truncf %41 : vector<32x128xf32> to vector<32x128xbf16>
    %cst_38 = arith.constant dense<0.000000e+00> : vector<16x128xf32>
    %43 = tpu.matmul %16, %42, %cst_38 {dimension_numbers = #tpu.dot_dimension_numbers<[1], [0], [0], [1], [0, 0, 1, 1], [], []>} : vector<16x32xbf16>, vector<32x128xbf16>, vector<16x128xf32> -> vector<16x128xf32>
    %44 = arith.mulf %43, %24 : vector<16x128xf32>
    %cst_39 = arith.constant dense<0.000000e+00> : vector<16x128xf32>
    %45 = tpu.matmul %35, %19, %cst_39 {dimension_numbers = #tpu.dot_dimension_numbers<[1], [0], [0], [1], [0, 0, 1, 1], [], []>} : vector<16x128xbf16>, vector<128x128xbf16>, vector<16x128xf32> -> vector<16x128xf32>
    %46 = arith.addf %44, %45 : vector<16x128xf32>
    %47 = arith.addf %46, %27 : vector<16x128xf32>
    %cst_40 = arith.constant 0.000000e+00 : f32
    %48 = vector.broadcast %cst_40 : f32 to vector<16x128xf32>
    %49 = arith.maximumf %47, %48 : vector<16x128xf32>
    %50 = arith.truncf %49 : vector<16x128xf32> to vector<16x128xbf16>
    %cst_41 = arith.constant dense<0.000000e+00> : vector<16x384xf32>
    %51 = tpu.matmul %50, %20, %cst_41 {dimension_numbers = #tpu.dot_dimension_numbers<[1], [0], [0], [1], [0, 0, 1, 1], [], []>} : vector<16x128xbf16>, vector<128x384xbf16>, vector<16x384xf32> -> vector<16x384xf32>
    %52 = arith.addf %51, %30 : vector<16x384xf32>
    %cst_42 = arith.constant dense<0.000000e+00> : vector<16x384xf32>
    %53 = tpu.matmul %35, %21, %cst_42 {dimension_numbers = #tpu.dot_dimension_numbers<[1], [0], [0], [1], [0, 0, 1, 1], [], []>} : vector<16x128xbf16>, vector<128x384xbf16>, vector<16x384xf32> -> vector<16x384xf32>
    %54 = arith.addf %53, %33 : vector<16x384xf32>
    %55 = vector.extract_strided_slice %52 {offsets = [0, 0], sizes = [16, 128], strides = [1, 1]} : vector<16x384xf32> to vector<16x128xf32>
    %56 = vector.extract_strided_slice %54 {offsets = [0, 0], sizes = [16, 128], strides = [1, 1]} : vector<16x384xf32> to vector<16x128xf32>
    %57 = arith.addf %55, %56 : vector<16x128xf32>
    %58 = arith.negf %57 : vector<16x128xf32>
    %59 = math.exp %58 : vector<16x128xf32>
    %cst_43 = arith.constant 1.000000e+00 : f32
    %60 = vector.broadcast %cst_43 : f32 to vector<16x128xf32>
    %61 = arith.addf %60, %59 : vector<16x128xf32>
    %62 = arith.divf %60, %61 : vector<16x128xf32>
    %63 = vector.extract_strided_slice %52 {offsets = [0, 128], sizes = [16, 128], strides = [1, 1]} : vector<16x384xf32> to vector<16x128xf32>
    %64 = vector.extract_strided_slice %54 {offsets = [0, 128], sizes = [16, 128], strides = [1, 1]} : vector<16x384xf32> to vector<16x128xf32>
    %65 = arith.addf %63, %64 : vector<16x128xf32>
    %66 = arith.negf %65 : vector<16x128xf32>
    %67 = math.exp %66 : vector<16x128xf32>
    %cst_44 = arith.constant 1.000000e+00 : f32
    %68 = vector.broadcast %cst_44 : f32 to vector<16x128xf32>
    %69 = arith.addf %68, %67 : vector<16x128xf32>
    %70 = arith.divf %68, %69 : vector<16x128xf32>
    %71 = vector.extract_strided_slice %52 {offsets = [0, 256], sizes = [16, 128], strides = [1, 1]} : vector<16x384xf32> to vector<16x128xf32>
    %72 = vector.extract_strided_slice %54 {offsets = [0, 256], sizes = [16, 128], strides = [1, 1]} : vector<16x384xf32> to vector<16x128xf32>
    %73 = arith.mulf %62, %72 : vector<16x128xf32>
    %74 = arith.addf %71, %73 : vector<16x128xf32>
    %75 = math.tanh %74 : vector<16x128xf32>
    %cst_45 = arith.constant 1.000000e+00 : f32
    %76 = vector.broadcast %cst_45 : f32 to vector<16x128xf32>
    %77 = arith.subf %76, %70 : vector<16x128xf32>
    %78 = arith.mulf %77, %75 : vector<16x128xf32>
    %79 = arith.mulf %70, %34 : vector<16x128xf32>
    %80 = arith.addf %78, %79 : vector<16x128xf32>
    %c1_i32 = arith.constant 1 : i32
    %81 = arith.truncf %80 : vector<16x128xf32> to vector<16x128xbf16>
    %cst_46 = arith.constant dense<0.000000e+00> : vector<32x128xf32>
    %82 = tpu.matmul %15, %81, %cst_46 {dimension_numbers = #tpu.dot_dimension_numbers<[1], [0], [0], [1], [0, 0, 1, 1], [], []>} : vector<32x16xbf16>, vector<16x128xbf16>, vector<32x128xf32> -> vector<32x128xf32>
    %83 = arith.truncf %82 : vector<32x128xf32> to vector<32x128xbf16>
    %cst_47 = arith.constant dense<0.000000e+00> : vector<32x1024xf32>
    %84 = tpu.matmul %83, %17, %cst_47 {dimension_numbers = #tpu.dot_dimension_numbers<[1], [0], [0], [1], [0, 0, 1, 1], [], []>} : vector<32x128xbf16>, vector<128x1024xbf16>, vector<32x1024xf32> -> vector<32x1024xf32>
    %85 = arith.truncf %84 : vector<32x1024xf32> to vector<32x1024xbf16>
    %86 = arith.mulf %85, %14 : vector<32x1024xbf16>
    %cst_48 = arith.constant dense<0.000000e+00> : vector<32x128xf32>
    %87 = tpu.matmul %86, %18, %cst_48 {dimension_numbers = #tpu.dot_dimension_numbers<[1], [0], [0], [1], [0, 0, 1, 1], [], []>} : vector<32x1024xbf16>, vector<1024x128xbf16>, vector<32x128xf32> -> vector<32x128xf32>
    %88 = arith.truncf %87 : vector<32x128xf32> to vector<32x128xbf16>
    %cst_49 = arith.constant dense<0.000000e+00> : vector<16x128xf32>
    %89 = tpu.matmul %16, %88, %cst_49 {dimension_numbers = #tpu.dot_dimension_numbers<[1], [0], [0], [1], [0, 0, 1, 1], [], []>} : vector<16x32xbf16>, vector<32x128xbf16>, vector<16x128xf32> -> vector<16x128xf32>
    %90 = arith.mulf %89, %24 : vector<16x128xf32>
    %cst_50 = arith.constant dense<0.000000e+00> : vector<16x128xf32>
    %91 = tpu.matmul %81, %19, %cst_50 {dimension_numbers = #tpu.dot_dimension_numbers<[1], [0], [0], [1], [0, 0, 1, 1], [], []>} : vector<16x128xbf16>, vector<128x128xbf16>, vector<16x128xf32> -> vector<16x128xf32>
    %92 = arith.addf %90, %91 : vector<16x128xf32>
    %93 = arith.addf %92, %27 : vector<16x128xf32>
    %cst_51 = arith.constant 0.000000e+00 : f32
    %94 = vector.broadcast %cst_51 : f32 to vector<16x128xf32>
    %95 = arith.maximumf %93, %94 : vector<16x128xf32>
    %96 = arith.truncf %95 : vector<16x128xf32> to vector<16x128xbf16>
    %cst_52 = arith.constant dense<0.000000e+00> : vector<16x384xf32>
    %97 = tpu.matmul %96, %20, %cst_52 {dimension_numbers = #tpu.dot_dimension_numbers<[1], [0], [0], [1], [0, 0, 1, 1], [], []>} : vector<16x128xbf16>, vector<128x384xbf16>, vector<16x384xf32> -> vector<16x384xf32>
    %98 = arith.addf %97, %30 : vector<16x384xf32>
    %cst_53 = arith.constant dense<0.000000e+00> : vector<16x384xf32>
    %99 = tpu.matmul %81, %21, %cst_53 {dimension_numbers = #tpu.dot_dimension_numbers<[1], [0], [0], [1], [0, 0, 1, 1], [], []>} : vector<16x128xbf16>, vector<128x384xbf16>, vector<16x384xf32> -> vector<16x384xf32>
    %100 = arith.addf %99, %33 : vector<16x384xf32>
    %101 = vector.extract_strided_slice %98 {offsets = [0, 0], sizes = [16, 128], strides = [1, 1]} : vector<16x384xf32> to vector<16x128xf32>
    %102 = vector.extract_strided_slice %100 {offsets = [0, 0], sizes = [16, 128], strides = [1, 1]} : vector<16x384xf32> to vector<16x128xf32>
    %103 = arith.addf %101, %102 : vector<16x128xf32>
    %104 = arith.negf %103 : vector<16x128xf32>
    %105 = math.exp %104 : vector<16x128xf32>
    %cst_54 = arith.constant 1.000000e+00 : f32
    %106 = vector.broadcast %cst_54 : f32 to vector<16x128xf32>
    %107 = arith.addf %106, %105 : vector<16x128xf32>
    %108 = arith.divf %106, %107 : vector<16x128xf32>
    %109 = vector.extract_strided_slice %98 {offsets = [0, 128], sizes = [16, 128], strides = [1, 1]} : vector<16x384xf32> to vector<16x128xf32>
    %110 = vector.extract_strided_slice %100 {offsets = [0, 128], sizes = [16, 128], strides = [1, 1]} : vector<16x384xf32> to vector<16x128xf32>
    %111 = arith.addf %109, %110 : vector<16x128xf32>
    %112 = arith.negf %111 : vector<16x128xf32>
    %113 = math.exp %112 : vector<16x128xf32>
    %cst_55 = arith.constant 1.000000e+00 : f32
    %114 = vector.broadcast %cst_55 : f32 to vector<16x128xf32>
    %115 = arith.addf %114, %113 : vector<16x128xf32>
    %116 = arith.divf %114, %115 : vector<16x128xf32>
    %117 = vector.extract_strided_slice %98 {offsets = [0, 256], sizes = [16, 128], strides = [1, 1]} : vector<16x384xf32> to vector<16x128xf32>
    %118 = vector.extract_strided_slice %100 {offsets = [0, 256], sizes = [16, 128], strides = [1, 1]} : vector<16x384xf32> to vector<16x128xf32>
    %119 = arith.mulf %108, %118 : vector<16x128xf32>
    %120 = arith.addf %117, %119 : vector<16x128xf32>
    %121 = math.tanh %120 : vector<16x128xf32>
    %cst_56 = arith.constant 1.000000e+00 : f32
    %122 = vector.broadcast %cst_56 : f32 to vector<16x128xf32>
    %123 = arith.subf %122, %116 : vector<16x128xf32>
    %124 = arith.mulf %123, %121 : vector<16x128xf32>
    %125 = arith.mulf %116, %80 : vector<16x128xf32>
    %126 = arith.addf %124, %125 : vector<16x128xf32>
    %c2_i32 = arith.constant 2 : i32
    %127 = arith.truncf %126 : vector<16x128xf32> to vector<16x128xbf16>
    %cst_57 = arith.constant dense<0.000000e+00> : vector<32x128xf32>
    %128 = tpu.matmul %15, %127, %cst_57 {dimension_numbers = #tpu.dot_dimension_numbers<[1], [0], [0], [1], [0, 0, 1, 1], [], []>} : vector<32x16xbf16>, vector<16x128xbf16>, vector<32x128xf32> -> vector<32x128xf32>
    %129 = arith.truncf %128 : vector<32x128xf32> to vector<32x128xbf16>
    %cst_58 = arith.constant dense<0.000000e+00> : vector<32x1024xf32>
    %130 = tpu.matmul %129, %17, %cst_58 {dimension_numbers = #tpu.dot_dimension_numbers<[1], [0], [0], [1], [0, 0, 1, 1], [], []>} : vector<32x128xbf16>, vector<128x1024xbf16>, vector<32x1024xf32> -> vector<32x1024xf32>
    %131 = arith.truncf %130 : vector<32x1024xf32> to vector<32x1024xbf16>
    %132 = arith.mulf %131, %14 : vector<32x1024xbf16>
    %cst_59 = arith.constant dense<0.000000e+00> : vector<32x128xf32>
    %133 = tpu.matmul %132, %18, %cst_59 {dimension_numbers = #tpu.dot_dimension_numbers<[1], [0], [0], [1], [0, 0, 1, 1], [], []>} : vector<32x1024xbf16>, vector<1024x128xbf16>, vector<32x128xf32> -> vector<32x128xf32>
    %134 = arith.truncf %133 : vector<32x128xf32> to vector<32x128xbf16>
    %cst_60 = arith.constant dense<0.000000e+00> : vector<16x128xf32>
    %135 = tpu.matmul %16, %134, %cst_60 {dimension_numbers = #tpu.dot_dimension_numbers<[1], [0], [0], [1], [0, 0, 1, 1], [], []>} : vector<16x32xbf16>, vector<32x128xbf16>, vector<16x128xf32> -> vector<16x128xf32>
    %136 = arith.mulf %135, %24 : vector<16x128xf32>
    %cst_61 = arith.constant dense<0.000000e+00> : vector<16x128xf32>
    %137 = tpu.matmul %127, %19, %cst_61 {dimension_numbers = #tpu.dot_dimension_numbers<[1], [0], [0], [1], [0, 0, 1, 1], [], []>} : vector<16x128xbf16>, vector<128x128xbf16>, vector<16x128xf32> -> vector<16x128xf32>
    %138 = arith.addf %136, %137 : vector<16x128xf32>
    %139 = arith.addf %138, %27 : vector<16x128xf32>
    %cst_62 = arith.constant 0.000000e+00 : f32
    %140 = vector.broadcast %cst_62 : f32 to vector<16x128xf32>
    %141 = arith.maximumf %139, %140 : vector<16x128xf32>
    %142 = arith.truncf %141 : vector<16x128xf32> to vector<16x128xbf16>
    %cst_63 = arith.constant dense<0.000000e+00> : vector<16x384xf32>
    %143 = tpu.matmul %142, %20, %cst_63 {dimension_numbers = #tpu.dot_dimension_numbers<[1], [0], [0], [1], [0, 0, 1, 1], [], []>} : vector<16x128xbf16>, vector<128x384xbf16>, vector<16x384xf32> -> vector<16x384xf32>
    %144 = arith.addf %143, %30 : vector<16x384xf32>
    %cst_64 = arith.constant dense<0.000000e+00> : vector<16x384xf32>
    %145 = tpu.matmul %127, %21, %cst_64 {dimension_numbers = #tpu.dot_dimension_numbers<[1], [0], [0], [1], [0, 0, 1, 1], [], []>} : vector<16x128xbf16>, vector<128x384xbf16>, vector<16x384xf32> -> vector<16x384xf32>
    %146 = arith.addf %145, %33 : vector<16x384xf32>
    %147 = vector.extract_strided_slice %144 {offsets = [0, 0], sizes = [16, 128], strides = [1, 1]} : vector<16x384xf32> to vector<16x128xf32>
    %148 = vector.extract_strided_slice %146 {offsets = [0, 0], sizes = [16, 128], strides = [1, 1]} : vector<16x384xf32> to vector<16x128xf32>
    %149 = arith.addf %147, %148 : vector<16x128xf32>
    %150 = arith.negf %149 : vector<16x128xf32>
    %151 = math.exp %150 : vector<16x128xf32>
    %cst_65 = arith.constant 1.000000e+00 : f32
    %152 = vector.broadcast %cst_65 : f32 to vector<16x128xf32>
    %153 = arith.addf %152, %151 : vector<16x128xf32>
    %154 = arith.divf %152, %153 : vector<16x128xf32>
    %155 = vector.extract_strided_slice %144 {offsets = [0, 128], sizes = [16, 128], strides = [1, 1]} : vector<16x384xf32> to vector<16x128xf32>
    %156 = vector.extract_strided_slice %146 {offsets = [0, 128], sizes = [16, 128], strides = [1, 1]} : vector<16x384xf32> to vector<16x128xf32>
    %157 = arith.addf %155, %156 : vector<16x128xf32>
    %158 = arith.negf %157 : vector<16x128xf32>
    %159 = math.exp %158 : vector<16x128xf32>
    %cst_66 = arith.constant 1.000000e+00 : f32
    %160 = vector.broadcast %cst_66 : f32 to vector<16x128xf32>
    %161 = arith.addf %160, %159 : vector<16x128xf32>
    %162 = arith.divf %160, %161 : vector<16x128xf32>
    %163 = vector.extract_strided_slice %144 {offsets = [0, 256], sizes = [16, 128], strides = [1, 1]} : vector<16x384xf32> to vector<16x128xf32>
    %164 = vector.extract_strided_slice %146 {offsets = [0, 256], sizes = [16, 128], strides = [1, 1]} : vector<16x384xf32> to vector<16x128xf32>
    %165 = arith.mulf %154, %164 : vector<16x128xf32>
    %166 = arith.addf %163, %165 : vector<16x128xf32>
    %167 = math.tanh %166 : vector<16x128xf32>
    %cst_67 = arith.constant 1.000000e+00 : f32
    %168 = vector.broadcast %cst_67 : f32 to vector<16x128xf32>
    %169 = arith.subf %168, %162 : vector<16x128xf32>
    %170 = arith.mulf %169, %167 : vector<16x128xf32>
    %171 = arith.mulf %162, %126 : vector<16x128xf32>
    %172 = arith.addf %170, %171 : vector<16x128xf32>
    %c0_68 = arith.constant 0 : index
    %c0_69 = arith.constant 0 : index
    %173 = vector.load %arg17[%c0_68, %c0_69] : memref<16x128xf32, #tpu.memory_space<vmem>>, vector<16x128xf32>
    tpu.vector_store %arg17[%c0_68, %c0_69], %172 {strides = array<i32>} : memref<16x128xf32, #tpu.memory_space<vmem>>, vector<16x128xf32>,
    return
  }
}

</mosaic_0001>

<llo_original>
// kernel: tpu_custom_call.1
$region0: #{tpu_custom_call.1}
  #allocation0 [shape = 'u32[]', space=smem, size = 0x4, offset = 0x4, fixed_abs, tag = 'smem constant byte address 0x4 - core index']
  #allocation1 [shape = 'u32[72,128]{1,0:T(1,128)}', space=vmem, size = 0x9000, scoped, tag = 'internal scratch']
  %s0 = inlined_call_operand.vmem [shape: f32[16,128], index: 0, kind: input, shape index: {}]
  %s1 = inlined_call_operand.vmem [shape: bf16[32,128], index: 1, kind: input, shape index: {}]
  %s2 = inlined_call_operand.vmem [shape: bf16[32,16], index: 2, kind: input, shape index: {}]
  %s3 = inlined_call_operand.vmem [shape: bf16[16,32], index: 3, kind: input, shape index: {}]
  %s4 = inlined_call_operand.vmem [shape: f32[16,1], index: 4, kind: input, shape index: {}]
  %s5 = inlined_call_operand.hbm [shape: bf16[128,1024], index: 5, kind: input, shape index: {}]
  %s6 = inlined_call_operand.hbm [shape: bf16[1024,128], index: 6, kind: input, shape index: {}]
  %s7 = inlined_call_operand.hbm [shape: bf16[128,128], index: 7, kind: input, shape index: {}]
  %s8 = inlined_call_operand.hbm [shape: f32[1,128], index: 8, kind: input, shape index: {}]
  %s9 = inlined_call_operand.hbm [shape: bf16[128,1024], index: 9, kind: input, shape index: {}]
  %s10 = inlined_call_operand.vmem [shape: f32[1,1024], index: 10, kind: input, shape index: {}]
  %s11 = inlined_call_operand.hbm [shape: bf16[128,128], index: 11, kind: input, shape index: {}]
  %s12 = inlined_call_operand.hbm [shape: f32[1,128], index: 12, kind: input, shape index: {}]
  %s13 = inlined_call_operand.hbm [shape: bf16[128,384], index: 13, kind: input, shape index: {}]
  %s14 = inlined_call_operand.hbm [shape: bf16[128,384], index: 14, kind: input, shape index: {}]
  %s15 = inlined_call_operand.vmem [shape: f32[1,384], index: 15, kind: input, shape index: {}]
  %s16 = inlined_call_operand.vmem [shape: f32[1,384], index: 16, kind: input, shape index: {}]
  %s17 = inlined_call_operand.hbm [shape: f32[16,128], index: 17, kind: output, shape index: {}]
  %s18 = sld [smem:[#allocation0]]
  $region114: #{tpu_custom_call.1} parent=0
    _
  %s20 = ssub.s32 1, %s18
  %s21 = scalar_select 0, %s20, %s18
  $region1: #{tpu_custom_call.1} parent=0
    #allocation2 [shape = 'u8[262144]{0}', space=vmem, size = 0x40000, scoped, tag = 'input window, operand 5, single buffered']
    #allocation3 [shape = 's32[1]{0}', space=sflag, size = 0x4, scoped, tag = 'scoped memory for tpu_custom_call.1']
    #allocation4 [shape = 's32[1]{0}', space=sflag, size = 0x4, scoped, tag = 'scoped memory for tpu_custom_call.1']
    #allocation5 [shape = 'u8[262144]{0}', space=vmem, size = 0x40000, scoped, tag = 'input window, operand 6, single buffered']
    #allocation6 [shape = 's32[1]{0}', space=sflag, size = 0x4, scoped, tag = 'scoped memory for tpu_custom_call.1']
    #allocation7 [shape = 'u8[32768]{0}', space=vmem, size = 0x8000, scoped, tag = 'input window, operand 7, single buffered']
    #allocation8 [shape = 'u8[512]{0}', space=vmem, size = 0x400, scoped, tag = 'input window, operand 8, single buffered']
    #allocation9 [shape = 's32[1]{0}', space=sflag, size = 0x4, scoped, tag = 'scoped memory for tpu_custom_call.1']
    #allocation10 [shape = 'u8[262144]{0}', space=vmem, size = 0x40000, scoped, tag = 'input window, operand 9, single buffered']
    #allocation11 [shape = 'u8[32768]{0}', space=vmem, size = 0x8000, scoped, tag = 'input window, operand 11, single buffered']
    #allocation12 [shape = 's32[1]{0}', space=sflag, size = 0x4, scoped, tag = 'scoped memory for tpu_custom_call.1']
    #allocation13 [shape = 'u8[512]{0}', space=vmem, size = 0x400, scoped, tag = 'input window, operand 12, single buffered']
    #allocation14 [shape = 'u8[98304]{0}', space=vmem, size = 0x18000, scoped, tag = 'input window, operand 13, single buffered']
    #allocation15 [shape = 's32[1]{0}', space=sflag, size = 0x4, scoped, tag = 'scoped memory for tpu_custom_call.1']
    #allocation16 [shape = 'u8[98304]{0}', space=vmem, size = 0x18000, scoped, tag = 'input window, operand 14, single buffered']
    #allocation17 [shape = 'u8[8192]{0}', space=vmem, size = 0x2000, scoped, tag = 'output window, operand 0, single buffered']
    %22 = vsyncpa [#allocation3], 0
    %23 = vsyncpa [#allocation6], 0
    %24 = vsyncpa [#allocation9], 0
    %25 = vsyncpa [#allocation12], 0
    %26 = vsyncpa [#allocation15], 0
    %27 = vsyncpa [#allocation4], 0
    // Predicated region
    $region2: #{tpu_custom_call.1} parent=1 // pred_check
      _
    $region3: #{tpu_custom_call.1} parent=1 // pred_check_branch
      %29 = sbr.rel (0) target = $region5
    $region4: #{tpu_custom_call.1} parent=1 // pred_region
      _
    $region5: #{tpu_custom_call.1} parent=1 // pred_fallthru
      _
    // Predicated region
    $region6: #{tpu_custom_call.1} parent=1 // pred_check
      _
    $region7: #{tpu_custom_call.1} parent=1 // pred_check_branch
      %31 = sbr.rel (0) target = $region9
    $region8: #{tpu_custom_call.1} parent=1 // pred_region
      _
    $region9: #{tpu_custom_call.1} parent=1 // pred_fallthru
      _
    // Predicated region
    $region10: #{tpu_custom_call.1} parent=1 // pred_check
      _
    $region11: #{tpu_custom_call.1} parent=1 // pred_check_branch
      %33 = sbr.rel (0) target = $region13
    $region12: #{tpu_custom_call.1} parent=1 // pred_region
      _
    $region13: #{tpu_custom_call.1} parent=1 // pred_fallthru
      _
    // Predicated region
    $region14: #{tpu_custom_call.1} parent=1 // pred_check
      _
    $region15: #{tpu_custom_call.1} parent=1 // pred_check_branch
      %35 = sbr.rel (0) target = $region17
    $region16: #{tpu_custom_call.1} parent=1 // pred_region
      _
    $region17: #{tpu_custom_call.1} parent=1 // pred_fallthru
      _
    // Predicated region
    $region18: #{tpu_custom_call.1} parent=1 // pred_check
      _
    $region19: #{tpu_custom_call.1} parent=1 // pred_check_branch
      %37 = sbr.rel (0) target = $region21
    $region20: #{tpu_custom_call.1} parent=1 // pred_region
      _
    $region21: #{tpu_custom_call.1} parent=1 // pred_fallthru
      _
    // Predicated region
    $region22: #{tpu_custom_call.1} parent=1 // pred_check
      _
    $region23: #{tpu_custom_call.1} parent=1 // pred_check_branch
      %39 = sbr.rel (0) target = $region25
    $region24: #{tpu_custom_call.1} parent=1 // pred_region
      %41 = vsyncadd [#allocation3], 0
      %s42 = sshll.u32 %s5, 4
      %s43 = int_to_ptr.hbm [resolvable:$true] %s42
      %s44 = sshll.u32 [#allocation2], 4
      %s45 = int_to_ptr.vmem [resolvable:$true] %s44
      %50 = dma.hbm_to_vmem [thread:$0]  %s43, 8192, %s45, [#allocation3], 512, 512, 32
    $region25: #{tpu_custom_call.1} parent=1 // pred_fallthru
      _
    // Predicated region
    $region26: #{tpu_custom_call.1} parent=1 // pred_check
      _
    $region27: #{tpu_custom_call.1} parent=1 // pred_check_branch
      %52 = sbr.rel (0) target = $region29
    $region28: #{tpu_custom_call.1} parent=1 // pred_region
      %54 = vsyncadd [#allocation6], 0
      %s55 = sshll.u32 %s6, 4
      %s56 = int_to_ptr.hbm [resolvable:$true] %s55
      %s57 = sshll.u32 [#allocation5], 4
      %s58 = int_to_ptr.vmem [resolvable:$true] %s57
      %63 = dma.hbm_to_vmem [thread:$0]  %s56, 8192, %s58, [#allocation6], 64, 64, 4
    $region29: #{tpu_custom_call.1} parent=1 // pred_fallthru
      _
    // Predicated region
    $region30: #{tpu_custom_call.1} parent=1 // pred_check
      _
    $region31: #{tpu_custom_call.1} parent=1 // pred_check_branch
      %65 = sbr.rel (0) target = $region33
    $region32: #{tpu_custom_call.1} parent=1 // pred_region
      %67 = vsyncadd [#allocation6], 0
      %s68 = sshll.u32 %s7, 4
      %s69 = int_to_ptr.hbm [resolvable:$true] %s68
      %s70 = sshll.u32 [#allocation7], 4
      %s71 = int_to_ptr.vmem [resolvable:$true] %s70
      %76 = dma.hbm_to_vmem [thread:$0]  %s69, 1024, %s71, [#allocation6], 64, 64, 4
    $region33: #{tpu_custom_call.1} parent=1 // pred_fallthru
      _
    // Predicated region
    $region34: #{tpu_custom_call.1} parent=1 // pred_check
      _
    $region35: #{tpu_custom_call.1} parent=1 // pred_check_branch
      %78 = sbr.rel (0) target = $region37
    $region36: #{tpu_custom_call.1} parent=1 // pred_region
      %80 = vsyncadd [#allocation9], 0
      %s82 = sshll.u32 %s8, 4
      %s83 = int_to_ptr.hbm [resolvable:$true] %s82
      %s84 = sshll.u32 [#allocation8], 4
      %s85 = int_to_ptr.vmem [resolvable:$true] %s84
      %87 = dma.hbm_to_vmem [thread:$0]  %s83, 16, %s85, [#allocation9]
    $region37: #{tpu_custom_call.1} parent=1 // pred_fallthru
      _
    // Predicated region
    $region38: #{tpu_custom_call.1} parent=1 // pred_check
      _
    $region39: #{tpu_custom_call.1} parent=1 // pred_check_branch
      %89 = sbr.rel (0) target = $region41
    $region40: #{tpu_custom_call.1} parent=1 // pred_region
      %91 = vsyncadd [#allocation9], 0
      %s92 = sshll.u32 %s9, 4
      %s93 = int_to_ptr.hbm [resolvable:$true] %s92
      %s94 = sshll.u32 [#allocation10], 4
      %s95 = int_to_ptr.vmem [resolvable:$true] %s94
      %100 = dma.hbm_to_vmem [thread:$0]  %s93, 8192, %s95, [#allocation9], 512, 512, 32
    $region41: #{tpu_custom_call.1} parent=1 // pred_fallthru
      _
    // Predicated region
    $region42: #{tpu_custom_call.1} parent=1 // pred_check
      _
    $region43: #{tpu_custom_call.1} parent=1 // pred_check_branch
      %102 = sbr.rel (0) target = $region45
    $region44: #{tpu_custom_call.1} parent=1 // pred_region
      _
    $region45: #{tpu_custom_call.1} parent=1 // pred_fallthru
      _
    // Predicated region
    $region46: #{tpu_custom_call.1} parent=1 // pred_check
      _
    $region47: #{tpu_custom_call.1} parent=1 // pred_check_branch
      %104 = sbr.rel (0) target = $region49
    $region48: #{tpu_custom_call.1} parent=1 // pred_region
      %106 = vsyncadd [#allocation12], 0
      %s107 = sshll.u32 %s11, 4
      %s108 = int_to_ptr.hbm [resolvable:$true] %s107
      %s109 = sshll.u32 [#allocation11], 4
      %s110 = int_to_ptr.vmem [resolvable:$true] %s109
      %115 = dma.hbm_to_vmem [thread:$0]  %s108, 1024, %s110, [#allocation12], 64, 64, 4
    $region49: #{tpu_custom_call.1} parent=1 // pred_fallthru
      _
    // Predicated region
    $region50: #{tpu_custom_call.1} parent=1 // pred_check
      _
    $region51: #{tpu_custom_call.1} parent=1 // pred_check_branch
      %117 = sbr.rel (0) target = $region53
    $region52: #{tpu_custom_call.1} parent=1 // pred_region
      %119 = vsyncadd [#allocation12], 0
      %s121 = sshll.u32 %s12, 4
      %s122 = int_to_ptr.hbm [resolvable:$true] %s121
      %s123 = sshll.u32 [#allocation13], 4
      %s124 = int_to_ptr.vmem [resolvable:$true] %s123
      %126 = dma.hbm_to_vmem [thread:$0]  %s122, 16, %s124, [#allocation12]
    $region53: #{tpu_custom_call.1} parent=1 // pred_fallthru
      _
    // Predicated region
    $region54: #{tpu_custom_call.1} parent=1 // pred_check
      _
    $region55: #{tpu_custom_call.1} parent=1 // pred_check_branch
      %128 = sbr.rel (0) target = $region57
    $region56: #{tpu_custom_call.1} parent=1 // pred_region
      %130 = vsyncadd [#allocation15], 0
      %s131 = sshll.u32 %s13, 4
      %s132 = int_to_ptr.hbm [resolvable:$true] %s131
      %s133 = sshll.u32 [#allocation14], 4
      %s134 = int_to_ptr.vmem [resolvable:$true] %s133
      %139 = dma.hbm_to_vmem [thread:$0]  %s132, 3072, %s134, [#allocation15], 192, 192, 12
    $region57: #{tpu_custom_call.1} parent=1 // pred_fallthru
      _
    // Predicated region
    $region58: #{tpu_custom_call.1} parent=1 // pred_check
      _
    $region59: #{tpu_custom_call.1} parent=1 // pred_check_branch
      %141 = sbr.rel (0) target = $region61
    $region60: #{tpu_custom_call.1} parent=1 // pred_region
      %143 = vsyncadd [#allocation15], 0
      %s144 = sshll.u32 %s14, 4
      %s145 = int_to_ptr.hbm [resolvable:$true] %s144
      %s146 = sshll.u32 [#allocation16], 4
      %s147 = int_to_ptr.vmem [resolvable:$true] %s146
      %152 = dma.hbm_to_vmem [thread:$0]  %s145, 3072, %s147, [#allocation15], 192, 192, 12
    $region61: #{tpu_custom_call.1} parent=1 // pred_fallthru
      _
    // Predicated region
    $region62: #{tpu_custom_call.1} parent=1 // pred_check
      _
    $region63: #{tpu_custom_call.1} parent=1 // pred_check_branch
      %154 = sbr.rel (0) target = $region65
    $region64: #{tpu_custom_call.1} parent=1 // pred_region
      _
    $region65: #{tpu_custom_call.1} parent=1 // pred_fallthru
      _
    // Predicated region
    $region66: #{tpu_custom_call.1} parent=1 // pred_check
      _
    $region67: #{tpu_custom_call.1} parent=1 // pred_check_branch
      %156 = sbr.rel (0) target = $region69
    $region68: #{tpu_custom_call.1} parent=1 // pred_region
      _
    $region69: #{tpu_custom_call.1} parent=1 // pred_fallthru
      _
    // Predicated region
    $region70: #{tpu_custom_call.1} parent=1 // pred_check
      _
    $region71: #{tpu_custom_call.1} parent=1 // pred_check_branch
      %158 = sbr.rel (0) target = $region73
    $region72: #{tpu_custom_call.1} parent=1 // pred_region
      %160 = dma.done [#allocation3], 8192
    $region73: #{tpu_custom_call.1} parent=1 // pred_fallthru
      _
    // Predicated region
    $region74: #{tpu_custom_call.1} parent=1 // pred_check
      _
    $region75: #{tpu_custom_call.1} parent=1 // pred_check_branch
      %162 = sbr.rel (0) target = $region77
    $region76: #{tpu_custom_call.1} parent=1 // pred_region
      %164 = dma.done [#allocation6], 8192
    $region77: #{tpu_custom_call.1} parent=1 // pred_fallthru
      _
    // Predicated region
    $region78: #{tpu_custom_call.1} parent=1 // pred_check
      _
    $region79: #{tpu_custom_call.1} parent=1 // pred_check_branch
      %166 = sbr.rel (0) target = $region81
    $region80: #{tpu_custom_call.1} parent=1 // pred_region
      %168 = dma.done [#allocation6], 1024
    $region81: #{tpu_custom_call.1} parent=1 // pred_fallthru
      _
    // Predicated region
    $region82: #{tpu_custom_call.1} parent=1 // pred_check
      _
    $region83: #{tpu_custom_call.1} parent=1 // pred_check_branch
      %170 = sbr.rel (0) target = $region85
    $region84: #{tpu_custom_call.1} parent=1 // pred_region
      %172 = dma.done [#allocation9], 16
    $region85: #{tpu_custom_call.1} parent=1 // pred_fallthru
      _
    // Predicated region
    $region86: #{tpu_custom_call.1} parent=1 // pred_check
      _
    $region87: #{tpu_custom_call.1} parent=1 // pred_check_branch
      %174 = sbr.rel (0) target = $region89
    $region88: #{tpu_custom_call.1} parent=1 // pred_region
      %176 = dma.done [#allocation9], 8192
    $region89: #{tpu_custom_call.1} parent=1 // pred_fallthru
      _
    // Predicated region
    $region90: #{tpu_custom_call.1} parent=1 // pred_check
      _
    $region91: #{tpu_custom_call.1} parent=1 // pred_check_branch
      %178 = sbr.rel (0) target = $region93
    $region92: #{tpu_custom_call.1} parent=1 // pred_region
      %180 = dma.done [#allocation12], 1024
    $region93: #{tpu_custom_call.1} parent=1 // pred_fallthru
      _
    // Predicated region
    $region94: #{tpu_custom_call.1} parent=1 // pred_check
      _
    $region95: #{tpu_custom_call.1} parent=1 // pred_check_branch
      %182 = sbr.rel (0) target = $region97
    $region96: #{tpu_custom_call.1} parent=1 // pred_region
      %184 = dma.done [#allocation12], 16
    $region97: #{tpu_custom_call.1} parent=1 // pred_fallthru
      _
    // Predicated region
    $region98: #{tpu_custom_call.1} parent=1 // pred_check
      _
    $region99: #{tpu_custom_call.1} parent=1 // pred_check_branch
      %186 = sbr.rel (0) target = $region101
    $region100: #{tpu_custom_call.1} parent=1 // pred_region
      %188 = dma.done [#allocation15], 3072
    $region101: #{tpu_custom_call.1} parent=1 // pred_fallthru
      _
    // Predicated region
    $region102: #{tpu_custom_call.1} parent=1 // pred_check
      _
    $region103: #{tpu_custom_call.1} parent=1 // pred_check_branch
      %190 = sbr.rel (0) target = $region105
    $region104: #{tpu_custom_call.1} parent=1 // pred_region
      %192 = dma.done [#allocation15], 3072
    $region105: #{tpu_custom_call.1} parent=1 // pred_fallthru
      _
    %v194 = vld [vmem:[%s1] sm:$0xf]
    %v195 = vld [vmem:[%s1 + $0x4] sm:$0xf]
    %v196 = vld [vmem:[%s1 + $0x8] sm:$0xf]
    %v197 = vld [vmem:[%s1 + $0xc] sm:$0xf]
    %v198 = vld [vmem:[#allocation7] sm:$0xf]
    %v199 = vld [vmem:[#allocation7 + $0x4] sm:$0xf]
    %v200 = vld [vmem:[#allocation7 + $0x8] sm:$0xf]
    %v201 = vld [vmem:[#allocation7 + $0xc] sm:$0xf]
    %v202 = vld [vmem:[#allocation7 + $0x10] sm:$0xf]
    %v203 = vld [vmem:[#allocation7 + $0x14] sm:$0xf]
    %v204 = vld [vmem:[#allocation7 + $0x18] sm:$0xf]
    %v205 = vld [vmem:[#allocation7 + $0x1c] sm:$0xf]
    %v206 = vld [vmem:[#allocation7 + $0x20] sm:$0xf]
    %v207 = vld [vmem:[#allocation7 + $0x24] sm:$0xf]
    %v208 = vld [vmem:[#allocation7 + $0x28] sm:$0xf]
    %v209 = vld [vmem:[#allocation7 + $0x2c] sm:$0xf]
    %v210 = vld [vmem:[#allocation7 + $0x30] sm:$0xf]
    %v211 = vld [vmem:[#allocation7 + $0x34] sm:$0xf]
    %v212 = vld [vmem:[#allocation7 + $0x38] sm:$0xf]
    %v213 = vld [vmem:[#allocation7 + $0x3c] sm:$0xf]
    %v214 = vld [vmem:[#allocation8] sm:$0x1]
    %v216 = vperm.slane %v214, 0
    %v222 = vunpack.c.l.b16 %v194
    %v223 = vunpack.c.l.b16 %v195
    %v224 = vunpack.c.l.b16 %v196
    %v225 = vunpack.c.l.b16 %v197
    %v226 = vpack.c.b16 %v223, %v222
    %v227 = vpack.c.b16 %v225, %v224
    %v246 = vunpack.c.l.b16 %v198
    %v247 = vunpack.c.l.b16 %v199
    %v248 = vunpack.c.l.b16 %v200
    %v249 = vunpack.c.l.b16 %v201
    %v250 = vunpack.c.l.b16 %v202
    %v251 = vunpack.c.l.b16 %v203
    %v252 = vunpack.c.l.b16 %v204
    %v253 = vunpack.c.l.b16 %v205
    %v254 = vunpack.c.l.b16 %v206
    %v255 = vunpack.c.l.b16 %v207
    %v256 = vunpack.c.l.b16 %v208
    %v257 = vunpack.c.l.b16 %v209
    %v258 = vunpack.c.l.b16 %v210
    %v259 = vunpack.c.l.b16 %v211
    %v260 = vunpack.c.l.b16 %v212
    %v261 = vunpack.c.l.b16 %v213
    %v262 = vpack.c.b16 %v247, %v246
    %v263 = vpack.c.b16 %v249, %v248
    %v264 = vpack.c.b16 %v251, %v250
    %v265 = vpack.c.b16 %v253, %v252
    %v266 = vpack.c.b16 %v255, %v254
    %v267 = vpack.c.b16 %v257, %v256
    %v268 = vpack.c.b16 %v259, %v258
    %v269 = vpack.c.b16 %v261, %v260
    %278 = vmatpush.bf16.msra.mxu0 %v269
    %279 = vmatpush.bf16.msra.mxu0 %v268
    %280 = vmatpush.bf16.msra.mxu0 %v267
    %281 = vmatpush.bf16.msra.mxu0 %v266
    %282 = vmatpush.bf16.msra.mxu0 %v265
    %283 = vmatpush.bf16.msra.mxu0 %v264
    %284 = vmatpush.bf16.msra.mxu0 %v263
    %285 = vmatpush.bf16.msra.mxu0 %v262
    %286 = vmatmul.bf16.gmra.mxu0 %v226
    %v287 = vpop.f32.mrf.mxu0
    %v288 = vadd.f32 %v216, %v287
    %v289 = vpop.f32.mrf.mxu0
    %v290 = vadd.f32 %v216, %v289
    %291 = vmatmul.bf16.gmra.mxu0 %v227
    %v292 = vpop.f32.mrf.mxu0
    %v293 = vadd.f32 %v216, %v292
    %v294 = vpop.f32.mrf.mxu0
    %v295 = vadd.f32 %v216, %v294
    %296 = vdwg.mxu0
    %v297 = vmax.f32 %v288, 0.0
    %v298 = vmax.f32 %v290, 0.0
    %v299 = vmax.f32 %v293, 0.0
    %v300 = vmax.f32 %v295, 0.0
    %v301 = vpack.c.bf16 %v298, %v297
    %v302 = vpack.c.bf16 %v300, %v299
    %v303 = vld [vmem:[#allocation10] sm:$0xff]
    %v304 = vld [vmem:[#allocation10 + $0x8] sm:$0xff]
    %v305 = vld [vmem:[#allocation10 + $0x10] sm:$0xff]
    %v306 = vld [vmem:[#allocation10 + $0x18] sm:$0xff]
    %v307 = vld [vmem:[#allocation10 + $0x20] sm:$0xff]
    %v308 = vld [vmem:[#allocation10 + $0x28] sm:$0xff]
    %v309 = vld [vmem:[#allocation10 + $0x30] sm:$0xff]
    %v310 = vld [vmem:[#allocation10 + $0x38] sm:$0xff]
    %v311 = vld [vmem:[#allocation10 + $0x40] sm:$0xff]
    %v312 = vld [vmem:[#allocation10 + $0x48] sm:$0xff]
    %v313 = vld [vmem:[#allocation10 + $0x50] sm:$0xff]
    %v314 = vld [vmem:[#allocation10 + $0x58] sm:$0xff]
    %v315 = vld [vmem:[#allocation10 + $0x60] sm:$0xff]
    %v316 = vld [vmem:[#allocation10 + $0x68] sm:$0xff]
    %v317 = vld [vmem:[#allocation10 + $0x70] sm:$0xff]
    %v318 = vld [vmem:[#allocation10 + $0x78] sm:$0xff]
    %v319 = vld [vmem:[#allocation10 + $0x80] sm:$0xff]
    %v320 = vld [vmem:[#allocation10 + $0x88] sm:$0xff]
    %v321 = vld [vmem:[#allocation10 + $0x90] sm:$0xff]
    %v322 = vld [vmem:[#allocation10 + $0x98] sm:$0xff]
    %v323 = vld [vmem:[#allocation10 + $0xa0] sm:$0xff]
    %v324 = vld [vmem:[#allocation10 + $0xa8] sm:$0xff]
    %v325 = vld [vmem:[#allocation10 + $0xb0] sm:$0xff]
    %v326 = vld [vmem:[#allocation10 + $0xb8] sm:$0xff]
    %v327 = vld [vmem:[#allocation10 + $0xc0] sm:$0xff]
    %v328 = vld [vmem:[#allocation10 + $0xc8] sm:$0xff]
    %v329 = vld [vmem:[#allocation10 + $0xd0] sm:$0xff]
    %v330 = vld [vmem:[#allocation10 + $0xd8] sm:$0xff]
    %v331 = vld [vmem:[#allocation10 + $0xe0] sm:$0xff]
    %v332 = vld [vmem:[#allocation10 + $0xe8] sm:$0xff]
    %v333 = vld [vmem:[#allocation10 + $0xf0] sm:$0xff]
    %v334 = vld [vmem:[#allocation10 + $0xf8] sm:$0xff]
    %v335 = vld [vmem:[#allocation10 + $0x100] sm:$0xff]
    %v336 = vld [vmem:[#allocation10 + $0x108] sm:$0xff]
    %v337 = vld [vmem:[#allocation10 + $0x110] sm:$0xff]
    %v338 = vld [vmem:[#allocation10 + $0x118] sm:$0xff]
    %v339 = vld [vmem:[#allocation10 + $0x120] sm:$0xff]
    %v340 = vld [vmem:[#allocation10 + $0x128] sm:$0xff]
    %v341 = vld [vmem:[#allocation10 + $0x130] sm:$0xff]
    %v342 = vld [vmem:[#allocation10 + $0x138] sm:$0xff]
    %v343 = vld [vmem:[#allocation10 + $0x140] sm:$0xff]
    %v344 = vld [vmem:[#allocation10 + $0x148] sm:$0xff]
    %v345 = vld [vmem:[#allocation10 + $0x150] sm:$0xff]
    %v346 = vld [vmem:[#allocation10 + $0x158] sm:$0xff]
    %v347 = vld [vmem:[#allocation10 + $0x160] sm:$0xff]
    %v348 = vld [vmem:[#allocation10 + $0x168] sm:$0xff]
    %v349 = vld [vmem:[#allocation10 + $0x170] sm:$0xff]
    %v350 = vld [vmem:[#allocation10 + $0x178] sm:$0xff]
    %v351 = vld [vmem:[#allocation10 + $0x180] sm:$0xff]
    %v352 = vld [vmem:[#allocation10 + $0x188] sm:$0xff]
    %v353 = vld [vmem:[#allocation10 + $0x190] sm:$0xff]
    %v354 = vld [vmem:[#allocation10 + $0x198] sm:$0xff]
    %v355 = vld [vmem:[#allocation10 + $0x1a0] sm:$0xff]
    %v356 = vld [vmem:[#allocation10 + $0x1a8] sm:$0xff]
    %v357 = vld [vmem:[#allocation10 + $0x1b0] sm:$0xff]
    %v358 = vld [vmem:[#allocation10 + $0x1b8] sm:$0xff]
    %v359 = vld [vmem:[#allocation10 + $0x1c0] sm:$0xff]
    %v360 = vld [vmem:[#allocation10 + $0x1c8] sm:$0xff]
    %v361 = vld [vmem:[#allocation10 + $0x1d0] sm:$0xff]
    %v362 = vld [vmem:[#allocation10 + $0x1d8] sm:$0xff]
    %v363 = vld [vmem:[#allocation10 + $0x1e0] sm:$0xff]
    %v364 = vld [vmem:[#allocation10 + $0x1e8] sm:$0xff]
    %v365 = vld [vmem:[#allocation10 + $0x1f0] sm:$0xff]
    %v366 = vld [vmem:[#allocation10 + $0x1f8] sm:$0xff]
    %v367 = vld [vmem:[%s10] sm:$0xff]
    %v369 = vperm.slane %v367, 0
    %v370 = vperm.slane %v367, 1
    %v371 = vperm.slane %v367, 2
    %v372 = vperm.slane %v367, 3
    %v373 = vperm.slane %v367, 4
    %v374 = vperm.slane %v367, 5
    %v375 = vperm.slane %v367, 6
    %v376 = vperm.slane %v367, 7
    %v449 = vunpack.c.l.b16 %v303
    %v450 = vunpack.c.h.b16 %v303
    %v451 = vunpack.c.l.b16 %v304
    %v452 = vunpack.c.h.b16 %v304
    %v453 = vunpack.c.l.b16 %v305
    %v454 = vunpack.c.h.b16 %v305
    %v455 = vunpack.c.l.b16 %v306
    %v456 = vunpack.c.h.b16 %v306
    %v457 = vunpack.c.l.b16 %v307
    %v458 = vunpack.c.h.b16 %v307
    %v459 = vunpack.c.l.b16 %v308
    %v460 = vunpack.c.h.b16 %v308
    %v461 = vunpack.c.l.b16 %v309
    %v462 = vunpack.c.h.b16 %v309
    %v463 = vunpack.c.l.b16 %v310
    %v464 = vunpack.c.h.b16 %v310
    %v465 = vunpack.c.l.b16 %v311
    %v466 = vunpack.c.h.b16 %v311
    %v467 = vunpack.c.l.b16 %v312
    %v468 = vunpack.c.h.b16 %v312
    %v469 = vunpack.c.l.b16 %v313
    %v470 = vunpack.c.h.b16 %v313
    %v471 = vunpack.c.l.b16 %v314
    %v472 = vunpack.c.h.b16 %v314
    %v473 = vunpack.c.l.b16 %v315
    %v474 = vunpack.c.h.b16 %v315
    %v475 = vunpack.c.l.b16 %v316
    %v476 = vunpack.c.h.b16 %v316
    %v477 = vunpack.c.l.b16 %v317
    %v478 = vunpack.c.h.b16 %v317
    %v479 = vunpack.c.l.b16 %v318
    %v480 = vunpack.c.h.b16 %v318
    %v481 = vunpack.c.l.b16 %v319
    %v482 = vunpack.c.h.b16 %v319
    %v483 = vunpack.c.l.b16 %v320
    %v484 = vunpack.c.h.b16 %v320
    %v485 = vunpack.c.l.b16 %v321
    %v486 = vunpack.c.h.b16 %v321
    %v487 = vunpack.c.l.b16 %v322
    %v488 = vunpack.c.h.b16 %v322
    %v489 = vunpack.c.l.b16 %v323
    %v490 = vunpack.c.h.b16 %v323
    %v491 = vunpack.c.l.b16 %v324
    %v492 = vunpack.c.h.b16 %v324
    %v493 = vunpack.c.l.b16 %v325
    %v494 = vunpack.c.h.b16 %v325
    %v495 = vunpack.c.l.b16 %v326
    %v496 = vunpack.c.h.b16 %v326
    %v497 = vunpack.c.l.b16 %v327
    %v498 = vunpack.c.h.b16 %v327
    %v499 = vunpack.c.l.b16 %v328
    %v500 = vunpack.c.h.b16 %v328
    %v501 = vunpack.c.l.b16 %v329
    %v502 = vunpack.c.h.b16 %v329
    %v503 = vunpack.c.l.b16 %v330
    %v504 = vunpack.c.h.b16 %v330
    %v505 = vunpack.c.l.b16 %v331
    %v506 = vunpack.c.h.b16 %v331
    %v507 = vunpack.c.l.b16 %v332
    %v508 = vunpack.c.h.b16 %v332
    %v509 = vunpack.c.l.b16 %v333
    %v510 = vunpack.c.h.b16 %v333
    %v511 = vunpack.c.l.b16 %v334
    %v512 = vunpack.c.h.b16 %v334
    %v513 = vunpack.c.l.b16 %v335
    %v514 = vunpack.c.h.b16 %v335
    %v515 = vunpack.c.l.b16 %v336
    %v516 = vunpack.c.h.b16 %v336
    %v517 = vunpack.c.l.b16 %v337
    %v518 = vunpack.c.h.b16 %v337
    %v519 = vunpack.c.l.b16 %v338
    %v520 = vunpack.c.h.b16 %v338
    %v521 = vunpack.c.l.b16 %v339
    %v522 = vunpack.c.h.b16 %v339
    %v523 = vunpack.c.l.b16 %v340
    %v524 = vunpack.c.h.b16 %v340
    %v525 = vunpack.c.l.b16 %v341
    %v526 = vunpack.c.h.b16 %v341
    %v527 = vunpack.c.l.b16 %v342
    %v528 = vunpack.c.h.b16 %v342
    %v529 = vunpack.c.l.b16 %v343
    %v530 = vunpack.c.h.b16 %v343
    %v531 = vunpack.c.l.b16 %v344
    %v532 = vunpack.c.h.b16 %v344
    %v533 = vunpack.c.l.b16 %v345
    %v534 = vunpack.c.h.b16 %v345
    %v535 = vunpack.c.l.b16 %v346
    %v536 = vunpack.c.h.b16 %v346
    %v537 = vunpack.c.l.b16 %v347
    %v538 = vunpack.c.h.b16 %v347
    %v539 = vunpack.c.l.b16 %v348
    %v540 = vunpack.c.h.b16 %v348
    %v541 = vunpack.c.l.b16 %v349
    %v542 = vunpack.c.h.b16 %v349
    %v543 = vunpack.c.l.b16 %v350
    %v544 = vunpack.c.h.b16 %v350
    %v545 = vunpack.c.l.b16 %v351
    %v546 = vunpack.c.h.b16 %v351
    %v547 = vunpack.c.l.b16 %v352
    %v548 = vunpack.c.h.b16 %v352
    %v549 = vunpack.c.l.b16 %v353
    %v550 = vunpack.c.h.b16 %v353
    %v551 = vunpack.c.l.b16 %v354
    %v552 = vunpack.c.h.b16 %v354
    %v553 = vunpack.c.l.b16 %v355
    %v554 = vunpack.c.h.b16 %v355
    %v555 = vunpack.c.l.b16 %v356
    %v556 = vunpack.c.h.b16 %v356
    %v557 = vunpack.c.l.b16 %v357
    %v558 = vunpack.c.h.b16 %v357
    %v559 = vunpack.c.l.b16 %v358
    %v560 = vunpack.c.h.b16 %v358
    %v561 = vunpack.c.l.b16 %v359
    %v562 = vunpack.c.h.b16 %v359
    %v563 = vunpack.c.l.b16 %v360
    %v564 = vunpack.c.h.b16 %v360
    %v565 = vunpack.c.l.b16 %v361
    %v566 = vunpack.c.h.b16 %v361
    %v567 = vunpack.c.l.b16 %v362
    %v568 = vunpack.c.h.b16 %v362
    %v569 = vunpack.c.l.b16 %v363
    %v570 = vunpack.c.h.b16 %v363
    %v571 = vunpack.c.l.b16 %v364
    %v572 = vunpack.c.h.b16 %v364
    %v573 = vunpack.c.l.b16 %v365
    %v574 = vunpack.c.h.b16 %v365
    %v575 = vunpack.c.l.b16 %v366
    %v576 = vunpack.c.h.b16 %v366
    %v577 = vpack.c.b16 %v457, %v449
    %v578 = vpack.c.b16 %v458, %v450
    %v579 = vpack.c.b16 %v459, %v451
    %v580 = vpack.c.b16 %v460, %v452
    %v581 = vpack.c.b16 %v461, %v453
    %v582 = vpack.c.b16 %v462, %v454
    %v583 = vpack.c.b16 %v463, %v455
    %v584 = vpack.c.b16 %v464, %v456
    %v585 = vpack.c.b16 %v473, %v465
    %v586 = vpack.c.b16 %v474, %v466
    %v587 = vpack.c.b16 %v475, %v467
    %v588 = vpack.c.b16 %v476, %v468
    %v589 = vpack.c.b16 %v477, %v469
    %v590 = vpack.c.b16 %v478, %v470
    %v591 = vpack.c.b16 %v479, %v471
    %v592 = vpack.c.b16 %v480, %v472
    %v593 = vpack.c.b16 %v489, %v481
    %v594 = vpack.c.b16 %v490, %v482
    %v595 = vpack.c.b16 %v491, %v483
    %v596 = vpack.c.b16 %v492, %v484
    %v597 = vpack.c.b16 %v493, %v485
    %v598 = vpack.c.b16 %v494, %v486
    %v599 = vpack.c.b16 %v495, %v487
    %v600 = vpack.c.b16 %v496, %v488
    %v601 = vpack.c.b16 %v505, %v497
    %v602 = vpack.c.b16 %v506, %v498
    %v603 = vpack.c.b16 %v507, %v499
    %v604 = vpack.c.b16 %v508, %v500
    %v605 = vpack.c.b16 %v509, %v501
    %v606 = vpack.c.b16 %v510, %v502
    %v607 = vpack.c.b16 %v511, %v503
    %v608 = vpack.c.b16 %v512, %v504
    %v609 = vpack.c.b16 %v521, %v513
    %v610 = vpack.c.b16 %v522, %v514
    %v611 = vpack.c.b16 %v523, %v515
    %v612 = vpack.c.b16 %v524, %v516
    %v613 = vpack.c.b16 %v525, %v517
    %v614 = vpack.c.b16 %v526, %v518
    %v615 = vpack.c.b16 %v527, %v519
    %v616 = vpack.c.b16 %v528, %v520
    %v617 = vpack.c.b16 %v537, %v529
    %v618 = vpack.c.b16 %v538, %v530
    %v619 = vpack.c.b16 %v539, %v531
    %v620 = vpack.c.b16 %v540, %v532
    %v621 = vpack.c.b16 %v541, %v533
    %v622 = vpack.c.b16 %v542, %v534
    %v623 = vpack.c.b16 %v543, %v535
    %v624 = vpack.c.b16 %v544, %v536
    %v625 = vpack.c.b16 %v553, %v545
    %v626 = vpack.c.b16 %v554, %v546
    %v627 = vpack.c.b16 %v555, %v547
    %v628 = vpack.c.b16 %v556, %v548
    %v629 = vpack.c.b16 %v557, %v549
    %v630 = vpack.c.b16 %v558, %v550
    %v631 = vpack.c.b16 %v559, %v551
    %v632 = vpack.c.b16 %v560, %v552
    %v633 = vpack.c.b16 %v569, %v561
    %v634 = vpack.c.b16 %v570, %v562
    %v635 = vpack.c.b16 %v571, %v563
    %v636 = vpack.c.b16 %v572, %v564
    %v637 = vpack.c.b16 %v573, %v565
    %v638 = vpack.c.b16 %v574, %v566
    %v639 = vpack.c.b16 %v575, %v567
    %v640 = vpack.c.b16 %v576, %v568
    %705 = vmatpush.bf16.msra.mxu0 %v633
    %706 = vmatpush.bf16.msra.mxu0 %v625
    %707 = vmatpush.bf16.msra.mxu0 %v617
    %708 = vmatpush.bf16.msra.mxu0 %v609
    %709 = vmatpush.bf16.msra.mxu0 %v601
    %710 = vmatpush.bf16.msra.mxu0 %v593
    %711 = vmatpush.bf16.msra.mxu0 %v585
    %712 = vmatpush.bf16.msra.mxu0 %v577
    %713 = vmatmul.bf16.gmra.mxu0 %v301
    %v714 = vpop.f32.mrf.mxu0
    %v715 = vadd.f32 %v369, %v714
    %v716 = vpop.f32.mrf.mxu0
    %v717 = vadd.f32 %v369, %v716
    %718 = vmatmul.bf16.gmra.mxu0 %v302
    %v719 = vpop.f32.mrf.mxu0
    %v720 = vadd.f32 %v369, %v719
    %v721 = vpop.f32.mrf.mxu0
    %v722 = vadd.f32 %v369, %v721
    %723 = vdwg.mxu0
    %724 = vmatpush.bf16.msra.mxu0 %v634
    %725 = vmatpush.bf16.msra.mxu0 %v626
    %726 = vmatpush.bf16.msra.mxu0 %v618
    %727 = vmatpush.bf16.msra.mxu0 %v610
    %728 = vmatpush.bf16.msra.mxu0 %v602
    %729 = vmatpush.bf16.msra.mxu0 %v594
    %730 = vmatpush.bf16.msra.mxu0 %v586
    %731 = vmatpush.bf16.msra.mxu0 %v578
    %732 = vmatmul.bf16.gmra.mxu0 %v301
    %v733 = vpop.f32.mrf.mxu0
    %v734 = vadd.f32 %v370, %v733
    %v735 = vpop.f32.mrf.mxu0
    %v736 = vadd.f32 %v370, %v735
    %737 = vmatmul.bf16.gmra.mxu0 %v302
    %v738 = vpop.f32.mrf.mxu0
    %v739 = vadd.f32 %v370, %v738
    %v740 = vpop.f32.mrf.mxu0
    %v741 = vadd.f32 %v370, %v740
    %742 = vdwg.mxu0
    %743 = vmatpush.bf16.msra.mxu0 %v635
    %744 = vmatpush.bf16.msra.mxu0 %v627
    %745 = vmatpush.bf16.msra.mxu0 %v619
    %746 = vmatpush.bf16.msra.mxu0 %v611
    %747 = vmatpush.bf16.msra.mxu0 %v603
    %748 = vmatpush.bf16.msra.mxu0 %v595
    %749 = vmatpush.bf16.msra.mxu0 %v587
    %750 = vmatpush.bf16.msra.mxu0 %v579
    %751 = vmatmul.bf16.gmra.mxu0 %v301
    %v752 = vpop.f32.mrf.mxu0
    %v753 = vadd.f32 %v371, %v752
    %v754 = vpop.f32.mrf.mxu0
    %v755 = vadd.f32 %v371, %v754
    %756 = vmatmul.bf16.gmra.mxu0 %v302
    %v757 = vpop.f32.mrf.mxu0
    %v758 = vadd.f32 %v371, %v757
    %v759 = vpop.f32.mrf.mxu0
    %v760 = vadd.f32 %v371, %v759
    %761 = vdwg.mxu0
    %762 = vmatpush.bf16.msra.mxu0 %v636
    %763 = vmatpush.bf16.msra.mxu0 %v628
    %764 = vmatpush.bf16.msra.mxu0 %v620
    %765 = vmatpush.bf16.msra.mxu0 %v612
    %766 = vmatpush.bf16.msra.mxu0 %v604
    %767 = vmatpush.bf16.msra.mxu0 %v596
    %768 = vmatpush.bf16.msra.mxu0 %v588
    %769 = vmatpush.bf16.msra.mxu0 %v580
    %770 = vmatmul.bf16.gmra.mxu0 %v301
    %v771 = vpop.f32.mrf.mxu0
    %v772 = vadd.f32 %v372, %v771
    %v773 = vpop.f32.mrf.mxu0
    %v774 = vadd.f32 %v372, %v773
    %775 = vmatmul.bf16.gmra.mxu0 %v302
    %v776 = vpop.f32.mrf.mxu0
    %v777 = vadd.f32 %v372, %v776
    %v778 = vpop.f32.mrf.mxu0
    %v779 = vadd.f32 %v372, %v778
    %780 = vdwg.mxu0
    %781 = vmatpush.bf16.msra.mxu0 %v637
    %782 = vmatpush.bf16.msra.mxu0 %v629
    %783 = vmatpush.bf16.msra.mxu0 %v621
    %784 = vmatpush.bf16.msra.mxu0 %v613
    %785 = vmatpush.bf16.msra.mxu0 %v605
    %786 = vmatpush.bf16.msra.mxu0 %v597
    %787 = vmatpush.bf16.msra.mxu0 %v589
    %788 = vmatpush.bf16.msra.mxu0 %v581
    %789 = vmatmul.bf16.gmra.mxu0 %v301
    %v790 = vpop.f32.mrf.mxu0
    %v791 = vadd.f32 %v373, %v790
    %v792 = vpop.f32.mrf.mxu0
    %v793 = vadd.f32 %v373, %v792
    %794 = vmatmul.bf16.gmra.mxu0 %v302
    %v795 = vpop.f32.mrf.mxu0
    %v796 = vadd.f32 %v373, %v795
    %v797 = vpop.f32.mrf.mxu0
    %v798 = vadd.f32 %v373, %v797
    %799 = vdwg.mxu0
    %800 = vmatpush.bf16.msra.mxu0 %v638
    %801 = vmatpush.bf16.msra.mxu0 %v630
    %802 = vmatpush.bf16.msra.mxu0 %v622
    %803 = vmatpush.bf16.msra.mxu0 %v614
    %804 = vmatpush.bf16.msra.mxu0 %v606
    %805 = vmatpush.bf16.msra.mxu0 %v598
    %806 = vmatpush.bf16.msra.mxu0 %v590
    %807 = vmatpush.bf16.msra.mxu0 %v582
    %808 = vmatmul.bf16.gmra.mxu0 %v301
    %v809 = vpop.f32.mrf.mxu0
    %v810 = vadd.f32 %v374, %v809
    %v811 = vpop.f32.mrf.mxu0
    %v812 = vadd.f32 %v374, %v811
    %813 = vmatmul.bf16.gmra.mxu0 %v302
    %v814 = vpop.f32.mrf.mxu0
    %v815 = vadd.f32 %v374, %v814
    %v816 = vpop.f32.mrf.mxu0
    %v817 = vadd.f32 %v374, %v816
    %818 = vdwg.mxu0
    %819 = vmatpush.bf16.msra.mxu0 %v639
    %820 = vmatpush.bf16.msra.mxu0 %v631
    %821 = vmatpush.bf16.msra.mxu0 %v623
    %822 = vmatpush.bf16.msra.mxu0 %v615
    %823 = vmatpush.bf16.msra.mxu0 %v607
    %824 = vmatpush.bf16.msra.mxu0 %v599
    %825 = vmatpush.bf16.msra.mxu0 %v591
    %826 = vmatpush.bf16.msra.mxu0 %v583
    %827 = vmatmul.bf16.gmra.mxu0 %v301
    %v828 = vpop.f32.mrf.mxu0
    %v829 = vadd.f32 %v375, %v828
    %v830 = vpop.f32.mrf.mxu0
    %v831 = vadd.f32 %v375, %v830
    %832 = vmatmul.bf16.gmra.mxu0 %v302
    %v833 = vpop.f32.mrf.mxu0
    %v834 = vadd.f32 %v375, %v833
    %v835 = vpop.f32.mrf.mxu0
    %v836 = vadd.f32 %v375, %v835
    %837 = vdwg.mxu0
    %838 = vmatpush.bf16.msra.mxu0 %v640
    %839 = vmatpush.bf16.msra.mxu0 %v632
    %840 = vmatpush.bf16.msra.mxu0 %v624
    %841 = vmatpush.bf16.msra.mxu0 %v616
    %842 = vmatpush.bf16.msra.mxu0 %v608
    %843 = vmatpush.bf16.msra.mxu0 %v600
    %844 = vmatpush.bf16.msra.mxu0 %v592
    %845 = vmatpush.bf16.msra.mxu0 %v584
    %846 = vmatmul.bf16.gmra.mxu0 %v301
    %v847 = vpop.f32.mrf.mxu0
    %v848 = vadd.f32 %v376, %v847
    %v849 = vpop.f32.mrf.mxu0
    %v850 = vadd.f32 %v376, %v849
    %851 = vmatmul.bf16.gmra.mxu0 %v302
    %v852 = vpop.f32.mrf.mxu0
    %v853 = vadd.f32 %v376, %v852
    %v854 = vpop.f32.mrf.mxu0
    %v855 = vadd.f32 %v376, %v854
    %856 = vdwg.mxu0
    %v857 = vpack.c.bf16 %v734, %v715
    %v858 = vpack.c.bf16 %v772, %v753
    %v859 = vpack.c.bf16 %v810, %v791
    %v860 = vpack.c.bf16 %v848, %v829
    %v861 = vpack.c.bf16 %v736, %v717
    %v862 = vpack.c.bf16 %v774, %v755
    %v863 = vpack.c.bf16 %v812, %v793
    %v864 = vpack.c.bf16 %v850, %v831
    %v865 = vpack.c.bf16 %v739, %v720
    %v866 = vpack.c.bf16 %v777, %v758
    %v867 = vpack.c.bf16 %v815, %v796
    %v868 = vpack.c.bf16 %v853, %v834
    %v869 = vpack.c.bf16 %v741, %v722
    %v870 = vpack.c.bf16 %v779, %v760
    %v871 = vpack.c.bf16 %v817, %v798
    %v872 = vpack.c.bf16 %v855, %v836
    %v873 = vld [vmem:[%s2] sm:$0xf]
    %v874 = vld [vmem:[%s2 + $0x4] sm:$0xf]
    %v875 = vld [vmem:[%s2 + $0x8] sm:$0xf]
    %v876 = vld [vmem:[%s2 + $0xc] sm:$0xf]
    %v877 = vld [vmem:[%s3] sm:$0xf]
    %v878 = vld [vmem:[%s3 + $0x4] sm:$0xf]
    %v879 = vld [vmem:[#allocation2] sm:$0xff]
    %v880 = vld [vmem:[#allocation2 + $0x8] sm:$0xff]
    %v881 = vld [vmem:[#allocation2 + $0x10] sm:$0xff]
    %v882 = vld [vmem:[#allocation2 + $0x18] sm:$0xff]
    %v883 = vld [vmem:[#allocation2 + $0x20] sm:$0xff]
    %v884 = vld [vmem:[#allocation2 + $0x28] sm:$0xff]
    %v885 = vld [vmem:[#allocation2 + $0x30] sm:$0xff]
    %v886 = vld [vmem:[#allocation2 + $0x38] sm:$0xff]
    %v887 = vld [vmem:[#allocation2 + $0x40] sm:$0xff]
    %v888 = vld [vmem:[#allocation2 + $0x48] sm:$0xff]
    %v889 = vld [vmem:[#allocation2 + $0x50] sm:$0xff]
    %v890 = vld [vmem:[#allocation2 + $0x58] sm:$0xff]
    %v891 = vld [vmem:[#allocation2 + $0x60] sm:$0xff]
    %v892 = vld [vmem:[#allocation2 + $0x68] sm:$0xff]
    %v893 = vld [vmem:[#allocation2 + $0x70] sm:$0xff]
    %v894 = vld [vmem:[#allocation2 + $0x78] sm:$0xff]
    %v895 = vld [vmem:[#allocation2 + $0x80] sm:$0xff]
    %v896 = vld [vmem:[#allocation2 + $0x88] sm:$0xff]
    %v897 = vld [vmem:[#allocation2 + $0x90] sm:$0xff]
    %v898 = vld [vmem:[#allocation2 + $0x98] sm:$0xff]
    %v899 = vld [vmem:[#allocation2 + $0xa0] sm:$0xff]
    %v900 = vld [vmem:[#allocation2 + $0xa8] sm:$0xff]
    %v901 = vld [vmem:[#allocation2 + $0xb0] sm:$0xff]
    %v902 = vld [vmem:[#allocation2 + $0xb8] sm:$0xff]
    %v903 = vld [vmem:[#allocation2 + $0xc0] sm:$0xff]
    %v904 = vld [vmem:[#allocation2 + $0xc8] sm:$0xff]
    %v905 = vld [vmem:[#allocation2 + $0xd0] sm:$0xff]
    %v906 = vld [vmem:[#allocation2 + $0xd8] sm:$0xff]
    %v907 = vld [vmem:[#allocation2 + $0xe0] sm:$0xff]
    %v908 = vld [vmem:[#allocation2 + $0xe8] sm:$0xff]
    %v909 = vld [vmem:[#allocation2 + $0xf0] sm:$0xff]
    %v910 = vld [vmem:[#allocation2 + $0xf8] sm:$0xff]
    %v911 = vld [vmem:[#allocation2 + $0x100] sm:$0xff]
    %v912 = vld [vmem:[#allocation2 + $0x108] sm:$0xff]
    %v913 = vld [vmem:[#allocation2 + $0x110] sm:$0xff]
    %v914 = vld [vmem:[#allocation2 + $0x118] sm:$0xff]
    %v915 = vld [vmem:[#allocation2 + $0x120] sm:$0xff]
    %v916 = vld [vmem:[#allocation2 + $0x128] sm:$0xff]
    %v917 = vld [vmem:[#allocation2 + $0x130] sm:$0xff]
    %v918 = vld [vmem:[#allocation2 + $0x138] sm:$0xff]
    %v919 = vld [vmem:[#allocation2 + $0x140] sm:$0xff]
    %v920 = vld [vmem:[#allocation2 + $0x148] sm:$0xff]
    %v921 = vld [vmem:[#allocation2 + $0x150] sm:$0xff]
    %v922 = vld [vmem:[#allocation2 + $0x158] sm:$0xff]
    %v923 = vld [vmem:[#allocation2 + $0x160] sm:$0xff]
    %v924 = vld [vmem:[#allocation2 + $0x168] sm:$0xff]
    %v925 = vld [vmem:[#allocation2 + $0x170] sm:$0xff]
    %v926 = vld [vmem:[#allocation2 + $0x178] sm:$0xff]
    %v927 = vld [vmem:[#allocation2 + $0x180] sm:$0xff]
    %v928 = vld [vmem:[#allocation2 + $0x188] sm:$0xff]
    %v929 = vld [vmem:[#allocation2 + $0x190] sm:$0xff]
    %v930 = vld [vmem:[#allocation2 + $0x198] sm:$0xff]
    %v931 = vld [vmem:[#allocation2 + $0x1a0] sm:$0xff]
    %v932 = vld [vmem:[#allocation2 + $0x1a8] sm:$0xff]
    %v933 = vld [vmem:[#allocation2 + $0x1b0] sm:$0xff]
    %v934 = vld [vmem:[#allocation2 + $0x1b8] sm:$0xff]
    %v935 = vld [vmem:[#allocation2 + $0x1c0] sm:$0xff]
    %v936 = vld [vmem:[#allocation2 + $0x1c8] sm:$0xff]
    %v937 = vld [vmem:[#allocation2 + $0x1d0] sm:$0xff]
    %v938 = vld [vmem:[#allocation2 + $0x1d8] sm:$0xff]
    %v939 = vld [vmem:[#allocation2 + $0x1e0] sm:$0xff]
    %v940 = vld [vmem:[#allocation2 + $0x1e8] sm:$0xff]
    %v941 = vld [vmem:[#allocation2 + $0x1f0] sm:$0xff]
    %v942 = vld [vmem:[#allocation2 + $0x1f8] sm:$0xff]
    %v943 = vld [vmem:[#allocation5] sm:$0xf]
    %v944 = vld [vmem:[#allocation5 + $0x4] sm:$0xf]
    %v945 = vld [vmem:[#allocation5 + $0x8] sm:$0xf]
    %v946 = vld [vmem:[#allocation5 + $0xc] sm:$0xf]
    %v947 = vld [vmem:[#allocation5 + $0x10] sm:$0xf]
    %v948 = vld [vmem:[#allocation5 + $0x14] sm:$0xf]
    %v949 = vld [vmem:[#allocation5 + $0x18] sm:$0xf]
    %v950 = vld [vmem:[#allocation5 + $0x1c] sm:$0xf]
    %v951 = vld [vmem:[#allocation5 + $0x20] sm:$0xf]
    %v952 = vld [vmem:[#allocation5 + $0x24] sm:$0xf]
    %v953 = vld [vmem:[#allocation5 + $0x28] sm:$0xf]
    %v954 = vld [vmem:[#allocation5 + $0x2c] sm:$0xf]
    %v955 = vld [vmem:[#allocation5 + $0x30] sm:$0xf]
    %v956 = vld [vmem:[#allocation5 + $0x34] sm:$0xf]
    %v957 = vld [vmem:[#allocation5 + $0x38] sm:$0xf]
    %v958 = vld [vmem:[#allocation5 + $0x3c] sm:$0xf]
    %v959 = vld [vmem:[#allocation5 + $0x40] sm:$0xf]
    %v960 = vld [vmem:[#allocation5 + $0x44] sm:$0xf]
    %v961 = vld [vmem:[#allocation5 + $0x48] sm:$0xf]
    %v962 = vld [vmem:[#allocation5 + $0x4c] sm:$0xf]
    %v963 = vld [vmem:[#allocation5 + $0x50] sm:$0xf]
    %v964 = vld [vmem:[#allocation5 + $0x54] sm:$0xf]
    %v965 = vld [vmem:[#allocation5 + $0x58] sm:$0xf]
    %v966 = vld [vmem:[#allocation5 + $0x5c] sm:$0xf]
    %v967 = vld [vmem:[#allocation5 + $0x60] sm:$0xf]
    %v968 = vld [vmem:[#allocation5 + $0x64] sm:$0xf]
    %v969 = vld [vmem:[#allocation5 + $0x68] sm:$0xf]
    %v970 = vld [vmem:[#allocation5 + $0x6c] sm:$0xf]
    %v971 = vld [vmem:[#allocation5 + $0x70] sm:$0xf]
    %v972 = vld [vmem:[#allocation5 + $0x74] sm:$0xf]
    %v973 = vld [vmem:[#allocation5 + $0x78] sm:$0xf]
    %v974 = vld [vmem:[#allocation5 + $0x7c] sm:$0xf]
    %v975 = vld [vmem:[#allocation5 + $0x80] sm:$0xf]
    %v976 = vld [vmem:[#allocation5 + $0x84] sm:$0xf]
    %v977 = vld [vmem:[#allocation5 + $0x88] sm:$0xf]
    %v978 = vld [vmem:[#allocation5 + $0x8c] sm:$0xf]
    %v979 = vld [vmem:[#allocation5 + $0x90] sm:$0xf]
    %v980 = vld [vmem:[#allocation5 + $0x94] sm:$0xf]
    %v981 = vld [vmem:[#allocation5 + $0x98] sm:$0xf]
    %v982 = vld [vmem:[#allocation5 + $0x9c] sm:$0xf]
    %v983 = vld [vmem:[#allocation5 + $0xa0] sm:$0xf]
    %v984 = vld [vmem:[#allocation5 + $0xa4] sm:$0xf]
    %v985 = vld [vmem:[#allocation5 + $0xa8] sm:$0xf]
    %v986 = vld [vmem:[#allocation5 + $0xac] sm:$0xf]
    %v987 = vld [vmem:[#allocation5 + $0xb0] sm:$0xf]
    %v988 = vld [vmem:[#allocation5 + $0xb4] sm:$0xf]
    %v989 = vld [vmem:[#allocation5 + $0xb8] sm:$0xf]
    %v990 = vld [vmem:[#allocation5 + $0xbc] sm:$0xf]
    %v991 = vld [vmem:[#allocation5 + $0xc0] sm:$0xf]
    %v992 = vld [vmem:[#allocation5 + $0xc4] sm:$0xf]
    %v993 = vld [vmem:[#allocation5 + $0xc8] sm:$0xf]
    %v994 = vld [vmem:[#allocation5 + $0xcc] sm:$0xf]
    %v995 = vld [vmem:[#allocation5 + $0xd0] sm:$0xf]
    %v996 = vld [vmem:[#allocation5 + $0xd4] sm:$0xf]
    %v997 = vld [vmem:[#allocation5 + $0xd8] sm:$0xf]
    %v998 = vld [vmem:[#allocation5 + $0xdc] sm:$0xf]
    %v999 = vld [vmem:[#allocation5 + $0xe0] sm:$0xf]
    %v1000 = vld [vmem:[#allocation5 + $0xe4] sm:$0xf]
    %v1001 = vld [vmem:[#allocation5 + $0xe8] sm:$0xf]
    %v1002 = vld [vmem:[#allocation5 + $0xec] sm:$0xf]
    %v1003 = vld [vmem:[#allocation5 + $0xf0] sm:$0xf]
    %v1004 = vld [vmem:[#allocation5 + $0xf4] sm:$0xf]
    %v1005 = vld [vmem:[#allocation5 + $0xf8] sm:$0xf]
    %v1006 = vld [vmem:[#allocation5 + $0xfc] sm:$0xf]
    %v1007 = vld [vmem:[#allocation5 + $0x100] sm:$0xf]
    %v1008 = vld [vmem:[#allocation5 + $0x104] sm:$0xf]
    %v1009 = vld [vmem:[#allocation5 + $0x108] sm:$0xf]
    %v1010 = vld [vmem:[#allocation5 + $0x10c] sm:$0xf]
    %v1011 = vld [vmem:[#allocation5 + $0x110] sm:$0xf]
    %v1012 = vld [vmem:[#allocation5 + $0x114] sm:$0xf]
    %v1013 = vld [vmem:[#allocation5 + $0x118] sm:$0xf]
    %v1014 = vld [vmem:[#allocation5 + $0x11c] sm:$0xf]
    %v1015 = vld [vmem:[#allocation5 + $0x120] sm:$0xf]
    %v1016 = vld [vmem:[#allocation5 + $0x124] sm:$0xf]
    %v1017 = vld [vmem:[#allocation5 + $0x128] sm:$0xf]
    %v1018 = vld [vmem:[#allocation5 + $0x12c] sm:$0xf]
    %v1019 = vld [vmem:[#allocation5 + $0x130] sm:$0xf]
    %v1020 = vld [vmem:[#allocation5 + $0x134] sm:$0xf]
    %v1021 = vld [vmem:[#allocation5 + $0x138] sm:$0xf]
    %v1022 = vld [vmem:[#allocation5 + $0x13c] sm:$0xf]
    %v1023 = vld [vmem:[#allocation5 + $0x140] sm:$0xf]
    %v1024 = vld [vmem:[#allocation5 + $0x144] sm:$0xf]
    %v1025 = vld [vmem:[#allocation5 + $0x148] sm:$0xf]
    %v1026 = vld [vmem:[#allocation5 + $0x14c] sm:$0xf]
    %v1027 = vld [vmem:[#allocation5 + $0x150] sm:$0xf]
    %v1028 = vld [vmem:[#allocation5 + $0x154] sm:$0xf]
    %v1029 = vld [vmem:[#allocation5 + $0x158] sm:$0xf]
    %v1030 = vld [vmem:[#allocation5 + $0x15c] sm:$0xf]
    %v1031 = vld [vmem:[#allocation5 + $0x160] sm:$0xf]
    %v1032 = vld [vmem:[#allocation5 + $0x164] sm:$0xf]
    %v1033 = vld [vmem:[#allocation5 + $0x168] sm:$0xf]
    %v1034 = vld [vmem:[#allocation5 + $0x16c] sm:$0xf]
    %v1035 = vld [vmem:[#allocation5 + $0x170] sm:$0xf]
    %v1036 = vld [vmem:[#allocation5 + $0x174] sm:$0xf]
    %v1037 = vld [vmem:[#allocation5 + $0x178] sm:$0xf]
    %v1038 = vld [vmem:[#allocation5 + $0x17c] sm:$0xf]
    %v1039 = vld [vmem:[#allocation5 + $0x180] sm:$0xf]
    %v1040 = vld [vmem:[#allocation5 + $0x184] sm:$0xf]
    %v1041 = vld [vmem:[#allocation5 + $0x188] sm:$0xf]
    %v1042 = vld [vmem:[#allocation5 + $0x18c] sm:$0xf]
    %v1043 = vld [vmem:[#allocation5 + $0x190] sm:$0xf]
    %v1044 = vld [vmem:[#allocation5 + $0x194] sm:$0xf]
    %v1045 = vld [vmem:[#allocation5 + $0x198] sm:$0xf]
    %v1046 = vld [vmem:[#allocation5 + $0x19c] sm:$0xf]
    %v1047 = vld [vmem:[#allocation5 + $0x1a0] sm:$0xf]
    %v1048 = vld [vmem:[#allocation5 + $0x1a4] sm:$0xf]
    %v1049 = vld [vmem:[#allocation5 + $0x1a8] sm:$0xf]
    %v1050 = vld [vmem:[#allocation5 + $0x1ac] sm:$0xf]
    %v1051 = vld [vmem:[#allocation5 + $0x1b0] sm:$0xf]
    %v1052 = vld [vmem:[#allocation5 + $0x1b4] sm:$0xf]
    %v1053 = vld [vmem:[#allocation5 + $0x1b8] sm:$0xf]
    %v1054 = vld [vmem:[#allocation5 + $0x1bc] sm:$0xf]
    %v1055 = vld [vmem:[#allocation5 + $0x1c0] sm:$0xf]
    %v1056 = vld [vmem:[#allocation5 + $0x1c4] sm:$0xf]
    %v1057 = vld [vmem:[#allocation5 + $0x1c8] sm:$0xf]
    %v1058 = vld [vmem:[#allocation5 + $0x1cc] sm:$0xf]
    %v1059 = vld [vmem:[#allocation5 + $0x1d0] sm:$0xf]
    %v1060 = vld [vmem:[#allocation5 + $0x1d4] sm:$0xf]
    %v1061 = vld [vmem:[#allocation5 + $0x1d8] sm:$0xf]
    %v1062 = vld [vmem:[#allocation5 + $0x1dc] sm:$0xf]
    %v1063 = vld [vmem:[#allocation5 + $0x1e0] sm:$0xf]
    %v1064 = vld [vmem:[#allocation5 + $0x1e4] sm:$0xf]
    %v1065 = vld [vmem:[#allocation5 + $0x1e8] sm:$0xf]
    %v1066 = vld [vmem:[#allocation5 + $0x1ec] sm:$0xf]
    %v1067 = vld [vmem:[#allocation5 + $0x1f0] sm:$0xf]
    %v1068 = vld [vmem:[#allocation5 + $0x1f4] sm:$0xf]
    %v1069 = vld [vmem:[#allocation5 + $0x1f8] sm:$0xf]
    %v1070 = vld [vmem:[#allocation5 + $0x1fc] sm:$0xf]
    %v1071 = vld [vmem:[#allocation11] sm:$0xf]
    %v1072 = vld [vmem:[#allocation11 + $0x4] sm:$0xf]
    %v1073 = vld [vmem:[#allocation11 + $0x8] sm:$0xf]
    %v1074 = vld [vmem:[#allocation11 + $0xc] sm:$0xf]
    %v1075 = vld [vmem:[#allocation11 + $0x10] sm:$0xf]
    %v1076 = vld [vmem:[#allocation11 + $0x14] sm:$0xf]
    %v1077 = vld [vmem:[#allocation11 + $0x18] sm:$0xf]
    %v1078 = vld [vmem:[#allocation11 + $0x1c] sm:$0xf]
    %v1079 = vld [vmem:[#allocation11 + $0x20] sm:$0xf]
    %v1080 = vld [vmem:[#allocation11 + $0x24] sm:$0xf]
    %v1081 = vld [vmem:[#allocation11 + $0x28] sm:$0xf]
    %v1082 = vld [vmem:[#allocation11 + $0x2c] sm:$0xf]
    %v1083 = vld [vmem:[#allocation11 + $0x30] sm:$0xf]
    %v1084 = vld [vmem:[#allocation11 + $0x34] sm:$0xf]
    %v1085 = vld [vmem:[#allocation11 + $0x38] sm:$0xf]
    %v1086 = vld [vmem:[#allocation11 + $0x3c] sm:$0xf]
    %v1087 = vld [vmem:[#allocation14] sm:$0xff]
    %v1088 = vld [vmem:[#allocation14 + $0x8] sm:$0xf]
    %v1089 = vld [vmem:[#allocation14 + $0xc] sm:$0xff]
    %v1090 = vld [vmem:[#allocation14 + $0x14] sm:$0xf]
    %v1091 = vld [vmem:[#allocation14 + $0x18] sm:$0xff]
    %v1092 = vld [vmem:[#allocation14 + $0x20] sm:$0xf]
    %v1093 = vld [vmem:[#allocation14 + $0x24] sm:$0xff]
    %v1094 = vld [vmem:[#allocation14 + $0x2c] sm:$0xf]
    %v1095 = vld [vmem:[#allocation14 + $0x30] sm:$0xff]
    %v1096 = vld [vmem:[#allocation14 + $0x38] sm:$0xf]
    %v1097 = vld [vmem:[#allocation14 + $0x3c] sm:$0xff]
    %v1098 = vld [vmem:[#allocation14 + $0x44] sm:$0xf]
    %v1099 = vld [vmem:[#allocation14 + $0x48] sm:$0xff]
    %v1100 = vld [vmem:[#allocation14 + $0x50] sm:$0xf]
    %v1101 = vld [vmem:[#allocation14 + $0x54] sm:$0xff]
    %v1102 = vld [vmem:[#allocation14 + $0x5c] sm:$0xf]
    %v1103 = vld [vmem:[#allocation14 + $0x60] sm:$0xff]
    %v1104 = vld [vmem:[#allocation14 + $0x68] sm:$0xf]
    %v1105 = vld [vmem:[#allocation14 + $0x6c] sm:$0xff]
    %v1106 = vld [vmem:[#allocation14 + $0x74] sm:$0xf]
    %v1107 = vld [vmem:[#allocation14 + $0x78] sm:$0xff]
    %v1108 = vld [vmem:[#allocation14 + $0x80] sm:$0xf]
    %v1109 = vld [vmem:[#allocation14 + $0x84] sm:$0xff]
    %v1110 = vld [vmem:[#allocation14 + $0x8c] sm:$0xf]
    %v1111 = vld [vmem:[#allocation14 + $0x90] sm:$0xff]
    %v1112 = vld [vmem:[#allocation14 + $0x98] sm:$0xf]
    %v1113 = vld [vmem:[#allocation14 + $0x9c] sm:$0xff]
    %v1114 = vld [vmem:[#allocation14 + $0xa4] sm:$0xf]
    %v1115 = vld [vmem:[#allocation14 + $0xa8] sm:$0xff]
    %v1116 = vld [vmem:[#allocation14 + $0xb0] sm:$0xf]
    %v1117 = vld [vmem:[#allocation14 + $0xb4] sm:$0xff]
    %v1118 = vld [vmem:[#allocation14 + $0xbc] sm:$0xf]
    %v1119 = vld [vmem:[#allocation16] sm:$0xff]
    %v1120 = vld [vmem:[#allocation16 + $0x8] sm:$0xf]
    %v1121 = vld [vmem:[#allocation16 + $0xc] sm:$0xff]
    %v1122 = vld [vmem:[#allocation16 + $0x14] sm:$0xf]
    %v1123 = vld [vmem:[#allocation16 + $0x18] sm:$0xff]
    %v1124 = vld [vmem:[#allocation16 + $0x20] sm:$0xf]
    %v1125 = vld [vmem:[#allocation16 + $0x24] sm:$0xff]
    %v1126 = vld [vmem:[#allocation16 + $0x2c] sm:$0xf]
    %v1127 = vld [vmem:[#allocation16 + $0x30] sm:$0xff]
    %v1128 = vld [vmem:[#allocation16 + $0x38] sm:$0xf]
    %v1129 = vld [vmem:[#allocation16 + $0x3c] sm:$0xff]
    %v1130 = vld [vmem:[#allocation16 + $0x44] sm:$0xf]
    %v1131 = vld [vmem:[#allocation16 + $0x48] sm:$0xff]
    %v1132 = vld [vmem:[#allocation16 + $0x50] sm:$0xf]
    %v1133 = vld [vmem:[#allocation16 + $0x54] sm:$0xff]
    %v1134 = vld [vmem:[#allocation16 + $0x5c] sm:$0xf]
    %v1135 = vld [vmem:[#allocation16 + $0x60] sm:$0xff]
    %v1136 = vld [vmem:[#allocation16 + $0x68] sm:$0xf]
    %v1137 = vld [vmem:[#allocation16 + $0x6c] sm:$0xff]
    %v1138 = vld [vmem:[#allocation16 + $0x74] sm:$0xf]
    %v1139 = vld [vmem:[#allocation16 + $0x78] sm:$0xff]
    %v1140 = vld [vmem:[#allocation16 + $0x80] sm:$0xf]
    %v1141 = vld [vmem:[#allocation16 + $0x84] sm:$0xff]
    %v1142 = vld [vmem:[#allocation16 + $0x8c] sm:$0xf]
    %v1143 = vld [vmem:[#allocation16 + $0x90] sm:$0xff]
    %v1144 = vld [vmem:[#allocation16 + $0x98] sm:$0xf]
    %v1145 = vld [vmem:[#allocation16 + $0x9c] sm:$0xff]
    %v1146 = vld [vmem:[#allocation16 + $0xa4] sm:$0xf]
    %v1147 = vld [vmem:[#allocation16 + $0xa8] sm:$0xff]
    %v1148 = vld [vmem:[#allocation16 + $0xb0] sm:$0xf]
    %v1149 = vld [vmem:[#allocation16 + $0xb4] sm:$0xff]
    %v1150 = vld [vmem:[#allocation16 + $0xbc] sm:$0xf]
    %v1151 = vld [vmem:[%s4] sm:$0xff]
    %v1152 = vld [vmem:[%s4 + $0x8] sm:$0xff]
    %1154 = vset.pattern.permute.xlu0 0
    %1155 = vperm.xlu0 %1154, %v1151
    %v1156 = vpop.permute.xlu0 %1155
    %1159 = vset.pattern.permute.xlu0 0
    %1160 = vperm.xlu0 %1159, %v1152
    %v1161 = vpop.permute.xlu0 %1160
    %v1163 = vld [vmem:[#allocation13] sm:$0x1]
    %v1165 = vperm.slane %v1163, 0
    %v1167 = vld [vmem:[%s15] sm:$0x7]
    %v1169 = vperm.slane %v1167, 0
    %v1170 = vperm.slane %v1167, 1
    %v1171 = vperm.slane %v1167, 2
    %v1175 = vld [vmem:[%s16] sm:$0x7]
    %v1177 = vperm.slane %v1175, 0
    %v1178 = vperm.slane %v1175, 1
    %v1179 = vperm.slane %v1175, 2
    %v1183 = vld [vmem:[%s0] sm:$0xff]
    %v1184 = vld [vmem:[%s0 + $0x8] sm:$0xff]
    %v1185 = vpack.c.bf16 %v1184, %v1183
    %v1190 = vunpack.c.l.b16 %v873
    %v1191 = vunpack.c.l.b16 %v874
    %v1192 = vunpack.c.l.b16 %v875
    %v1193 = vunpack.c.l.b16 %v876
    %v1194 = vpack.c.b16 %v1191, %v1190
    %v1195 = vpack.c.b16 %v1193, %v1192
    %vm1196 = vcmask 130048
    %v1198 = vsel %vm1196, %v1194, 0
    %v1201 = vsel %vm1196, %v1195, 0
    %1203 = vmatpush.bf16.msra.mxu0 0
    %1204 = vmatpush.bf16.msra.mxu0 0
    %1205 = vmatpush.bf16.msra.mxu0 0
    %1206 = vmatpush.bf16.msra.mxu0 0
    %1207 = vmatpush.bf16.msra.mxu0 0
    %1208 = vmatpush.bf16.msra.mxu0 0
    %1209 = vmatpush.bf16.msra.mxu0 0
    %1210 = vmatpush.bf16.msra.mxu0 %v1185
    %1211 = vmatmul.bf16.gmra.mxu0 %v1198
    %v1212 = vpop.f32.mrf.mxu0
    %v1213 = vadd.f32 0.0, %v1212
    %v1214 = vpop.f32.mrf.mxu0
    %v1215 = vadd.f32 0.0, %v1214
    %1216 = vmatmul.bf16.gmra.mxu0 %v1201
    %v1217 = vpop.f32.mrf.mxu0
    %v1218 = vadd.f32 0.0, %v1217
    %v1219 = vpop.f32.mrf.mxu0
    %v1220 = vadd.f32 0.0, %v1219
    %1221 = vdwg.mxu0
    %v1222 = vpack.c.bf16 %v1215, %v1213
    %v1223 = vpack.c.bf16 %v1220, %v1218
    %v1288 = vunpack.c.l.b16 %v879
    %v1289 = vunpack.c.h.b16 %v879
    %v1290 = vunpack.c.l.b16 %v880
    %v1291 = vunpack.c.h.b16 %v880
    %v1292 = vunpack.c.l.b16 %v881
    %v1293 = vunpack.c.h.b16 %v881
    %v1294 = vunpack.c.l.b16 %v882
    %v1295 = vunpack.c.h.b16 %v882
    %v1296 = vunpack.c.l.b16 %v883
    %v1297 = vunpack.c.h.b16 %v883
    %v1298 = vunpack.c.l.b16 %v884
    %v1299 = vunpack.c.h.b16 %v884
    %v1300 = vunpack.c.l.b16 %v885
    %v1301 = vunpack.c.h.b16 %v885
    %v1302 = vunpack.c.l.b16 %v886
    %v1303 = vunpack.c.h.b16 %v886
    %v1304 = vunpack.c.l.b16 %v887
    %v1305 = vunpack.c.h.b16 %v887
    %v1306 = vunpack.c.l.b16 %v888
    %v1307 = vunpack.c.h.b16 %v888
    %v1308 = vunpack.c.l.b16 %v889
    %v1309 = vunpack.c.h.b16 %v889
    %v1310 = vunpack.c.l.b16 %v890
    %v1311 = vunpack.c.h.b16 %v890
    %v1312 = vunpack.c.l.b16 %v891
    %v1313 = vunpack.c.h.b16 %v891
    %v1314 = vunpack.c.l.b16 %v892
    %v1315 = vunpack.c.h.b16 %v892
    %v1316 = vunpack.c.l.b16 %v893
    %v1317 = vunpack.c.h.b16 %v893
    %v1318 = vunpack.c.l.b16 %v894
    %v1319 = vunpack.c.h.b16 %v894
    %v1320 = vunpack.c.l.b16 %v895
    %v1321 = vunpack.c.h.b16 %v895
    %v1322 = vunpack.c.l.b16 %v896
    %v1323 = vunpack.c.h.b16 %v896
    %v1324 = vunpack.c.l.b16 %v897
    %v1325 = vunpack.c.h.b16 %v897
    %v1326 = vunpack.c.l.b16 %v898
    %v1327 = vunpack.c.h.b16 %v898
    %v1328 = vunpack.c.l.b16 %v899
    %v1329 = vunpack.c.h.b16 %v899
    %v1330 = vunpack.c.l.b16 %v900
    %v1331 = vunpack.c.h.b16 %v900
    %v1332 = vunpack.c.l.b16 %v901
    %v1333 = vunpack.c.h.b16 %v901
    %v1334 = vunpack.c.l.b16 %v902
    %v1335 = vunpack.c.h.b16 %v902
    %v1336 = vunpack.c.l.b16 %v903
    %v1337 = vunpack.c.h.b16 %v903
    %v1338 = vunpack.c.l.b16 %v904
    %v1339 = vunpack.c.h.b16 %v904
    %v1340 = vunpack.c.l.b16 %v905
    %v1341 = vunpack.c.h.b16 %v905
    %v1342 = vunpack.c.l.b16 %v906
    %v1343 = vunpack.c.h.b16 %v906
    %v1344 = vunpack.c.l.b16 %v907
    %v1345 = vunpack.c.h.b16 %v907
    %v1346 = vunpack.c.l.b16 %v908
    %v1347 = vunpack.c.h.b16 %v908
    %v1348 = vunpack.c.l.b16 %v909
    %v1349 = vunpack.c.h.b16 %v909
    %v1350 = vunpack.c.l.b16 %v910
    %v1351 = vunpack.c.h.b16 %v910
    %v1352 = vunpack.c.l.b16 %v911
    %v1353 = vunpack.c.h.b16 %v911
    %v1354 = vunpack.c.l.b16 %v912
    %v1355 = vunpack.c.h.b16 %v912
    %v1356 = vunpack.c.l.b16 %v913
    %v1357 = vunpack.c.h.b16 %v913
    %v1358 = vunpack.c.l.b16 %v914
    %v1359 = vunpack.c.h.b16 %v914
    %v1360 = vunpack.c.l.b16 %v915
    %v1361 = vunpack.c.h.b16 %v915
    %v1362 = vunpack.c.l.b16 %v916
    %v1363 = vunpack.c.h.b16 %v916
    %v1364 = vunpack.c.l.b16 %v917
    %v1365 = vunpack.c.h.b16 %v917
    %v1366 = vunpack.c.l.b16 %v918
    %v1367 = vunpack.c.h.b16 %v918
    %v1368 = vunpack.c.l.b16 %v919
    %v1369 = vunpack.c.h.b16 %v919
    %v1370 = vunpack.c.l.b16 %v920
    %v1371 = vunpack.c.h.b16 %v920
    %v1372 = vunpack.c.l.b16 %v921
    %v1373 = vunpack.c.h.b16 %v921
    %v1374 = vunpack.c.l.b16 %v922
    %v1375 = vunpack.c.h.b16 %v922
    %v1376 = vunpack.c.l.b16 %v923
    %v1377 = vunpack.c.h.b16 %v923
    %v1378 = vunpack.c.l.b16 %v924
    %v1379 = vunpack.c.h.b16 %v924
    %v1380 = vunpack.c.l.b16 %v925
    %v1381 = vunpack.c.h.b16 %v925
    %v1382 = vunpack.c.l.b16 %v926
    %v1383 = vunpack.c.h.b16 %v926
    %v1384 = vunpack.c.l.b16 %v927
    %v1385 = vunpack.c.h.b16 %v927
    %v1386 = vunpack.c.l.b16 %v928
    %v1387 = vunpack.c.h.b16 %v928
    %v1388 = vunpack.c.l.b16 %v929
    %v1389 = vunpack.c.h.b16 %v929
    %v1390 = vunpack.c.l.b16 %v930
    %v1391 = vunpack.c.h.b16 %v930
    %v1392 = vunpack.c.l.b16 %v931
    %v1393 = vunpack.c.h.b16 %v931
    %v1394 = vunpack.c.l.b16 %v932
    %v1395 = vunpack.c.h.b16 %v932
    %v1396 = vunpack.c.l.b16 %v933
    %v1397 = vunpack.c.h.b16 %v933
    %v1398 = vunpack.c.l.b16 %v934
    %v1399 = vunpack.c.h.b16 %v934
    %v1400 = vunpack.c.l.b16 %v935
    %v1401 = vunpack.c.h.b16 %v935
    %v1402 = vunpack.c.l.b16 %v936
    %v1403 = vunpack.c.h.b16 %v936
    %v1404 = vunpack.c.l.b16 %v937
    %v1405 = vunpack.c.h.b16 %v937
    %v1406 = vunpack.c.l.b16 %v938
    %v1407 = vunpack.c.h.b16 %v938
    %v1408 = vunpack.c.l.b16 %v939
    %v1409 = vunpack.c.h.b16 %v939
    %v1410 = vunpack.c.l.b16 %v940
    %v1411 = vunpack.c.h.b16 %v940
    %v1412 = vunpack.c.l.b16 %v941
    %v1413 = vunpack.c.h.b16 %v941
    %v1414 = vunpack.c.l.b16 %v942
    %v1415 = vunpack.c.h.b16 %v942
    %v1416 = vpack.c.b16 %v1296, %v1288
    %v1417 = vpack.c.b16 %v1297, %v1289
    %v1418 = vpack.c.b16 %v1298, %v1290
    %v1419 = vpack.c.b16 %v1299, %v1291
    %v1420 = vpack.c.b16 %v1300, %v1292
    %v1421 = vpack.c.b16 %v1301, %v1293
    %v1422 = vpack.c.b16 %v1302, %v1294
    %v1423 = vpack.c.b16 %v1303, %v1295
    %v1424 = vpack.c.b16 %v1312, %v1304
    %v1425 = vpack.c.b16 %v1313, %v1305
    %v1426 = vpack.c.b16 %v1314, %v1306
    %v1427 = vpack.c.b16 %v1315, %v1307
    %v1428 = vpack.c.b16 %v1316, %v1308
    %v1429 = vpack.c.b16 %v1317, %v1309
    %v1430 = vpack.c.b16 %v1318, %v1310
    %v1431 = vpack.c.b16 %v1319, %v1311
    %v1432 = vpack.c.b16 %v1328, %v1320
    %v1433 = vpack.c.b16 %v1329, %v1321
    %v1434 = vpack.c.b16 %v1330, %v1322
    %v1435 = vpack.c.b16 %v1331, %v1323
    %v1436 = vpack.c.b16 %v1332, %v1324
    %v1437 = vpack.c.b16 %v1333, %v1325
    %v1438 = vpack.c.b16 %v1334, %v1326
    %v1439 = vpack.c.b16 %v1335, %v1327
    %v1440 = vpack.c.b16 %v1344, %v1336
    %v1441 = vpack.c.b16 %v1345, %v1337
    %v1442 = vpack.c.b16 %v1346, %v1338
    %v1443 = vpack.c.b16 %v1347, %v1339
    %v1444 = vpack.c.b16 %v1348, %v1340
    %v1445 = vpack.c.b16 %v1349, %v1341
    %v1446 = vpack.c.b16 %v1350, %v1342
    %v1447 = vpack.c.b16 %v1351, %v1343
    %v1448 = vpack.c.b16 %v1360, %v1352
    %v1449 = vpack.c.b16 %v1361, %v1353
    %v1450 = vpack.c.b16 %v1362, %v1354
    %v1451 = vpack.c.b16 %v1363, %v1355
    %v1452 = vpack.c.b16 %v1364, %v1356
    %v1453 = vpack.c.b16 %v1365, %v1357
    %v1454 = vpack.c.b16 %v1366, %v1358
    %v1455 = vpack.c.b16 %v1367, %v1359
    %v1456 = vpack.c.b16 %v1376, %v1368
    %v1457 = vpack.c.b16 %v1377, %v1369
    %v1458 = vpack.c.b16 %v1378, %v1370
    %v1459 = vpack.c.b16 %v1379, %v1371
    %v1460 = vpack.c.b16 %v1380, %v1372
    %v1461 = vpack.c.b16 %v1381, %v1373
    %v1462 = vpack.c.b16 %v1382, %v1374
    %v1463 = vpack.c.b16 %v1383, %v1375
    %v1464 = vpack.c.b16 %v1392, %v1384
    %v1465 = vpack.c.b16 %v1393, %v1385
    %v1466 = vpack.c.b16 %v1394, %v1386
    %v1467 = vpack.c.b16 %v1395, %v1387
    %v1468 = vpack.c.b16 %v1396, %v1388
    %v1469 = vpack.c.b16 %v1397, %v1389
    %v1470 = vpack.c.b16 %v1398, %v1390
    %v1471 = vpack.c.b16 %v1399, %v1391
    %v1472 = vpack.c.b16 %v1408, %v1400
    %v1473 = vpack.c.b16 %v1409, %v1401
    %v1474 = vpack.c.b16 %v1410, %v1402
    %v1475 = vpack.c.b16 %v1411, %v1403
    %v1476 = vpack.c.b16 %v1412, %v1404
    %v1477 = vpack.c.b16 %v1413, %v1405
    %v1478 = vpack.c.b16 %v1414, %v1406
    %v1479 = vpack.c.b16 %v1415, %v1407
    %1544 = vmatpush.bf16.msra.mxu0 %v1472
    %1545 = vmatpush.bf16.msra.mxu0 %v1464
    %1546 = vmatpush.bf16.msra.mxu0 %v1456
    %1547 = vmatpush.bf16.msra.mxu0 %v1448
    %1548 = vmatpush.bf16.msra.mxu0 %v1440
    %1549 = vmatpush.bf16.msra.mxu0 %v1432
    %1550 = vmatpush.bf16.msra.mxu0 %v1424
    %1551 = vmatpush.bf16.msra.mxu0 %v1416
    %1552 = vmatmul.bf16.gmra.mxu0 %v1222
    %v1553 = vpop.f32.mrf.mxu0
    %v1554 = vadd.f32 0.0, %v1553
    %v1555 = vpop.f32.mrf.mxu0
    %v1556 = vadd.f32 0.0, %v1555
    %1557 = vmatmul.bf16.gmra.mxu0 %v1223
    %v1558 = vpop.f32.mrf.mxu0
    %v1559 = vadd.f32 0.0, %v1558
    %v1560 = vpop.f32.mrf.mxu0
    %v1561 = vadd.f32 0.0, %v1560
    %1562 = vdwg.mxu0
    %1563 = vmatpush.bf16.msra.mxu0 %v1473
    %1564 = vmatpush.bf16.msra.mxu0 %v1465
    %1565 = vmatpush.bf16.msra.mxu0 %v1457
    %1566 = vmatpush.bf16.msra.mxu0 %v1449
    %1567 = vmatpush.bf16.msra.mxu0 %v1441
    %1568 = vmatpush.bf16.msra.mxu0 %v1433
    %1569 = vmatpush.bf16.msra.mxu0 %v1425
    %1570 = vmatpush.bf16.msra.mxu0 %v1417
    %1571 = vmatmul.bf16.gmra.mxu0 %v1222
    %v1572 = vpop.f32.mrf.mxu0
    %v1573 = vadd.f32 0.0, %v1572
    %v1574 = vpop.f32.mrf.mxu0
    %v1575 = vadd.f32 0.0, %v1574
    %1576 = vmatmul.bf16.gmra.mxu0 %v1223
    %v1577 = vpop.f32.mrf.mxu0
    %v1578 = vadd.f32 0.0, %v1577
    %v1579 = vpop.f32.mrf.mxu0
    %v1580 = vadd.f32 0.0, %v1579
    %1581 = vdwg.mxu0
    %1582 = vmatpush.bf16.msra.mxu0 %v1474
    %1583 = vmatpush.bf16.msra.mxu0 %v1466
    %1584 = vmatpush.bf16.msra.mxu0 %v1458
    %1585 = vmatpush.bf16.msra.mxu0 %v1450
    %1586 = vmatpush.bf16.msra.mxu0 %v1442
    %1587 = vmatpush.bf16.msra.mxu0 %v1434
    %1588 = vmatpush.bf16.msra.mxu0 %v1426
    %1589 = vmatpush.bf16.msra.mxu0 %v1418
    %1590 = vmatmul.bf16.gmra.mxu0 %v1222
    %v1591 = vpop.f32.mrf.mxu0
    %v1592 = vadd.f32 0.0, %v1591
    %v1593 = vpop.f32.mrf.mxu0
    %v1594 = vadd.f32 0.0, %v1593
    %1595 = vmatmul.bf16.gmra.mxu0 %v1223
    %v1596 = vpop.f32.mrf.mxu0
    %v1597 = vadd.f32 0.0, %v1596
    %v1598 = vpop.f32.mrf.mxu0
    %v1599 = vadd.f32 0.0, %v1598
    %1600 = vdwg.mxu0
    %1601 = vmatpush.bf16.msra.mxu0 %v1475
    %1602 = vmatpush.bf16.msra.mxu0 %v1467
    %1603 = vmatpush.bf16.msra.mxu0 %v1459
    %1604 = vmatpush.bf16.msra.mxu0 %v1451
    %1605 = vmatpush.bf16.msra.mxu0 %v1443
    %1606 = vmatpush.bf16.msra.mxu0 %v1435
    %1607 = vmatpush.bf16.msra.mxu0 %v1427
    %1608 = vmatpush.bf16.msra.mxu0 %v1419
    %1609 = vmatmul.bf16.gmra.mxu0 %v1222
    %v1610 = vpop.f32.mrf.mxu0
    %v1611 = vadd.f32 0.0, %v1610
    %v1612 = vpop.f32.mrf.mxu0
    %v1613 = vadd.f32 0.0, %v1612
    %1614 = vmatmul.bf16.gmra.mxu0 %v1223
    %v1615 = vpop.f32.mrf.mxu0
    %v1616 = vadd.f32 0.0, %v1615
    %v1617 = vpop.f32.mrf.mxu0
    %v1618 = vadd.f32 0.0, %v1617
    %1619 = vdwg.mxu0
    %1620 = vmatpush.bf16.msra.mxu0 %v1476
    %1621 = vmatpush.bf16.msra.mxu0 %v1468
    %1622 = vmatpush.bf16.msra.mxu0 %v1460
    %1623 = vmatpush.bf16.msra.mxu0 %v1452
    %1624 = vmatpush.bf16.msra.mxu0 %v1444
    %1625 = vmatpush.bf16.msra.mxu0 %v1436
    %1626 = vmatpush.bf16.msra.mxu0 %v1428
    %1627 = vmatpush.bf16.msra.mxu0 %v1420
    %1628 = vmatmul.bf16.gmra.mxu0 %v1222
    %v1629 = vpop.f32.mrf.mxu0
    %v1630 = vadd.f32 0.0, %v1629
    %v1631 = vpop.f32.mrf.mxu0
    %v1632 = vadd.f32 0.0, %v1631
    %1633 = vmatmul.bf16.gmra.mxu0 %v1223
    %v1634 = vpop.f32.mrf.mxu0
    %v1635 = vadd.f32 0.0, %v1634
    %v1636 = vpop.f32.mrf.mxu0
    %v1637 = vadd.f32 0.0, %v1636
    %1638 = vdwg.mxu0
    %1639 = vmatpush.bf16.msra.mxu0 %v1477
    %1640 = vmatpush.bf16.msra.mxu0 %v1469
    %1641 = vmatpush.bf16.msra.mxu0 %v1461
    %1642 = vmatpush.bf16.msra.mxu0 %v1453
    %1643 = vmatpush.bf16.msra.mxu0 %v1445
    %1644 = vmatpush.bf16.msra.mxu0 %v1437
    %1645 = vmatpush.bf16.msra.mxu0 %v1429
    %1646 = vmatpush.bf16.msra.mxu0 %v1421
    %1647 = vmatmul.bf16.gmra.mxu0 %v1222
    %v1648 = vpop.f32.mrf.mxu0
    %v1649 = vadd.f32 0.0, %v1648
    %v1650 = vpop.f32.mrf.mxu0
    %v1651 = vadd.f32 0.0, %v1650
    %1652 = vmatmul.bf16.gmra.mxu0 %v1223
    %v1653 = vpop.f32.mrf.mxu0
    %v1654 = vadd.f32 0.0, %v1653
    %v1655 = vpop.f32.mrf.mxu0
    %v1656 = vadd.f32 0.0, %v1655
    %1657 = vdwg.mxu0
    %1658 = vmatpush.bf16.msra.mxu0 %v1478
    %1659 = vmatpush.bf16.msra.mxu0 %v1470
    %1660 = vmatpush.bf16.msra.mxu0 %v1462
    %1661 = vmatpush.bf16.msra.mxu0 %v1454
    %1662 = vmatpush.bf16.msra.mxu0 %v1446
    %1663 = vmatpush.bf16.msra.mxu0 %v1438
    %1664 = vmatpush.bf16.msra.mxu0 %v1430
    %1665 = vmatpush.bf16.msra.mxu0 %v1422
    %1666 = vmatmul.bf16.gmra.mxu0 %v1222
    %v1667 = vpop.f32.mrf.mxu0
    %v1668 = vadd.f32 0.0, %v1667
    %v1669 = vpop.f32.mrf.mxu0
    %v1670 = vadd.f32 0.0, %v1669
    %1671 = vmatmul.bf16.gmra.mxu0 %v1223
    %v1672 = vpop.f32.mrf.mxu0
    %v1673 = vadd.f32 0.0, %v1672
    %v1674 = vpop.f32.mrf.mxu0
    %v1675 = vadd.f32 0.0, %v1674
    %1676 = vdwg.mxu0
    %1677 = vmatpush.bf16.msra.mxu0 %v1479
    %1678 = vmatpush.bf16.msra.mxu0 %v1471
    %1679 = vmatpush.bf16.msra.mxu0 %v1463
    %1680 = vmatpush.bf16.msra.mxu0 %v1455
    %1681 = vmatpush.bf16.msra.mxu0 %v1447
    %1682 = vmatpush.bf16.msra.mxu0 %v1439
    %1683 = vmatpush.bf16.msra.mxu0 %v1431
    %1684 = vmatpush.bf16.msra.mxu0 %v1423
    %1685 = vmatmul.bf16.gmra.mxu0 %v1222
    %v1686 = vpop.f32.mrf.mxu0
    %v1687 = vadd.f32 0.0, %v1686
    %v1688 = vpop.f32.mrf.mxu0
    %v1689 = vadd.f32 0.0, %v1688
    %1690 = vmatmul.bf16.gmra.mxu0 %v1223
    %v1691 = vpop.f32.mrf.mxu0
    %v1692 = vadd.f32 0.0, %v1691
    %v1693 = vpop.f32.mrf.mxu0
    %v1694 = vadd.f32 0.0, %v1693
    %1695 = vdwg.mxu0
    %v1696 = vpack.c.bf16 %v1573, %v1554
    %v1697 = vpack.c.bf16 %v1611, %v1592
    %v1698 = vpack.c.bf16 %v1649, %v1630
    %v1699 = vpack.c.bf16 %v1687, %v1668
    %v1700 = vpack.c.bf16 %v1575, %v1556
    %v1701 = vpack.c.bf16 %v1613, %v1594
    %v1702 = vpack.c.bf16 %v1651, %v1632
    %v1703 = vpack.c.bf16 %v1689, %v1670
    %v1704 = vpack.c.bf16 %v1578, %v1559
    %v1705 = vpack.c.bf16 %v1616, %v1597
    %v1706 = vpack.c.bf16 %v1654, %v1635
    %v1707 = vpack.c.bf16 %v1692, %v1673
    %v1708 = vpack.c.bf16 %v1580, %v1561
    %v1709 = vpack.c.bf16 %v1618, %v1599
    %v1710 = vpack.c.bf16 %v1656, %v1637
    %v1711 = vpack.c.bf16 %v1694, %v1675
    %v1712 = vunpack.c.l.bf16 %v1696
    %v1713 = vunpack.c.h.bf16 %v1696
    %v1714 = vunpack.c.l.bf16 %v1697
    %v1715 = vunpack.c.h.bf16 %v1697
    %v1716 = vunpack.c.l.bf16 %v1698
    %v1717 = vunpack.c.h.bf16 %v1698
    %v1718 = vunpack.c.l.bf16 %v1699
    %v1719 = vunpack.c.h.bf16 %v1699
    %v1720 = vunpack.c.l.bf16 %v1700
    %v1721 = vunpack.c.h.bf16 %v1700
    %v1722 = vunpack.c.l.bf16 %v1701
    %v1723 = vunpack.c.h.bf16 %v1701
    %v1724 = vunpack.c.l.bf16 %v1702
    %v1725 = vunpack.c.h.bf16 %v1702
    %v1726 = vunpack.c.l.bf16 %v1703
    %v1727 = vunpack.c.h.bf16 %v1703
    %v1728 = vunpack.c.l.bf16 %v1704
    %v1729 = vunpack.c.h.bf16 %v1704
    %v1730 = vunpack.c.l.bf16 %v1705
    %v1731 = vunpack.c.h.bf16 %v1705
    %v1732 = vunpack.c.l.bf16 %v1706
    %v1733 = vunpack.c.h.bf16 %v1706
    %v1734 = vunpack.c.l.bf16 %v1707
    %v1735 = vunpack.c.h.bf16 %v1707
    %v1736 = vunpack.c.l.bf16 %v1708
    %v1737 = vunpack.c.h.bf16 %v1708
    %v1738 = vunpack.c.l.bf16 %v1709
    %v1739 = vunpack.c.h.bf16 %v1709
    %v1740 = vunpack.c.l.bf16 %v1710
    %v1741 = vunpack.c.h.bf16 %v1710
    %v1742 = vunpack.c.l.bf16 %v1711
    %v1743 = vunpack.c.h.bf16 %v1711
    %v1744 = vunpack.c.l.bf16 %v857
    %v1745 = vunpack.c.h.bf16 %v857
    %v1746 = vunpack.c.l.bf16 %v858
    %v1747 = vunpack.c.h.bf16 %v858
    %v1748 = vunpack.c.l.bf16 %v859
    %v1749 = vunpack.c.h.bf16 %v859
    %v1750 = vunpack.c.l.bf16 %v860
    %v1751 = vunpack.c.h.bf16 %v860
    %v1752 = vunpack.c.l.bf16 %v861
    %v1753 = vunpack.c.h.bf16 %v861
    %v1754 = vunpack.c.l.bf16 %v862
    %v1755 = vunpack.c.h.bf16 %v862
    %v1756 = vunpack.c.l.bf16 %v863
    %v1757 = vunpack.c.h.bf16 %v863
    %v1758 = vunpack.c.l.bf16 %v864
    %v1759 = vunpack.c.h.bf16 %v864
    %v1760 = vunpack.c.l.bf16 %v865
    %v1761 = vunpack.c.h.bf16 %v865
    %v1762 = vunpack.c.l.bf16 %v866
    %v1763 = vunpack.c.h.bf16 %v866
    %v1764 = vunpack.c.l.bf16 %v867
    %v1765 = vunpack.c.h.bf16 %v867
    %v1766 = vunpack.c.l.bf16 %v868
    %v1767 = vunpack.c.h.bf16 %v868
    %v1768 = vunpack.c.l.bf16 %v869
    %v1769 = vunpack.c.h.bf16 %v869
    %v1770 = vunpack.c.l.bf16 %v870
    %v1771 = vunpack.c.h.bf16 %v870
    %v1772 = vunpack.c.l.bf16 %v871
    %v1773 = vunpack.c.h.bf16 %v871
    %v1774 = vunpack.c.l.bf16 %v872
    %v1775 = vunpack.c.h.bf16 %v872
    %v1776 = vmul.f32 %v1712, %v1744
    %v1777 = vmul.f32 %v1713, %v1745
    %v1778 = vmul.f32 %v1714, %v1746
    %v1779 = vmul.f32 %v1715, %v1747
    %v1780 = vmul.f32 %v1716, %v1748
    %v1781 = vmul.f32 %v1717, %v1749
    %v1782 = vmul.f32 %v1718, %v1750
    %v1783 = vmul.f32 %v1719, %v1751
    %v1784 = vmul.f32 %v1720, %v1752
    %v1785 = vmul.f32 %v1721, %v1753
    %v1786 = vmul.f32 %v1722, %v1754
    %v1787 = vmul.f32 %v1723, %v1755
    %v1788 = vmul.f32 %v1724, %v1756
    %v1789 = vmul.f32 %v1725, %v1757
    %v1790 = vmul.f32 %v1726, %v1758
    %v1791 = vmul.f32 %v1727, %v1759
    %v1792 = vmul.f32 %v1728, %v1760
    %v1793 = vmul.f32 %v1729, %v1761
    %v1794 = vmul.f32 %v1730, %v1762
    %v1795 = vmul.f32 %v1731, %v1763
    %v1796 = vmul.f32 %v1732, %v1764
    %v1797 = vmul.f32 %v1733, %v1765
    %v1798 = vmul.f32 %v1734, %v1766
    %v1799 = vmul.f32 %v1735, %v1767
    %v1800 = vmul.f32 %v1736, %v1768
    %v1801 = vmul.f32 %v1737, %v1769
    %v1802 = vmul.f32 %v1738, %v1770
    %v1803 = vmul.f32 %v1739, %v1771
    %v1804 = vmul.f32 %v1740, %v1772
    %v1805 = vmul.f32 %v1741, %v1773
    %v1806 = vmul.f32 %v1742, %v1774
    %v1807 = vmul.f32 %v1743, %v1775
    %v1808 = vpack.c.bf16 %v1784, %v1776
    %v1809 = vpack.c.bf16 %v1785, %v1777
    %v1810 = vpack.c.bf16 %v1786, %v1778
    %v1811 = vpack.c.bf16 %v1787, %v1779
    %v1812 = vpack.c.bf16 %v1788, %v1780
    %v1813 = vpack.c.bf16 %v1789, %v1781
    %v1814 = vpack.c.bf16 %v1790, %v1782
    %v1815 = vpack.c.bf16 %v1791, %v1783
    %v1816 = vpack.c.bf16 %v1800, %v1792
    %v1817 = vpack.c.bf16 %v1801, %v1793
    %v1818 = vpack.c.bf16 %v1802, %v1794
    %v1819 = vpack.c.bf16 %v1803, %v1795
    %v1820 = vpack.c.bf16 %v1804, %v1796
    %v1821 = vpack.c.bf16 %v1805, %v1797
    %v1822 = vpack.c.bf16 %v1806, %v1798
    %v1823 = vpack.c.bf16 %v1807, %v1799
    %v1952 = vunpack.c.l.b16 %v943
    %v1953 = vunpack.c.l.b16 %v944
    %v1954 = vunpack.c.l.b16 %v945
    %v1955 = vunpack.c.l.b16 %v946
    %v1956 = vunpack.c.l.b16 %v947
    %v1957 = vunpack.c.l.b16 %v948
    %v1958 = vunpack.c.l.b16 %v949
    %v1959 = vunpack.c.l.b16 %v950
    %v1960 = vunpack.c.l.b16 %v951
    %v1961 = vunpack.c.l.b16 %v952
    %v1962 = vunpack.c.l.b16 %v953
    %v1963 = vunpack.c.l.b16 %v954
    %v1964 = vunpack.c.l.b16 %v955
    %v1965 = vunpack.c.l.b16 %v956
    %v1966 = vunpack.c.l.b16 %v957
    %v1967 = vunpack.c.l.b16 %v958
    %v1968 = vunpack.c.l.b16 %v959
    %v1969 = vunpack.c.l.b16 %v960
    %v1970 = vunpack.c.l.b16 %v961
    %v1971 = vunpack.c.l.b16 %v962
    %v1972 = vunpack.c.l.b16 %v963
    %v1973 = vunpack.c.l.b16 %v964
    %v1974 = vunpack.c.l.b16 %v965
    %v1975 = vunpack.c.l.b16 %v966
    %v1976 = vunpack.c.l.b16 %v967
    %v1977 = vunpack.c.l.b16 %v968
    %v1978 = vunpack.c.l.b16 %v969
    %v1979 = vunpack.c.l.b16 %v970
    %v1980 = vunpack.c.l.b16 %v971
    %v1981 = vunpack.c.l.b16 %v972
    %v1982 = vunpack.c.l.b16 %v973
    %v1983 = vunpack.c.l.b16 %v974
    %v1984 = vunpack.c.l.b16 %v975
    %v1985 = vunpack.c.l.b16 %v976
    %v1986 = vunpack.c.l.b16 %v977
    %v1987 = vunpack.c.l.b16 %v978
    %v1988 = vunpack.c.l.b16 %v979
    %v1989 = vunpack.c.l.b16 %v980
    %v1990 = vunpack.c.l.b16 %v981
    %v1991 = vunpack.c.l.b16 %v982
    %v1992 = vunpack.c.l.b16 %v983
    %v1993 = vunpack.c.l.b16 %v984
    %v1994 = vunpack.c.l.b16 %v985
    %v1995 = vunpack.c.l.b16 %v986
    %v1996 = vunpack.c.l.b16 %v987
    %v1997 = vunpack.c.l.b16 %v988
    %v1998 = vunpack.c.l.b16 %v989
    %v1999 = vunpack.c.l.b16 %v990
    %v2000 = vunpack.c.l.b16 %v991
    %v2001 = vunpack.c.l.b16 %v992
    %v2002 = vunpack.c.l.b16 %v993
    %v2003 = vunpack.c.l.b16 %v994
    %v2004 = vunpack.c.l.b16 %v995
    %v2005 = vunpack.c.l.b16 %v996
    %v2006 = vunpack.c.l.b16 %v997
    %v2007 = vunpack.c.l.b16 %v998
    %v2008 = vunpack.c.l.b16 %v999
    %v2009 = vunpack.c.l.b16 %v1000
    %v2010 = vunpack.c.l.b16 %v1001
    %v2011 = vunpack.c.l.b16 %v1002
    %v2012 = vunpack.c.l.b16 %v1003
    %v2013 = vunpack.c.l.b16 %v1004
    %v2014 = vunpack.c.l.b16 %v1005
    %v2015 = vunpack.c.l.b16 %v1006
    %v2016 = vunpack.c.l.b16 %v1007
    %v2017 = vunpack.c.l.b16 %v1008
    %v2018 = vunpack.c.l.b16 %v1009
    %v2019 = vunpack.c.l.b16 %v1010
    %v2020 = vunpack.c.l.b16 %v1011
    %v2021 = vunpack.c.l.b16 %v1012
    %v2022 = vunpack.c.l.b16 %v1013
    %v2023 = vunpack.c.l.b16 %v1014
    %v2024 = vunpack.c.l.b16 %v1015
    %v2025 = vunpack.c.l.b16 %v1016
    %v2026 = vunpack.c.l.b16 %v1017
    %v2027 = vunpack.c.l.b16 %v1018
    %v2028 = vunpack.c.l.b16 %v1019
    %v2029 = vunpack.c.l.b16 %v1020
    %v2030 = vunpack.c.l.b16 %v1021
    %v2031 = vunpack.c.l.b16 %v1022
    %v2032 = vunpack.c.l.b16 %v1023
    %v2033 = vunpack.c.l.b16 %v1024
    %v2034 = vunpack.c.l.b16 %v1025
    %v2035 = vunpack.c.l.b16 %v1026
    %v2036 = vunpack.c.l.b16 %v1027
    %v2037 = vunpack.c.l.b16 %v1028
    %v2038 = vunpack.c.l.b16 %v1029
    %v2039 = vunpack.c.l.b16 %v1030
    %v2040 = vunpack.c.l.b16 %v1031
    %v2041 = vunpack.c.l.b16 %v1032
    %v2042 = vunpack.c.l.b16 %v1033
    %v2043 = vunpack.c.l.b16 %v1034
    %v2044 = vunpack.c.l.b16 %v1035
    %v2045 = vunpack.c.l.b16 %v1036
    %v2046 = vunpack.c.l.b16 %v1037
    %v2047 = vunpack.c.l.b16 %v1038
    %v2048 = vunpack.c.l.b16 %v1039
    %v2049 = vunpack.c.l.b16 %v1040
    %v2050 = vunpack.c.l.b16 %v1041
    %v2051 = vunpack.c.l.b16 %v1042
    %v2052 = vunpack.c.l.b16 %v1043
    %v2053 = vunpack.c.l.b16 %v1044
    %v2054 = vunpack.c.l.b16 %v1045
    %v2055 = vunpack.c.l.b16 %v1046
    %v2056 = vunpack.c.l.b16 %v1047
    %v2057 = vunpack.c.l.b16 %v1048
    %v2058 = vunpack.c.l.b16 %v1049
    %v2059 = vunpack.c.l.b16 %v1050
    %v2060 = vunpack.c.l.b16 %v1051
    %v2061 = vunpack.c.l.b16 %v1052
    %v2062 = vunpack.c.l.b16 %v1053
    %v2063 = vunpack.c.l.b16 %v1054
    %v2064 = vunpack.c.l.b16 %v1055
    %v2065 = vunpack.c.l.b16 %v1056
    %v2066 = vunpack.c.l.b16 %v1057
    %v2067 = vunpack.c.l.b16 %v1058
    %v2068 = vunpack.c.l.b16 %v1059
    %v2069 = vunpack.c.l.b16 %v1060
    %v2070 = vunpack.c.l.b16 %v1061
    %v2071 = vunpack.c.l.b16 %v1062
    %v2072 = vunpack.c.l.b16 %v1063
    %v2073 = vunpack.c.l.b16 %v1064
    %v2074 = vunpack.c.l.b16 %v1065
    %v2075 = vunpack.c.l.b16 %v1066
    %v2076 = vunpack.c.l.b16 %v1067
    %v2077 = vunpack.c.l.b16 %v1068
    %v2078 = vunpack.c.l.b16 %v1069
    %v2079 = vunpack.c.l.b16 %v1070
    %v2080 = vpack.c.b16 %v1953, %v1952
    %v2081 = vpack.c.b16 %v1955, %v1954
    %v2082 = vpack.c.b16 %v1957, %v1956
    %v2083 = vpack.c.b16 %v1959, %v1958
    %v2084 = vpack.c.b16 %v1961, %v1960
    %v2085 = vpack.c.b16 %v1963, %v1962
    %v2086 = vpack.c.b16 %v1965, %v1964
    %v2087 = vpack.c.b16 %v1967, %v1966
    %v2088 = vpack.c.b16 %v1969, %v1968
    %v2089 = vpack.c.b16 %v1971, %v1970
    %v2090 = vpack.c.b16 %v1973, %v1972
    %v2091 = vpack.c.b16 %v1975, %v1974
    %v2092 = vpack.c.b16 %v1977, %v1976
    %v2093 = vpack.c.b16 %v1979, %v1978
    %v2094 = vpack.c.b16 %v1981, %v1980
    %v2095 = vpack.c.b16 %v1983, %v1982
    %v2096 = vpack.c.b16 %v1985, %v1984
    %v2097 = vpack.c.b16 %v1987, %v1986
    %v2098 = vpack.c.b16 %v1989, %v1988
    %v2099 = vpack.c.b16 %v1991, %v1990
    %v2100 = vpack.c.b16 %v1993, %v1992
    %v2101 = vpack.c.b16 %v1995, %v1994
    %v2102 = vpack.c.b16 %v1997, %v1996
    %v2103 = vpack.c.b16 %v1999, %v1998
    %v2104 = vpack.c.b16 %v2001, %v2000
    %v2105 = vpack.c.b16 %v2003, %v2002
    %v2106 = vpack.c.b16 %v2005, %v2004
    %v2107 = vpack.c.b16 %v2007, %v2006
    %v2108 = vpack.c.b16 %v2009, %v2008
    %v2109 = vpack.c.b16 %v2011, %v2010
    %v2110 = vpack.c.b16 %v2013, %v2012
    %v2111 = vpack.c.b16 %v2015, %v2014
    %v2112 = vpack.c.b16 %v2017, %v2016
    %v2113 = vpack.c.b16 %v2019, %v2018
    %v2114 = vpack.c.b16 %v2021, %v2020
    %v2115 = vpack.c.b16 %v2023, %v2022
    %v2116 = vpack.c.b16 %v2025, %v2024
    %v2117 = vpack.c.b16 %v2027, %v2026
    %v2118 = vpack.c.b16 %v2029, %v2028
    %v2119 = vpack.c.b16 %v2031, %v2030
    %v2120 = vpack.c.b16 %v2033, %v2032
    %v2121 = vpack.c.b16 %v2035, %v2034
    %v2122 = vpack.c.b16 %v2037, %v2036
    %v2123 = vpack.c.b16 %v2039, %v2038
    %v2124 = vpack.c.b16 %v2041, %v2040
    %v2125 = vpack.c.b16 %v2043, %v2042
    %v2126 = vpack.c.b16 %v2045, %v2044
    %v2127 = vpack.c.b16 %v2047, %v2046
    %v2128 = vpack.c.b16 %v2049, %v2048
    %v2129 = vpack.c.b16 %v2051, %v2050
    %v2130 = vpack.c.b16 %v2053, %v2052
    %v2131 = vpack.c.b16 %v2055, %v2054
    %v2132 = vpack.c.b16 %v2057, %v2056
    %v2133 = vpack.c.b16 %v2059, %v2058
    %v2134 = vpack.c.b16 %v2061, %v2060
    %v2135 = vpack.c.b16 %v2063, %v2062
    %v2136 = vpack.c.b16 %v2065, %v2064
    %v2137 = vpack.c.b16 %v2067, %v2066
    %v2138 = vpack.c.b16 %v2069, %v2068
    %v2139 = vpack.c.b16 %v2071, %v2070
    %v2140 = vpack.c.b16 %v2073, %v2072
    %v2141 = vpack.c.b16 %v2075, %v2074
    %v2142 = vpack.c.b16 %v2077, %v2076
    %v2143 = vpack.c.b16 %v2079, %v2078
    %2208 = vmatpush.bf16.msra.mxu0 %v2087
    %2209 = vmatpush.bf16.msra.mxu0 %v2086
    %2210 = vmatpush.bf16.msra.mxu0 %v2085
    %2211 = vmatpush.bf16.msra.mxu0 %v2084
    %2212 = vmatpush.bf16.msra.mxu0 %v2083
    %2213 = vmatpush.bf16.msra.mxu0 %v2082
    %2214 = vmatpush.bf16.msra.mxu0 %v2081
    %2215 = vmatpush.bf16.msra.mxu0 %v2080
    %2216 = vmatmul.bf16.gmra.mxu0 %v1808
    %v2217 = vpop.f32.mrf.mxu0
    %v2218 = vadd.f32 0.0, %v2217
    %v2219 = vpop.f32.mrf.mxu0
    %v2220 = vadd.f32 0.0, %v2219
    %2221 = vmatmul.bf16.gmra.mxu0 %v1816
    %v2222 = vpop.f32.mrf.mxu0
    %v2223 = vadd.f32 0.0, %v2222
    %v2224 = vpop.f32.mrf.mxu0
    %v2225 = vadd.f32 0.0, %v2224
    %2226 = vdwg.mxu0
    %2227 = vmatpush.bf16.msra.mxu0 %v2095
    %2228 = vmatpush.bf16.msra.mxu0 %v2094
    %2229 = vmatpush.bf16.msra.mxu0 %v2093
    %2230 = vmatpush.bf16.msra.mxu0 %v2092
    %2231 = vmatpush.bf16.msra.mxu0 %v2091
    %2232 = vmatpush.bf16.msra.mxu0 %v2090
    %2233 = vmatpush.bf16.msra.mxu0 %v2089
    %2234 = vmatpush.bf16.msra.mxu0 %v2088
    %2235 = vmatmul.bf16.gmra.mxu0 %v1809
    %v2236 = vpop.f32.mrf.mxu0
    %v2237 = vadd.f32 %v2218, %v2236
    %v2238 = vpop.f32.mrf.mxu0
    %v2239 = vadd.f32 %v2220, %v2238
    %2240 = vmatmul.bf16.gmra.mxu0 %v1817
    %v2241 = vpop.f32.mrf.mxu0
    %v2242 = vadd.f32 %v2223, %v2241
    %v2243 = vpop.f32.mrf.mxu0
    %v2244 = vadd.f32 %v2225, %v2243
    %2245 = vdwg.mxu0
    %2246 = vmatpush.bf16.msra.mxu0 %v2103
    %2247 = vmatpush.bf16.msra.mxu0 %v2102
    %2248 = vmatpush.bf16.msra.mxu0 %v2101
    %2249 = vmatpush.bf16.msra.mxu0 %v2100
    %2250 = vmatpush.bf16.msra.mxu0 %v2099
    %2251 = vmatpush.bf16.msra.mxu0 %v2098
    %2252 = vmatpush.bf16.msra.mxu0 %v2097
    %2253 = vmatpush.bf16.msra.mxu0 %v2096
    %2254 = vmatmul.bf16.gmra.mxu0 %v1810
    %v2255 = vpop.f32.mrf.mxu0
    %v2256 = vadd.f32 %v2237, %v2255
    %v2257 = vpop.f32.mrf.mxu0
    %v2258 = vadd.f32 %v2239, %v2257
    %2259 = vmatmul.bf16.gmra.mxu0 %v1818
    %v2260 = vpop.f32.mrf.mxu0
    %v2261 = vadd.f32 %v2242, %v2260
    %v2262 = vpop.f32.mrf.mxu0
    %v2263 = vadd.f32 %v2244, %v2262
    %2264 = vdwg.mxu0
    %2265 = vmatpush.bf16.msra.mxu0 %v2111
    %2266 = vmatpush.bf16.msra.mxu0 %v2110
    %2267 = vmatpush.bf16.msra.mxu0 %v2109
    %2268 = vmatpush.bf16.msra.mxu0 %v2108
    %2269 = vmatpush.bf16.msra.mxu0 %v2107
    %2270 = vmatpush.bf16.msra.mxu0 %v2106
    %2271 = vmatpush.bf16.msra.mxu0 %v2105
    %2272 = vmatpush.bf16.msra.mxu0 %v2104
    %2273 = vmatmul.bf16.gmra.mxu0 %v1811
    %v2274 = vpop.f32.mrf.mxu0
    %v2275 = vadd.f32 %v2256, %v2274
    %v2276 = vpop.f32.mrf.mxu0
    %v2277 = vadd.f32 %v2258, %v2276
    %2278 = vmatmul.bf16.gmra.mxu0 %v1819
    %v2279 = vpop.f32.mrf.mxu0
    %v2280 = vadd.f32 %v2261, %v2279
    %v2281 = vpop.f32.mrf.mxu0
    %v2282 = vadd.f32 %v2263, %v2281
    %2283 = vdwg.mxu0
    %2284 = vmatpush.bf16.msra.mxu0 %v2119
    %2285 = vmatpush.bf16.msra.mxu0 %v2118
    %2286 = vmatpush.bf16.msra.mxu0 %v2117
    %2287 = vmatpush.bf16.msra.mxu0 %v2116
    %2288 = vmatpush.bf16.msra.mxu0 %v2115
    %2289 = vmatpush.bf16.msra.mxu0 %v2114
    %2290 = vmatpush.bf16.msra.mxu0 %v2113
    %2291 = vmatpush.bf16.msra.mxu0 %v2112
    %2292 = vmatmul.bf16.gmra.mxu0 %v1812
    %v2293 = vpop.f32.mrf.mxu0
    %v2294 = vadd.f32 %v2275, %v2293
    %v2295 = vpop.f32.mrf.mxu0
    %v2296 = vadd.f32 %v2277, %v2295
    %2297 = vmatmul.bf16.gmra.mxu0 %v1820
    %v2298 = vpop.f32.mrf.mxu0
    %v2299 = vadd.f32 %v2280, %v2298
    %v2300 = vpop.f32.mrf.mxu0
    %v2301 = vadd.f32 %v2282, %v2300
    %2302 = vdwg.mxu0
    %2303 = vmatpush.bf16.msra.mxu0 %v2127
    %2304 = vmatpush.bf16.msra.mxu0 %v2126
    %2305 = vmatpush.bf16.msra.mxu0 %v2125
    %2306 = vmatpush.bf16.msra.mxu0 %v2124
    %2307 = vmatpush.bf16.msra.mxu0 %v2123
    %2308 = vmatpush.bf16.msra.mxu0 %v2122
    %2309 = vmatpush.bf16.msra.mxu0 %v2121
    %2310 = vmatpush.bf16.msra.mxu0 %v2120
    %2311 = vmatmul.bf16.gmra.mxu0 %v1813
    %v2312 = vpop.f32.mrf.mxu0
    %v2313 = vadd.f32 %v2294, %v2312
    %v2314 = vpop.f32.mrf.mxu0
    %v2315 = vadd.f32 %v2296, %v2314
    %2316 = vmatmul.bf16.gmra.mxu0 %v1821
    %v2317 = vpop.f32.mrf.mxu0
    %v2318 = vadd.f32 %v2299, %v2317
    %v2319 = vpop.f32.mrf.mxu0
    %v2320 = vadd.f32 %v2301, %v2319
    %2321 = vdwg.mxu0
    %2322 = vmatpush.bf16.msra.mxu0 %v2135
    %2323 = vmatpush.bf16.msra.mxu0 %v2134
    %2324 = vmatpush.bf16.msra.mxu0 %v2133
    %2325 = vmatpush.bf16.msra.mxu0 %v2132
    %2326 = vmatpush.bf16.msra.mxu0 %v2131
    %2327 = vmatpush.bf16.msra.mxu0 %v2130
    %2328 = vmatpush.bf16.msra.mxu0 %v2129
    %2329 = vmatpush.bf16.msra.mxu0 %v2128
    %2330 = vmatmul.bf16.gmra.mxu0 %v1814
    %v2331 = vpop.f32.mrf.mxu0
    %v2332 = vadd.f32 %v2313, %v2331
    %v2333 = vpop.f32.mrf.mxu0
    %v2334 = vadd.f32 %v2315, %v2333
    %2335 = vmatmul.bf16.gmra.mxu0 %v1822
    %v2336 = vpop.f32.mrf.mxu0
    %v2337 = vadd.f32 %v2318, %v2336
    %v2338 = vpop.f32.mrf.mxu0
    %v2339 = vadd.f32 %v2320, %v2338
    %2340 = vdwg.mxu0
    %2341 = vmatpush.bf16.msra.mxu0 %v2143
    %2342 = vmatpush.bf16.msra.mxu0 %v2142
    %2343 = vmatpush.bf16.msra.mxu0 %v2141
    %2344 = vmatpush.bf16.msra.mxu0 %v2140
    %2345 = vmatpush.bf16.msra.mxu0 %v2139
    %2346 = vmatpush.bf16.msra.mxu0 %v2138
    %2347 = vmatpush.bf16.msra.mxu0 %v2137
    %2348 = vmatpush.bf16.msra.mxu0 %v2136
    %2349 = vmatmul.bf16.gmra.mxu0 %v1815
    %v2350 = vpop.f32.mrf.mxu0
    %v2351 = vadd.f32 %v2332, %v2350
    %v2352 = vpop.f32.mrf.mxu0
    %v2353 = vadd.f32 %v2334, %v2352
    %2354 = vmatmul.bf16.gmra.mxu0 %v1823
    %v2355 = vpop.f32.mrf.mxu0
    %v2356 = vadd.f32 %v2337, %v2355
    %v2357 = vpop.f32.mrf.mxu0
    %v2358 = vadd.f32 %v2339, %v2357
    %2359 = vdwg.mxu0
    %v2360 = vpack.c.bf16 %v2353, %v2351
    %v2361 = vpack.c.bf16 %v2358, %v2356
    %v2364 = vunpack.c.l.b16 %v877
    %v2365 = vunpack.c.l.b16 %v878
    %v2366 = vpack.c.b16 %v2365, %v2364
    %vm2367 = vcmask 261120
    %v2369 = vsel %vm2367, %v2366, 0
    %2371 = vmatpush.bf16.msra.mxu0 0
    %2372 = vmatpush.bf16.msra.mxu0 0
    %2373 = vmatpush.bf16.msra.mxu0 0
    %2374 = vmatpush.bf16.msra.mxu0 0
    %2375 = vmatpush.bf16.msra.mxu0 0
    %2376 = vmatpush.bf16.msra.mxu0 0
    %2377 = vmatpush.bf16.msra.mxu0 %v2361
    %2378 = vmatpush.bf16.msra.mxu0 %v2360
    %2379 = vmatmul.bf16.gmra.mxu0 %v2369
    %v2380 = vpop.f32.mrf.mxu0
    %v2381 = vadd.f32 0.0, %v2380
    %v2382 = vpop.f32.mrf.mxu0
    %v2383 = vadd.f32 0.0, %v2382
    %2384 = vdwg.mxu0
    %v2385 = vmul.f32 %v2381, %v1156
    %v2386 = vmul.f32 %v2383, %v1161
    %v2403 = vunpack.c.l.b16 %v1071
    %v2404 = vunpack.c.l.b16 %v1072
    %v2405 = vunpack.c.l.b16 %v1073
    %v2406 = vunpack.c.l.b16 %v1074
    %v2407 = vunpack.c.l.b16 %v1075
    %v2408 = vunpack.c.l.b16 %v1076
    %v2409 = vunpack.c.l.b16 %v1077
    %v2410 = vunpack.c.l.b16 %v1078
    %v2411 = vunpack.c.l.b16 %v1079
    %v2412 = vunpack.c.l.b16 %v1080
    %v2413 = vunpack.c.l.b16 %v1081
    %v2414 = vunpack.c.l.b16 %v1082
    %v2415 = vunpack.c.l.b16 %v1083
    %v2416 = vunpack.c.l.b16 %v1084
    %v2417 = vunpack.c.l.b16 %v1085
    %v2418 = vunpack.c.l.b16 %v1086
    %v2419 = vpack.c.b16 %v2404, %v2403
    %v2420 = vpack.c.b16 %v2406, %v2405
    %v2421 = vpack.c.b16 %v2408, %v2407
    %v2422 = vpack.c.b16 %v2410, %v2409
    %v2423 = vpack.c.b16 %v2412, %v2411
    %v2424 = vpack.c.b16 %v2414, %v2413
    %v2425 = vpack.c.b16 %v2416, %v2415
    %v2426 = vpack.c.b16 %v2418, %v2417
    %2435 = vmatpush.bf16.msra.mxu0 %v2426
    %2436 = vmatpush.bf16.msra.mxu0 %v2425
    %2437 = vmatpush.bf16.msra.mxu0 %v2424
    %2438 = vmatpush.bf16.msra.mxu0 %v2423
    %2439 = vmatpush.bf16.msra.mxu0 %v2422
    %2440 = vmatpush.bf16.msra.mxu0 %v2421
    %2441 = vmatpush.bf16.msra.mxu0 %v2420
    %2442 = vmatpush.bf16.msra.mxu0 %v2419
    %2443 = vmatmul.bf16.gmra.mxu0 %v1185
    %v2444 = vpop.f32.mrf.mxu0
    %v2445 = vadd.f32 0.0, %v2444
    %v2446 = vpop.f32.mrf.mxu0
    %v2447 = vadd.f32 0.0, %v2446
    %2448 = vdwg.mxu0
    %v2449 = vadd.f32 %v2385, %v2445
    %v2450 = vadd.f32 %v2386, %v2447
    %v2451 = vadd.f32 %v2449, %v1165
    %v2452 = vadd.f32 %v2450, %v1165
    %v2453 = vmax.f32 %v2451, 0.0
    %v2454 = vmax.f32 %v2452, 0.0
    %v2455 = vpack.c.bf16 %v2454, %v2453
    %v2488 = vunpack.c.l.b16 %v1087
    %v2489 = vunpack.c.h.b16 %v1087
    %v2490 = vunpack.c.l.b16 %v1088
    %v2491 = vunpack.c.l.b16 %v1089
    %v2492 = vunpack.c.h.b16 %v1089
    %v2493 = vunpack.c.l.b16 %v1090
    %v2494 = vunpack.c.l.b16 %v1091
    %v2495 = vunpack.c.h.b16 %v1091
    %v2496 = vunpack.c.l.b16 %v1092
    %v2497 = vunpack.c.l.b16 %v1093
    %v2498 = vunpack.c.h.b16 %v1093
    %v2499 = vunpack.c.l.b16 %v1094
    %v2500 = vunpack.c.l.b16 %v1095
    %v2501 = vunpack.c.h.b16 %v1095
    %v2502 = vunpack.c.l.b16 %v1096
    %v2503 = vunpack.c.l.b16 %v1097
    %v2504 = vunpack.c.h.b16 %v1097
    %v2505 = vunpack.c.l.b16 %v1098
    %v2506 = vunpack.c.l.b16 %v1099
    %v2507 = vunpack.c.h.b16 %v1099
    %v2508 = vunpack.c.l.b16 %v1100
    %v2509 = vunpack.c.l.b16 %v1101
    %v2510 = vunpack.c.h.b16 %v1101
    %v2511 = vunpack.c.l.b16 %v1102
    %v2512 = vunpack.c.l.b16 %v1103
    %v2513 = vunpack.c.h.b16 %v1103
    %v2514 = vunpack.c.l.b16 %v1104
    %v2515 = vunpack.c.l.b16 %v1105
    %v2516 = vunpack.c.h.b16 %v1105
    %v2517 = vunpack.c.l.b16 %v1106
    %v2518 = vunpack.c.l.b16 %v1107
    %v2519 = vunpack.c.h.b16 %v1107
    %v2520 = vunpack.c.l.b16 %v1108
    %v2521 = vunpack.c.l.b16 %v1109
    %v2522 = vunpack.c.h.b16 %v1109
    %v2523 = vunpack.c.l.b16 %v1110
    %v2524 = vunpack.c.l.b16 %v1111
    %v2525 = vunpack.c.h.b16 %v1111
    %v2526 = vunpack.c.l.b16 %v1112
    %v2527 = vunpack.c.l.b16 %v1113
    %v2528 = vunpack.c.h.b16 %v1113
    %v2529 = vunpack.c.l.b16 %v1114
    %v2530 = vunpack.c.l.b16 %v1115
    %v2531 = vunpack.c.h.b16 %v1115
    %v2532 = vunpack.c.l.b16 %v1116
    %v2533 = vunpack.c.l.b16 %v1117
    %v2534 = vunpack.c.h.b16 %v1117
    %v2535 = vunpack.c.l.b16 %v1118
    %v2536 = vpack.c.b16 %v2491, %v2488
    %v2537 = vpack.c.b16 %v2492, %v2489
    %v2538 = vpack.c.b16 %v2493, %v2490
    %v2539 = vpack.c.b16 %v2497, %v2494
    %v2540 = vpack.c.b16 %v2498, %v2495
    %v2541 = vpack.c.b16 %v2499, %v2496
    %v2542 = vpack.c.b16 %v2503, %v2500
    %v2543 = vpack.c.b16 %v2504, %v2501
    %v2544 = vpack.c.b16 %v2505, %v2502
    %v2545 = vpack.c.b16 %v2509, %v2506
    %v2546 = vpack.c.b16 %v2510, %v2507
    %v2547 = vpack.c.b16 %v2511, %v2508
    %v2548 = vpack.c.b16 %v2515, %v2512
    %v2549 = vpack.c.b16 %v2516, %v2513
    %v2550 = vpack.c.b16 %v2517, %v2514
    %v2551 = vpack.c.b16 %v2521, %v2518
    %v2552 = vpack.c.b16 %v2522, %v2519
    %v2553 = vpack.c.b16 %v2523, %v2520
    %v2554 = vpack.c.b16 %v2527, %v2524
    %v2555 = vpack.c.b16 %v2528, %v2525
    %v2556 = vpack.c.b16 %v2529, %v2526
    %v2557 = vpack.c.b16 %v2533, %v2530
    %v2558 = vpack.c.b16 %v2534, %v2531
    %v2559 = vpack.c.b16 %v2535, %v2532
    %2584 = vmatpush.bf16.msra.mxu0 %v2557
    %2585 = vmatpush.bf16.msra.mxu0 %v2554
    %2586 = vmatpush.bf16.msra.mxu0 %v2551
    %2587 = vmatpush.bf16.msra.mxu0 %v2548
    %2588 = vmatpush.bf16.msra.mxu0 %v2545
    %2589 = vmatpush.bf16.msra.mxu0 %v2542
    %2590 = vmatpush.bf16.msra.mxu0 %v2539
    %2591 = vmatpush.bf16.msra.mxu0 %v2536
    %2592 = vmatmul.bf16.gmra.mxu0 %v2455
    %v2593 = vpop.f32.mrf.mxu0
    %v2594 = vadd.f32 %v1169, %v2593
    %v2595 = vpop.f32.mrf.mxu0
    %v2596 = vadd.f32 %v1169, %v2595
    %2597 = vdwg.mxu0
    %2598 = vmatpush.bf16.msra.mxu0 %v2558
    %2599 = vmatpush.bf16.msra.mxu0 %v2555
    %2600 = vmatpush.bf16.msra.mxu0 %v2552
    %2601 = vmatpush.bf16.msra.mxu0 %v2549
    %2602 = vmatpush.bf16.msra.mxu0 %v2546
    %2603 = vmatpush.bf16.msra.mxu0 %v2543
    %2604 = vmatpush.bf16.msra.mxu0 %v2540
    %2605 = vmatpush.bf16.msra.mxu0 %v2537
    %2606 = vmatmul.bf16.gmra.mxu0 %v2455
    %v2607 = vpop.f32.mrf.mxu0
    %v2608 = vadd.f32 %v1170, %v2607
    %v2609 = vpop.f32.mrf.mxu0
    %v2610 = vadd.f32 %v1170, %v2609
    %2611 = vdwg.mxu0
    %2612 = vmatpush.bf16.msra.mxu0 %v2559
    %2613 = vmatpush.bf16.msra.mxu0 %v2556
    %2614 = vmatpush.bf16.msra.mxu0 %v2553
    %2615 = vmatpush.bf16.msra.mxu0 %v2550
    %2616 = vmatpush.bf16.msra.mxu0 %v2547
    %2617 = vmatpush.bf16.msra.mxu0 %v2544
    %2618 = vmatpush.bf16.msra.mxu0 %v2541
    %2619 = vmatpush.bf16.msra.mxu0 %v2538
    %2620 = vmatmul.bf16.gmra.mxu0 %v2455
    %v2621 = vpop.f32.mrf.mxu0
    %v2622 = vadd.f32 %v1171, %v2621
    %v2623 = vpop.f32.mrf.mxu0
    %v2624 = vadd.f32 %v1171, %v2623
    %2625 = vdwg.mxu0
    %v2658 = vunpack.c.l.b16 %v1119
    %v2659 = vunpack.c.h.b16 %v1119
    %v2660 = vunpack.c.l.b16 %v1120
    %v2661 = vunpack.c.l.b16 %v1121
    %v2662 = vunpack.c.h.b16 %v1121
    %v2663 = vunpack.c.l.b16 %v1122
    %v2664 = vunpack.c.l.b16 %v1123
    %v2665 = vunpack.c.h.b16 %v1123
    %v2666 = vunpack.c.l.b16 %v1124
    %v2667 = vunpack.c.l.b16 %v1125
    %v2668 = vunpack.c.h.b16 %v1125
    %v2669 = vunpack.c.l.b16 %v1126
    %v2670 = vunpack.c.l.b16 %v1127
    %v2671 = vunpack.c.h.b16 %v1127
    %v2672 = vunpack.c.l.b16 %v1128
    %v2673 = vunpack.c.l.b16 %v1129
    %v2674 = vunpack.c.h.b16 %v1129
    %v2675 = vunpack.c.l.b16 %v1130
    %v2676 = vunpack.c.l.b16 %v1131
    %v2677 = vunpack.c.h.b16 %v1131
    %v2678 = vunpack.c.l.b16 %v1132
    %v2679 = vunpack.c.l.b16 %v1133
    %v2680 = vunpack.c.h.b16 %v1133
    %v2681 = vunpack.c.l.b16 %v1134
    %v2682 = vunpack.c.l.b16 %v1135
    %v2683 = vunpack.c.h.b16 %v1135
    %v2684 = vunpack.c.l.b16 %v1136
    %v2685 = vunpack.c.l.b16 %v1137
    %v2686 = vunpack.c.h.b16 %v1137
    %v2687 = vunpack.c.l.b16 %v1138
    %v2688 = vunpack.c.l.b16 %v1139
    %v2689 = vunpack.c.h.b16 %v1139
    %v2690 = vunpack.c.l.b16 %v1140
    %v2691 = vunpack.c.l.b16 %v1141
    %v2692 = vunpack.c.h.b16 %v1141
    %v2693 = vunpack.c.l.b16 %v1142
    %v2694 = vunpack.c.l.b16 %v1143
    %v2695 = vunpack.c.h.b16 %v1143
    %v2696 = vunpack.c.l.b16 %v1144
    %v2697 = vunpack.c.l.b16 %v1145
    %v2698 = vunpack.c.h.b16 %v1145
    %v2699 = vunpack.c.l.b16 %v1146
    %v2700 = vunpack.c.l.b16 %v1147
    %v2701 = vunpack.c.h.b16 %v1147
    %v2702 = vunpack.c.l.b16 %v1148
    %v2703 = vunpack.c.l.b16 %v1149
    %v2704 = vunpack.c.h.b16 %v1149
    %v2705 = vunpack.c.l.b16 %v1150
    %v2706 = vpack.c.b16 %v2661, %v2658
    %v2707 = vpack.c.b16 %v2662, %v2659
    %v2708 = vpack.c.b16 %v2663, %v2660
    %v2709 = vpack.c.b16 %v2667, %v2664
    %v2710 = vpack.c.b16 %v2668, %v2665
    %v2711 = vpack.c.b16 %v2669, %v2666
    %v2712 = vpack.c.b16 %v2673, %v2670
    %v2713 = vpack.c.b16 %v2674, %v2671
    %v2714 = vpack.c.b16 %v2675, %v2672
    %v2715 = vpack.c.b16 %v2679, %v2676
    %v2716 = vpack.c.b16 %v2680, %v2677
    %v2717 = vpack.c.b16 %v2681, %v2678
    %v2718 = vpack.c.b16 %v2685, %v2682
    %v2719 = vpack.c.b16 %v2686, %v2683
    %v2720 = vpack.c.b16 %v2687, %v2684
    %v2721 = vpack.c.b16 %v2691, %v2688
    %v2722 = vpack.c.b16 %v2692, %v2689
    %v2723 = vpack.c.b16 %v2693, %v2690
    %v2724 = vpack.c.b16 %v2697, %v2694
    %v2725 = vpack.c.b16 %v2698, %v2695
    %v2726 = vpack.c.b16 %v2699, %v2696
    %v2727 = vpack.c.b16 %v2703, %v2700
    %v2728 = vpack.c.b16 %v2704, %v2701
    %v2729 = vpack.c.b16 %v2705, %v2702
    %2754 = vmatpush.bf16.msra.mxu0 %v2727
    %2755 = vmatpush.bf16.msra.mxu0 %v2724
    %2756 = vmatpush.bf16.msra.mxu0 %v2721
    %2757 = vmatpush.bf16.msra.mxu0 %v2718
    %2758 = vmatpush.bf16.msra.mxu0 %v2715
    %2759 = vmatpush.bf16.msra.mxu0 %v2712
    %2760 = vmatpush.bf16.msra.mxu0 %v2709
    %2761 = vmatpush.bf16.msra.mxu0 %v2706
    %2762 = vmatmul.bf16.gmra.mxu0 %v1185
    %v2763 = vpop.f32.mrf.mxu0
    %v2764 = vadd.f32 %v1177, %v2763
    %v2765 = vpop.f32.mrf.mxu0
    %v2766 = vadd.f32 %v1177, %v2765
    %2767 = vdwg.mxu0
    %2768 = vmatpush.bf16.msra.mxu0 %v2728
    %2769 = vmatpush.bf16.msra.mxu0 %v2725
    %2770 = vmatpush.bf16.msra.mxu0 %v2722
    %2771 = vmatpush.bf16.msra.mxu0 %v2719
    %2772 = vmatpush.bf16.msra.mxu0 %v2716
    %2773 = vmatpush.bf16.msra.mxu0 %v2713
    %2774 = vmatpush.bf16.msra.mxu0 %v2710
    %2775 = vmatpush.bf16.msra.mxu0 %v2707
    %2776 = vmatmul.bf16.gmra.mxu0 %v1185
    %v2777 = vpop.f32.mrf.mxu0
    %v2778 = vadd.f32 %v1178, %v2777
    %v2779 = vpop.f32.mrf.mxu0
    %v2780 = vadd.f32 %v1178, %v2779
    %2781 = vdwg.mxu0
    %2782 = vmatpush.bf16.msra.mxu0 %v2729
    %2783 = vmatpush.bf16.msra.mxu0 %v2726
    %2784 = vmatpush.bf16.msra.mxu0 %v2723
    %2785 = vmatpush.bf16.msra.mxu0 %v2720
    %2786 = vmatpush.bf16.msra.mxu0 %v2717
    %2787 = vmatpush.bf16.msra.mxu0 %v2714
    %2788 = vmatpush.bf16.msra.mxu0 %v2711
    %2789 = vmatpush.bf16.msra.mxu0 %v2708
    %2790 = vmatmul.bf16.gmra.mxu0 %v1185
    %v2791 = vpop.f32.mrf.mxu0
    %v2792 = vadd.f32 %v1179, %v2791
    %v2793 = vpop.f32.mrf.mxu0
    %v2794 = vadd.f32 %v1179, %v2793
    %2795 = vdwg.mxu0
    %v2796 = vadd.f32 %v2594, %v2764
    %v2797 = vadd.f32 %v2596, %v2766
    %v2798 = vxor.u32 %v2796, 2147483648
    %v2799 = vxor.u32 %v2797, 2147483648
    %v2800 = vmul.f32 %v2798, 1.442695
    %v2801 = vpow.pop %v2800
    %v2802 = vmul.f32 %v2799, 1.442695
    %v2803 = vpow.pop %v2802
    %v2804 = vadd.f32 %v2801, 1.0
    %v2805 = vadd.f32 %v2803, 1.0
    %v2806 = vrcp.pop %v2804
    %v2807 = vmul.f32 %v2804, %v2806
    %v2808 = vsub.f32 1.0, %v2807
    %v2809 = vmul.f32 %v2806, %v2808
    %v2810 = vadd.f32 %v2806, %v2809
    %vm2811 = vweird.f32 %v2804
    %vm2812 = vweird.f32 %v2806
    %vm2813 = vmor %vm2811, %vm2812
    %v2814 = vsel %vm2813, %v2806, %v2810
    %v2815 = vand.u32 2147483647, %v2804
    %vm2816 = vcmp.eq.f32.partialorder %v2815, 8.507059e+37
    %v2817 = vand.u32 %v2804, 2147483648
    %v2818 = vor.u32 1.1754944e-38, %v2817
    %v2819 = vsel %vm2816, %v2818, %v2814
    %v2820 = vmul.f32 1.0, %v2819
    %v2821 = vrcp.pop %v2805
    %v2822 = vmul.f32 %v2805, %v2821
    %v2823 = vsub.f32 1.0, %v2822
    %v2824 = vmul.f32 %v2821, %v2823
    %v2825 = vadd.f32 %v2821, %v2824
    %vm2826 = vweird.f32 %v2805
    %vm2827 = vweird.f32 %v2821
    %vm2828 = vmor %vm2826, %vm2827
    %v2829 = vsel %vm2828, %v2821, %v2825
    %v2830 = vand.u32 2147483647, %v2805
    %vm2831 = vcmp.eq.f32.partialorder %v2830, 8.507059e+37
    %v2832 = vand.u32 %v2805, 2147483648
    %v2833 = vor.u32 1.1754944e-38, %v2832
    %v2834 = vsel %vm2831, %v2833, %v2829
    %v2835 = vmul.f32 1.0, %v2834
    %v2836 = vadd.f32 %v2608, %v2778
    %v2837 = vadd.f32 %v2610, %v2780
    %v2838 = vxor.u32 %v2836, 2147483648
    %v2839 = vxor.u32 %v2837, 2147483648
    %v2840 = vmul.f32 %v2838, 1.442695
    %v2841 = vpow.pop %v2840
    %v2842 = vmul.f32 %v2839, 1.442695
    %v2843 = vpow.pop %v2842
    %v2844 = vadd.f32 %v2841, 1.0
    %v2845 = vadd.f32 %v2843, 1.0
    %v2846 = vrcp.pop %v2844
    %v2847 = vmul.f32 %v2844, %v2846
    %v2848 = vsub.f32 1.0, %v2847
    %v2849 = vmul.f32 %v2846, %v2848
    %v2850 = vadd.f32 %v2846, %v2849
    %vm2851 = vweird.f32 %v2844
    %vm2852 = vweird.f32 %v2846
    %vm2853 = vmor %vm2851, %vm2852
    %v2854 = vsel %vm2853, %v2846, %v2850
    %v2855 = vand.u32 2147483647, %v2844
    %vm2856 = vcmp.eq.f32.partialorder %v2855, 8.507059e+37
    %v2857 = vand.u32 %v2844, 2147483648
    %v2858 = vor.u32 1.1754944e-38, %v2857
    %v2859 = vsel %vm2856, %v2858, %v2854
    %v2860 = vmul.f32 1.0, %v2859
    %v2861 = vrcp.pop %v2845
    %v2862 = vmul.f32 %v2845, %v2861
    %v2863 = vsub.f32 1.0, %v2862
    %v2864 = vmul.f32 %v2861, %v2863
    %v2865 = vadd.f32 %v2861, %v2864
    %vm2866 = vweird.f32 %v2845
    %vm2867 = vweird.f32 %v2861
    %vm2868 = vmor %vm2866, %vm2867
    %v2869 = vsel %vm2868, %v2861, %v2865
    %v2870 = vand.u32 2147483647, %v2845
    %vm2871 = vcmp.eq.f32.partialorder %v2870, 8.507059e+37
    %v2872 = vand.u32 %v2845, 2147483648
    %v2873 = vor.u32 1.1754944e-38, %v2872
    %v2874 = vsel %vm2871, %v2873, %v2869
    %v2875 = vmul.f32 1.0, %v2874
    %v2876 = vmul.f32 %v2820, %v2792
    %v2877 = vmul.f32 %v2835, %v2794
    %v2878 = vadd.f32 %v2622, %v2876
    %v2879 = vadd.f32 %v2624, %v2877
    %v2880 = vtanh.pop %v2878
    %v2881 = vtanh.pop %v2879
    %v2882 = vsub.f32 1.0, %v2860
    %v2883 = vsub.f32 1.0, %v2875
    %v2884 = vmul.f32 %v2882, %v2880
    %v2885 = vmul.f32 %v2883, %v2881
    %v2886 = vmul.f32 %v2860, %v1183
    %v2887 = vmul.f32 %v2875, %v1184
    %v2888 = vadd.f32 %v2884, %v2886
    %v2889 = vadd.f32 %v2885, %v2887
    %v2890 = vpack.c.bf16 %v2889, %v2888
    %2891 = vmatpush.bf16.msra.mxu0 0
    %2892 = vmatpush.bf16.msra.mxu0 0
    %2893 = vmatpush.bf16.msra.mxu0 0
    %2894 = vmatpush.bf16.msra.mxu0 0
    %2895 = vmatpush.bf16.msra.mxu0 0
    %2896 = vmatpush.bf16.msra.mxu0 0
    %2897 = vmatpush.bf16.msra.mxu0 0
    %2898 = vmatpush.bf16.msra.mxu0 %v2890
    %2899 = vmatmul.bf16.gmra.mxu0 %v1198
    %v2900 = vpop.f32.mrf.mxu0
    %v2901 = vadd.f32 0.0, %v2900
    %v2902 = vpop.f32.mrf.mxu0
    %v2903 = vadd.f32 0.0, %v2902
    %2904 = vmatmul.bf16.gmra.mxu0 %v1201
    %v2905 = vpop.f32.mrf.mxu0
    %v2906 = vadd.f32 0.0, %v2905
    %v2907 = vpop.f32.mrf.mxu0
    %v2908 = vadd.f32 0.0, %v2907
    %2909 = vdwg.mxu0
    %v2910 = vpack.c.bf16 %v2903, %v2901
    %v2911 = vpack.c.bf16 %v2908, %v2906
    %2912 = vmatpush.bf16.msra.mxu0 %v1472
    %2913 = vmatpush.bf16.msra.mxu0 %v1464
    %2914 = vmatpush.bf16.msra.mxu0 %v1456
    %2915 = vmatpush.bf16.msra.mxu0 %v1448
    %2916 = vmatpush.bf16.msra.mxu0 %v1440
    %2917 = vmatpush.bf16.msra.mxu0 %v1432
    %2918 = vmatpush.bf16.msra.mxu0 %v1424
    %2919 = vmatpush.bf16.msra.mxu0 %v1416
    %2920 = vmatmul.bf16.gmra.mxu0 %v2910
    %v2921 = vpop.f32.mrf.mxu0
    %v2922 = vadd.f32 0.0, %v2921
    %v2923 = vpop.f32.mrf.mxu0
    %v2924 = vadd.f32 0.0, %v2923
    %2925 = vmatmul.bf16.gmra.mxu0 %v2911
    %v2926 = vpop.f32.mrf.mxu0
    %v2927 = vadd.f32 0.0, %v2926
    %v2928 = vpop.f32.mrf.mxu0
    %v2929 = vadd.f32 0.0, %v2928
    %2930 = vdwg.mxu0
    %2931 = vmatpush.bf16.msra.mxu0 %v1473
    %2932 = vmatpush.bf16.msra.mxu0 %v1465
    %2933 = vmatpush.bf16.msra.mxu0 %v1457
    %2934 = vmatpush.bf16.msra.mxu0 %v1449
    %2935 = vmatpush.bf16.msra.mxu0 %v1441
    %2936 = vmatpush.bf16.msra.mxu0 %v1433
    %2937 = vmatpush.bf16.msra.mxu0 %v1425
    %2938 = vmatpush.bf16.msra.mxu0 %v1417
    %2939 = vmatmul.bf16.gmra.mxu0 %v2910
    %v2940 = vpop.f32.mrf.mxu0
    %v2941 = vadd.f32 0.0, %v2940
    %v2942 = vpop.f32.mrf.mxu0
    %v2943 = vadd.f32 0.0, %v2942
    %2944 = vmatmul.bf16.gmra.mxu0 %v2911
    %v2945 = vpop.f32.mrf.mxu0
    %v2946 = vadd.f32 0.0, %v2945
    %v2947 = vpop.f32.mrf.mxu0
    %v2948 = vadd.f32 0.0, %v2947
    %2949 = vdwg.mxu0
    %2950 = vmatpush.bf16.msra.mxu0 %v1474
    %2951 = vmatpush.bf16.msra.mxu0 %v1466
    %2952 = vmatpush.bf16.msra.mxu0 %v1458
    %2953 = vmatpush.bf16.msra.mxu0 %v1450
    %2954 = vmatpush.bf16.msra.mxu0 %v1442
    %2955 = vmatpush.bf16.msra.mxu0 %v1434
    %2956 = vmatpush.bf16.msra.mxu0 %v1426
    %2957 = vmatpush.bf16.msra.mxu0 %v1418
    %2958 = vmatmul.bf16.gmra.mxu0 %v2910
    %v2959 = vpop.f32.mrf.mxu0
    %v2960 = vadd.f32 0.0, %v2959
    %v2961 = vpop.f32.mrf.mxu0
    %v2962 = vadd.f32 0.0, %v2961
    %2963 = vmatmul.bf16.gmra.mxu0 %v2911
    %v2964 = vpop.f32.mrf.mxu0
    %v2965 = vadd.f32 0.0, %v2964
    %v2966 = vpop.f32.mrf.mxu0
    %v2967 = vadd.f32 0.0, %v2966
    %2968 = vdwg.mxu0
    %2969 = vmatpush.bf16.msra.mxu0 %v1475
    %2970 = vmatpush.bf16.msra.mxu0 %v1467
    %2971 = vmatpush.bf16.msra.mxu0 %v1459
    %2972 = vmatpush.bf16.msra.mxu0 %v1451
    %2973 = vmatpush.bf16.msra.mxu0 %v1443
    %2974 = vmatpush.bf16.msra.mxu0 %v1435
    %2975 = vmatpush.bf16.msra.mxu0 %v1427
    %2976 = vmatpush.bf16.msra.mxu0 %v1419
    %2977 = vmatmul.bf16.gmra.mxu0 %v2910
    %v2978 = vpop.f32.mrf.mxu0
    %v2979 = vadd.f32 0.0, %v2978
    %v2980 = vpop.f32.mrf.mxu0
    %v2981 = vadd.f32 0.0, %v2980
    %2982 = vmatmul.bf16.gmra.mxu0 %v2911
    %v2983 = vpop.f32.mrf.mxu0
    %v2984 = vadd.f32 0.0, %v2983
    %v2985 = vpop.f32.mrf.mxu0
    %v2986 = vadd.f32 0.0, %v2985
    %2987 = vdwg.mxu0
    %2988 = vmatpush.bf16.msra.mxu0 %v1476
    %2989 = vmatpush.bf16.msra.mxu0 %v1468
    %2990 = vmatpush.bf16.msra.mxu0 %v1460
    %2991 = vmatpush.bf16.msra.mxu0 %v1452
    %2992 = vmatpush.bf16.msra.mxu0 %v1444
    %2993 = vmatpush.bf16.msra.mxu0 %v1436
    %2994 = vmatpush.bf16.msra.mxu0 %v1428
    %2995 = vmatpush.bf16.msra.mxu0 %v1420
    %2996 = vmatmul.bf16.gmra.mxu0 %v2910
    %v2997 = vpop.f32.mrf.mxu0
    %v2998 = vadd.f32 0.0, %v2997
    %v2999 = vpop.f32.mrf.mxu0
    %v3000 = vadd.f32 0.0, %v2999
    %3001 = vmatmul.bf16.gmra.mxu0 %v2911
    %v3002 = vpop.f32.mrf.mxu0
    %v3003 = vadd.f32 0.0, %v3002
    %v3004 = vpop.f32.mrf.mxu0
    %v3005 = vadd.f32 0.0, %v3004
    %3006 = vdwg.mxu0
    %3007 = vmatpush.bf16.msra.mxu0 %v1477
    %3008 = vmatpush.bf16.msra.mxu0 %v1469
    %3009 = vmatpush.bf16.msra.mxu0 %v1461
    %3010 = vmatpush.bf16.msra.mxu0 %v1453
    %3011 = vmatpush.bf16.msra.mxu0 %v1445
    %3012 = vmatpush.bf16.msra.mxu0 %v1437
    %3013 = vmatpush.bf16.msra.mxu0 %v1429
    %3014 = vmatpush.bf16.msra.mxu0 %v1421
    %3015 = vmatmul.bf16.gmra.mxu0 %v2910
    %v3016 = vpop.f32.mrf.mxu0
    %v3017 = vadd.f32 0.0, %v3016
    %v3018 = vpop.f32.mrf.mxu0
    %v3019 = vadd.f32 0.0, %v3018
    %3020 = vmatmul.bf16.gmra.mxu0 %v2911
    %v3021 = vpop.f32.mrf.mxu0
    %v3022 = vadd.f32 0.0, %v3021
    %v3023 = vpop.f32.mrf.mxu0
    %v3024 = vadd.f32 0.0, %v3023
    %3025 = vdwg.mxu0
    %3026 = vmatpush.bf16.msra.mxu0 %v1478
    %3027 = vmatpush.bf16.msra.mxu0 %v1470
    %3028 = vmatpush.bf16.msra.mxu0 %v1462
    %3029 = vmatpush.bf16.msra.mxu0 %v1454
    %3030 = vmatpush.bf16.msra.mxu0 %v1446
    %3031 = vmatpush.bf16.msra.mxu0 %v1438
    %3032 = vmatpush.bf16.msra.mxu0 %v1430
    %3033 = vmatpush.bf16.msra.mxu0 %v1422
    %3034 = vmatmul.bf16.gmra.mxu0 %v2910
    %v3035 = vpop.f32.mrf.mxu0
    %v3036 = vadd.f32 0.0, %v3035
    %v3037 = vpop.f32.mrf.mxu0
    %v3038 = vadd.f32 0.0, %v3037
    %3039 = vmatmul.bf16.gmra.mxu0 %v2911
    %v3040 = vpop.f32.mrf.mxu0
    %v3041 = vadd.f32 0.0, %v3040
    %v3042 = vpop.f32.mrf.mxu0
    %v3043 = vadd.f32 0.0, %v3042
    %3044 = vdwg.mxu0
    %3045 = vmatpush.bf16.msra.mxu0 %v1479
    %3046 = vmatpush.bf16.msra.mxu0 %v1471
    %3047 = vmatpush.bf16.msra.mxu0 %v1463
    %3048 = vmatpush.bf16.msra.mxu0 %v1455
    %3049 = vmatpush.bf16.msra.mxu0 %v1447
    %3050 = vmatpush.bf16.msra.mxu0 %v1439
    %3051 = vmatpush.bf16.msra.mxu0 %v1431
    %3052 = vmatpush.bf16.msra.mxu0 %v1423
    %3053 = vmatmul.bf16.gmra.mxu0 %v2910
    %v3054 = vpop.f32.mrf.mxu0
    %v3055 = vadd.f32 0.0, %v3054
    %v3056 = vpop.f32.mrf.mxu0
    %v3057 = vadd.f32 0.0, %v3056
    %3058 = vmatmul.bf16.gmra.mxu0 %v2911
    %v3059 = vpop.f32.mrf.mxu0
    %v3060 = vadd.f32 0.0, %v3059
    %v3061 = vpop.f32.mrf.mxu0
    %v3062 = vadd.f32 0.0, %v3061
    %3063 = vdwg.mxu0
    %v3064 = vpack.c.bf16 %v2941, %v2922
    %v3065 = vpack.c.bf16 %v2979, %v2960
    %v3066 = vpack.c.bf16 %v3017, %v2998
    %v3067 = vpack.c.bf16 %v3055, %v3036
    %v3068 = vpack.c.bf16 %v2943, %v2924
    %v3069 = vpack.c.bf16 %v2981, %v2962
    %v3070 = vpack.c.bf16 %v3019, %v3000
    %v3071 = vpack.c.bf16 %v3057, %v3038
    %v3072 = vpack.c.bf16 %v2946, %v2927
    %v3073 = vpack.c.bf16 %v2984, %v2965
    %v3074 = vpack.c.bf16 %v3022, %v3003
    %v3075 = vpack.c.bf16 %v3060, %v3041
    %v3076 = vpack.c.bf16 %v2948, %v2929
    %v3077 = vpack.c.bf16 %v2986, %v2967
    %v3078 = vpack.c.bf16 %v3024, %v3005
    %v3079 = vpack.c.bf16 %v3062, %v3043
    %v3080 = vunpack.c.l.bf16 %v3064
    %v3081 = vunpack.c.h.bf16 %v3064
    %v3082 = vunpack.c.l.bf16 %v3065
    %v3083 = vunpack.c.h.bf16 %v3065
    %v3084 = vunpack.c.l.bf16 %v3066
    %v3085 = vunpack.c.h.bf16 %v3066
    %v3086 = vunpack.c.l.bf16 %v3067
    %v3087 = vunpack.c.h.bf16 %v3067
    %v3088 = vunpack.c.l.bf16 %v3068
    %v3089 = vunpack.c.h.bf16 %v3068
    %v3090 = vunpack.c.l.bf16 %v3069
    %v3091 = vunpack.c.h.bf16 %v3069
    %v3092 = vunpack.c.l.bf16 %v3070
    %v3093 = vunpack.c.h.bf16 %v3070
    %v3094 = vunpack.c.l.bf16 %v3071
    %v3095 = vunpack.c.h.bf16 %v3071
    %v3096 = vunpack.c.l.bf16 %v3072
    %v3097 = vunpack.c.h.bf16 %v3072
    %v3098 = vunpack.c.l.bf16 %v3073
    %v3099 = vunpack.c.h.bf16 %v3073
    %v3100 = vunpack.c.l.bf16 %v3074
    %v3101 = vunpack.c.h.bf16 %v3074
    %v3102 = vunpack.c.l.bf16 %v3075
    %v3103 = vunpack.c.h.bf16 %v3075
    %v3104 = vunpack.c.l.bf16 %v3076
    %v3105 = vunpack.c.h.bf16 %v3076
    %v3106 = vunpack.c.l.bf16 %v3077
    %v3107 = vunpack.c.h.bf16 %v3077
    %v3108 = vunpack.c.l.bf16 %v3078
    %v3109 = vunpack.c.h.bf16 %v3078
    %v3110 = vunpack.c.l.bf16 %v3079
    %v3111 = vunpack.c.h.bf16 %v3079
    %v3112 = vmul.f32 %v3080, %v1744
    %v3113 = vmul.f32 %v3081, %v1745
    %v3114 = vmul.f32 %v3082, %v1746
    %v3115 = vmul.f32 %v3083, %v1747
    %v3116 = vmul.f32 %v3084, %v1748
    %v3117 = vmul.f32 %v3085, %v1749
    %v3118 = vmul.f32 %v3086, %v1750
    %v3119 = vmul.f32 %v3087, %v1751
    %v3120 = vmul.f32 %v3088, %v1752
    %v3121 = vmul.f32 %v3089, %v1753
    %v3122 = vmul.f32 %v3090, %v1754
    %v3123 = vmul.f32 %v3091, %v1755
    %v3124 = vmul.f32 %v3092, %v1756
    %v3125 = vmul.f32 %v3093, %v1757
    %v3126 = vmul.f32 %v3094, %v1758
    %v3127 = vmul.f32 %v3095, %v1759
    %v3128 = vmul.f32 %v3096, %v1760
    %v3129 = vmul.f32 %v3097, %v1761
    %v3130 = vmul.f32 %v3098, %v1762
    %v3131 = vmul.f32 %v3099, %v1763
    %v3132 = vmul.f32 %v3100, %v1764
    %v3133 = vmul.f32 %v3101, %v1765
    %v3134 = vmul.f32 %v3102, %v1766
    %v3135 = vmul.f32 %v3103, %v1767
    %v3136 = vmul.f32 %v3104, %v1768
    %v3137 = vmul.f32 %v3105, %v1769
    %v3138 = vmul.f32 %v3106, %v1770
    %v3139 = vmul.f32 %v3107, %v1771
    %v3140 = vmul.f32 %v3108, %v1772
    %v3141 = vmul.f32 %v3109, %v1773
    %v3142 = vmul.f32 %v3110, %v1774
    %v3143 = vmul.f32 %v3111, %v1775
    %v3144 = vpack.c.bf16 %v3120, %v3112
    %v3145 = vpack.c.bf16 %v3121, %v3113
    %v3146 = vpack.c.bf16 %v3122, %v3114
    %v3147 = vpack.c.bf16 %v3123, %v3115
    %v3148 = vpack.c.bf16 %v3124, %v3116
    %v3149 = vpack.c.bf16 %v3125, %v3117
    %v3150 = vpack.c.bf16 %v3126, %v3118
    %v3151 = vpack.c.bf16 %v3127, %v3119
    %v3152 = vpack.c.bf16 %v3136, %v3128
    %v3153 = vpack.c.bf16 %v3137, %v3129
    %v3154 = vpack.c.bf16 %v3138, %v3130
    %v3155 = vpack.c.bf16 %v3139, %v3131
    %v3156 = vpack.c.bf16 %v3140, %v3132
    %v3157 = vpack.c.bf16 %v3141, %v3133
    %v3158 = vpack.c.bf16 %v3142, %v3134
    %v3159 = vpack.c.bf16 %v3143, %v3135
    %3160 = vmatpush.bf16.msra.mxu0 %v2087
    %3161 = vmatpush.bf16.msra.mxu0 %v2086
    %3162 = vmatpush.bf16.msra.mxu0 %v2085
    %3163 = vmatpush.bf16.msra.mxu0 %v2084
    %3164 = vmatpush.bf16.msra.mxu0 %v2083
    %3165 = vmatpush.bf16.msra.mxu0 %v2082
    %3166 = vmatpush.bf16.msra.mxu0 %v2081
    %3167 = vmatpush.bf16.msra.mxu0 %v2080
    %3168 = vmatmul.bf16.gmra.mxu0 %v3144
    %v3169 = vpop.f32.mrf.mxu0
    %v3170 = vadd.f32 0.0, %v3169
    %v3171 = vpop.f32.mrf.mxu0
    %v3172 = vadd.f32 0.0, %v3171
    %3173 = vmatmul.bf16.gmra.mxu0 %v3152
    %v3174 = vpop.f32.mrf.mxu0
    %v3175 = vadd.f32 0.0, %v3174
    %v3176 = vpop.f32.mrf.mxu0
    %v3177 = vadd.f32 0.0, %v3176
    %3178 = vdwg.mxu0
    %3179 = vmatpush.bf16.msra.mxu0 %v2095
    %3180 = vmatpush.bf16.msra.mxu0 %v2094
    %3181 = vmatpush.bf16.msra.mxu0 %v2093
    %3182 = vmatpush.bf16.msra.mxu0 %v2092
    %3183 = vmatpush.bf16.msra.mxu0 %v2091
    %3184 = vmatpush.bf16.msra.mxu0 %v2090
    %3185 = vmatpush.bf16.msra.mxu0 %v2089
    %3186 = vmatpush.bf16.msra.mxu0 %v2088
    %3187 = vmatmul.bf16.gmra.mxu0 %v3145
    %v3188 = vpop.f32.mrf.mxu0
    %v3189 = vadd.f32 %v3170, %v3188
    %v3190 = vpop.f32.mrf.mxu0
    %v3191 = vadd.f32 %v3172, %v3190
    %3192 = vmatmul.bf16.gmra.mxu0 %v3153
    %v3193 = vpop.f32.mrf.mxu0
    %v3194 = vadd.f32 %v3175, %v3193
    %v3195 = vpop.f32.mrf.mxu0
    %v3196 = vadd.f32 %v3177, %v3195
    %3197 = vdwg.mxu0
    %3198 = vmatpush.bf16.msra.mxu0 %v2103
    %3199 = vmatpush.bf16.msra.mxu0 %v2102
    %3200 = vmatpush.bf16.msra.mxu0 %v2101
    %3201 = vmatpush.bf16.msra.mxu0 %v2100
    %3202 = vmatpush.bf16.msra.mxu0 %v2099
    %3203 = vmatpush.bf16.msra.mxu0 %v2098
    %3204 = vmatpush.bf16.msra.mxu0 %v2097
    %3205 = vmatpush.bf16.msra.mxu0 %v2096
    %3206 = vmatmul.bf16.gmra.mxu0 %v3146
    %v3207 = vpop.f32.mrf.mxu0
    %v3208 = vadd.f32 %v3189, %v3207
    %v3209 = vpop.f32.mrf.mxu0
    %v3210 = vadd.f32 %v3191, %v3209
    %3211 = vmatmul.bf16.gmra.mxu0 %v3154
    %v3212 = vpop.f32.mrf.mxu0
    %v3213 = vadd.f32 %v3194, %v3212
    %v3214 = vpop.f32.mrf.mxu0
    %v3215 = vadd.f32 %v3196, %v3214
    %3216 = vdwg.mxu0
    %3217 = vmatpush.bf16.msra.mxu0 %v2111
    %3218 = vmatpush.bf16.msra.mxu0 %v2110
    %3219 = vmatpush.bf16.msra.mxu0 %v2109
    %3220 = vmatpush.bf16.msra.mxu0 %v2108
    %3221 = vmatpush.bf16.msra.mxu0 %v2107
    %3222 = vmatpush.bf16.msra.mxu0 %v2106
    %3223 = vmatpush.bf16.msra.mxu0 %v2105
    %3224 = vmatpush.bf16.msra.mxu0 %v2104
    %3225 = vmatmul.bf16.gmra.mxu0 %v3147
    %v3226 = vpop.f32.mrf.mxu0
    %v3227 = vadd.f32 %v3208, %v3226
    %v3228 = vpop.f32.mrf.mxu0
    %v3229 = vadd.f32 %v3210, %v3228
    %3230 = vmatmul.bf16.gmra.mxu0 %v3155
    %v3231 = vpop.f32.mrf.mxu0
    %v3232 = vadd.f32 %v3213, %v3231
    %v3233 = vpop.f32.mrf.mxu0
    %v3234 = vadd.f32 %v3215, %v3233
    %3235 = vdwg.mxu0
    %3236 = vmatpush.bf16.msra.mxu0 %v2119
    %3237 = vmatpush.bf16.msra.mxu0 %v2118
    %3238 = vmatpush.bf16.msra.mxu0 %v2117
    %3239 = vmatpush.bf16.msra.mxu0 %v2116
    %3240 = vmatpush.bf16.msra.mxu0 %v2115
    %3241 = vmatpush.bf16.msra.mxu0 %v2114
    %3242 = vmatpush.bf16.msra.mxu0 %v2113
    %3243 = vmatpush.bf16.msra.mxu0 %v2112
    %3244 = vmatmul.bf16.gmra.mxu0 %v3148
    %v3245 = vpop.f32.mrf.mxu0
    %v3246 = vadd.f32 %v3227, %v3245
    %v3247 = vpop.f32.mrf.mxu0
    %v3248 = vadd.f32 %v3229, %v3247
    %3249 = vmatmul.bf16.gmra.mxu0 %v3156
    %v3250 = vpop.f32.mrf.mxu0
    %v3251 = vadd.f32 %v3232, %v3250
    %v3252 = vpop.f32.mrf.mxu0
    %v3253 = vadd.f32 %v3234, %v3252
    %3254 = vdwg.mxu0
    %3255 = vmatpush.bf16.msra.mxu0 %v2127
    %3256 = vmatpush.bf16.msra.mxu0 %v2126
    %3257 = vmatpush.bf16.msra.mxu0 %v2125
    %3258 = vmatpush.bf16.msra.mxu0 %v2124
    %3259 = vmatpush.bf16.msra.mxu0 %v2123
    %3260 = vmatpush.bf16.msra.mxu0 %v2122
    %3261 = vmatpush.bf16.msra.mxu0 %v2121
    %3262 = vmatpush.bf16.msra.mxu0 %v2120
    %3263 = vmatmul.bf16.gmra.mxu0 %v3149
    %v3264 = vpop.f32.mrf.mxu0
    %v3265 = vadd.f32 %v3246, %v3264
    %v3266 = vpop.f32.mrf.mxu0
    %v3267 = vadd.f32 %v3248, %v3266
    %3268 = vmatmul.bf16.gmra.mxu0 %v3157
    %v3269 = vpop.f32.mrf.mxu0
    %v3270 = vadd.f32 %v3251, %v3269
    %v3271 = vpop.f32.mrf.mxu0
    %v3272 = vadd.f32 %v3253, %v3271
    %3273 = vdwg.mxu0
    %3274 = vmatpush.bf16.msra.mxu0 %v2135
    %3275 = vmatpush.bf16.msra.mxu0 %v2134
    %3276 = vmatpush.bf16.msra.mxu0 %v2133
    %3277 = vmatpush.bf16.msra.mxu0 %v2132
    %3278 = vmatpush.bf16.msra.mxu0 %v2131
    %3279 = vmatpush.bf16.msra.mxu0 %v2130
    %3280 = vmatpush.bf16.msra.mxu0 %v2129
    %3281 = vmatpush.bf16.msra.mxu0 %v2128
    %3282 = vmatmul.bf16.gmra.mxu0 %v3150
    %v3283 = vpop.f32.mrf.mxu0
    %v3284 = vadd.f32 %v3265, %v3283
    %v3285 = vpop.f32.mrf.mxu0
    %v3286 = vadd.f32 %v3267, %v3285
    %3287 = vmatmul.bf16.gmra.mxu0 %v3158
    %v3288 = vpop.f32.mrf.mxu0
    %v3289 = vadd.f32 %v3270, %v3288
    %v3290 = vpop.f32.mrf.mxu0
    %v3291 = vadd.f32 %v3272, %v3290
    %3292 = vdwg.mxu0
    %3293 = vmatpush.bf16.msra.mxu0 %v2143
    %3294 = vmatpush.bf16.msra.mxu0 %v2142
    %3295 = vmatpush.bf16.msra.mxu0 %v2141
    %3296 = vmatpush.bf16.msra.mxu0 %v2140
    %3297 = vmatpush.bf16.msra.mxu0 %v2139
    %3298 = vmatpush.bf16.msra.mxu0 %v2138
    %3299 = vmatpush.bf16.msra.mxu0 %v2137
    %3300 = vmatpush.bf16.msra.mxu0 %v2136
    %3301 = vmatmul.bf16.gmra.mxu0 %v3151
    %v3302 = vpop.f32.mrf.mxu0
    %v3303 = vadd.f32 %v3284, %v3302
    %v3304 = vpop.f32.mrf.mxu0
    %v3305 = vadd.f32 %v3286, %v3304
    %3306 = vmatmul.bf16.gmra.mxu0 %v3159
    %v3307 = vpop.f32.mrf.mxu0
    %v3308 = vadd.f32 %v3289, %v3307
    %v3309 = vpop.f32.mrf.mxu0
    %v3310 = vadd.f32 %v3291, %v3309
    %3311 = vdwg.mxu0
    %v3312 = vpack.c.bf16 %v3305, %v3303
    %v3313 = vpack.c.bf16 %v3310, %v3308
    %3314 = vmatpush.bf16.msra.mxu0 0
    %3315 = vmatpush.bf16.msra.mxu0 0
    %3316 = vmatpush.bf16.msra.mxu0 0
    %3317 = vmatpush.bf16.msra.mxu0 0
    %3318 = vmatpush.bf16.msra.mxu0 0
    %3319 = vmatpush.bf16.msra.mxu0 0
    %3320 = vmatpush.bf16.msra.mxu0 %v3313
    %3321 = vmatpush.bf16.msra.mxu0 %v3312
    %3322 = vmatmul.bf16.gmra.mxu0 %v2369
    %v3323 = vpop.f32.mrf.mxu0
    %v3324 = vadd.f32 0.0, %v3323
    %v3325 = vpop.f32.mrf.mxu0
    %v3326 = vadd.f32 0.0, %v3325
    %3327 = vdwg.mxu0
    %v3328 = vmul.f32 %v3324, %v1156
    %v3329 = vmul.f32 %v3326, %v1161
    %3330 = vmatpush.bf16.msra.mxu0 %v2426
    %3331 = vmatpush.bf16.msra.mxu0 %v2425
    %3332 = vmatpush.bf16.msra.mxu0 %v2424
    %3333 = vmatpush.bf16.msra.mxu0 %v2423
    %3334 = vmatpush.bf16.msra.mxu0 %v2422
    %3335 = vmatpush.bf16.msra.mxu0 %v2421
    %3336 = vmatpush.bf16.msra.mxu0 %v2420
    %3337 = vmatpush.bf16.msra.mxu0 %v2419
    %3338 = vmatmul.bf16.gmra.mxu0 %v2890
    %v3339 = vpop.f32.mrf.mxu0
    %v3340 = vadd.f32 0.0, %v3339
    %v3341 = vpop.f32.mrf.mxu0
    %v3342 = vadd.f32 0.0, %v3341
    %3343 = vdwg.mxu0
    %v3344 = vadd.f32 %v3328, %v3340
    %v3345 = vadd.f32 %v3329, %v3342
    %v3346 = vadd.f32 %v3344, %v1165
    %v3347 = vadd.f32 %v3345, %v1165
    %v3348 = vmax.f32 %v3346, 0.0
    %v3349 = vmax.f32 %v3347, 0.0
    %v3350 = vpack.c.bf16 %v3349, %v3348
    %3351 = vmatpush.bf16.msra.mxu0 %v2557
    %3352 = vmatpush.bf16.msra.mxu0 %v2554
    %3353 = vmatpush.bf16.msra.mxu0 %v2551
    %3354 = vmatpush.bf16.msra.mxu0 %v2548
    %3355 = vmatpush.bf16.msra.mxu0 %v2545
    %3356 = vmatpush.bf16.msra.mxu0 %v2542
    %3357 = vmatpush.bf16.msra.mxu0 %v2539
    %3358 = vmatpush.bf16.msra.mxu0 %v2536
    %3359 = vmatmul.bf16.gmra.mxu0 %v3350
    %v3360 = vpop.f32.mrf.mxu0
    %v3361 = vadd.f32 %v1169, %v3360
    %v3362 = vpop.f32.mrf.mxu0
    %v3363 = vadd.f32 %v1169, %v3362
    %3364 = vdwg.mxu0
    %3365 = vmatpush.bf16.msra.mxu0 %v2558
    %3366 = vmatpush.bf16.msra.mxu0 %v2555
    %3367 = vmatpush.bf16.msra.mxu0 %v2552
    %3368 = vmatpush.bf16.msra.mxu0 %v2549
    %3369 = vmatpush.bf16.msra.mxu0 %v2546
    %3370 = vmatpush.bf16.msra.mxu0 %v2543
    %3371 = vmatpush.bf16.msra.mxu0 %v2540
    %3372 = vmatpush.bf16.msra.mxu0 %v2537
    %3373 = vmatmul.bf16.gmra.mxu0 %v3350
    %v3374 = vpop.f32.mrf.mxu0
    %v3375 = vadd.f32 %v1170, %v3374
    %v3376 = vpop.f32.mrf.mxu0
    %v3377 = vadd.f32 %v1170, %v3376
    %3378 = vdwg.mxu0
    %3379 = vmatpush.bf16.msra.mxu0 %v2559
    %3380 = vmatpush.bf16.msra.mxu0 %v2556
    %3381 = vmatpush.bf16.msra.mxu0 %v2553
    %3382 = vmatpush.bf16.msra.mxu0 %v2550
    %3383 = vmatpush.bf16.msra.mxu0 %v2547
    %3384 = vmatpush.bf16.msra.mxu0 %v2544
    %3385 = vmatpush.bf16.msra.mxu0 %v2541
    %3386 = vmatpush.bf16.msra.mxu0 %v2538
    %3387 = vmatmul.bf16.gmra.mxu0 %v3350
    %v3388 = vpop.f32.mrf.mxu0
    %v3389 = vadd.f32 %v1171, %v3388
    %v3390 = vpop.f32.mrf.mxu0
    %v3391 = vadd.f32 %v1171, %v3390
    %3392 = vdwg.mxu0
    %3393 = vmatpush.bf16.msra.mxu0 %v2727
    %3394 = vmatpush.bf16.msra.mxu0 %v2724
    %3395 = vmatpush.bf16.msra.mxu0 %v2721
    %3396 = vmatpush.bf16.msra.mxu0 %v2718
    %3397 = vmatpush.bf16.msra.mxu0 %v2715
    %3398 = vmatpush.bf16.msra.mxu0 %v2712
    %3399 = vmatpush.bf16.msra.mxu0 %v2709
    %3400 = vmatpush.bf16.msra.mxu0 %v2706
    %3401 = vmatmul.bf16.gmra.mxu0 %v2890
    %v3402 = vpop.f32.mrf.mxu0
    %v3403 = vadd.f32 %v1177, %v3402
    %v3404 = vpop.f32.mrf.mxu0
    %v3405 = vadd.f32 %v1177, %v3404
    %3406 = vdwg.mxu0
    %3407 = vmatpush.bf16.msra.mxu0 %v2728
    %3408 = vmatpush.bf16.msra.mxu0 %v2725
    %3409 = vmatpush.bf16.msra.mxu0 %v2722
    %3410 = vmatpush.bf16.msra.mxu0 %v2719
    %3411 = vmatpush.bf16.msra.mxu0 %v2716
    %3412 = vmatpush.bf16.msra.mxu0 %v2713
    %3413 = vmatpush.bf16.msra.mxu0 %v2710
    %3414 = vmatpush.bf16.msra.mxu0 %v2707
    %3415 = vmatmul.bf16.gmra.mxu0 %v2890
    %v3416 = vpop.f32.mrf.mxu0
    %v3417 = vadd.f32 %v1178, %v3416
    %v3418 = vpop.f32.mrf.mxu0
    %v3419 = vadd.f32 %v1178, %v3418
    %3420 = vdwg.mxu0
    %3421 = vmatpush.bf16.msra.mxu0 %v2729
    %3422 = vmatpush.bf16.msra.mxu0 %v2726
    %3423 = vmatpush.bf16.msra.mxu0 %v2723
    %3424 = vmatpush.bf16.msra.mxu0 %v2720
    %3425 = vmatpush.bf16.msra.mxu0 %v2717
    %3426 = vmatpush.bf16.msra.mxu0 %v2714
    %3427 = vmatpush.bf16.msra.mxu0 %v2711
    %3428 = vmatpush.bf16.msra.mxu0 %v2708
    %3429 = vmatmul.bf16.gmra.mxu0 %v2890
    %v3430 = vpop.f32.mrf.mxu0
    %v3431 = vadd.f32 %v1179, %v3430
    %v3432 = vpop.f32.mrf.mxu0
    %v3433 = vadd.f32 %v1179, %v3432
    %3434 = vdwg.mxu0
    %v3435 = vadd.f32 %v3361, %v3403
    %v3436 = vadd.f32 %v3363, %v3405
    %v3437 = vxor.u32 %v3435, 2147483648
    %v3438 = vxor.u32 %v3436, 2147483648
    %v3439 = vmul.f32 %v3437, 1.442695
    %v3440 = vpow.pop %v3439
    %v3441 = vmul.f32 %v3438, 1.442695
    %v3442 = vpow.pop %v3441
    %v3443 = vadd.f32 %v3440, 1.0
    %v3444 = vadd.f32 %v3442, 1.0
    %v3445 = vrcp.pop %v3443
    %v3446 = vmul.f32 %v3443, %v3445
    %v3447 = vsub.f32 1.0, %v3446
    %v3448 = vmul.f32 %v3445, %v3447
    %v3449 = vadd.f32 %v3445, %v3448
    %vm3450 = vweird.f32 %v3443
    %vm3451 = vweird.f32 %v3445
    %vm3452 = vmor %vm3450, %vm3451
    %v3453 = vsel %vm3452, %v3445, %v3449
    %v3454 = vand.u32 2147483647, %v3443
    %vm3455 = vcmp.eq.f32.partialorder %v3454, 8.507059e+37
    %v3456 = vand.u32 %v3443, 2147483648
    %v3457 = vor.u32 1.1754944e-38, %v3456
    %v3458 = vsel %vm3455, %v3457, %v3453
    %v3459 = vmul.f32 1.0, %v3458
    %v3460 = vrcp.pop %v3444
    %v3461 = vmul.f32 %v3444, %v3460
    %v3462 = vsub.f32 1.0, %v3461
    %v3463 = vmul.f32 %v3460, %v3462
    %v3464 = vadd.f32 %v3460, %v3463
    %vm3465 = vweird.f32 %v3444
    %vm3466 = vweird.f32 %v3460
    %vm3467 = vmor %vm3465, %vm3466
    %v3468 = vsel %vm3467, %v3460, %v3464
    %v3469 = vand.u32 2147483647, %v3444
    %vm3470 = vcmp.eq.f32.partialorder %v3469, 8.507059e+37
    %v3471 = vand.u32 %v3444, 2147483648
    %v3472 = vor.u32 1.1754944e-38, %v3471
    %v3473 = vsel %vm3470, %v3472, %v3468
    %v3474 = vmul.f32 1.0, %v3473
    %v3475 = vadd.f32 %v3375, %v3417
    %v3476 = vadd.f32 %v3377, %v3419
    %v3477 = vxor.u32 %v3475, 2147483648
    %v3478 = vxor.u32 %v3476, 2147483648
    %v3479 = vmul.f32 %v3477, 1.442695
    %v3480 = vpow.pop %v3479
    %v3481 = vmul.f32 %v3478, 1.442695
    %v3482 = vpow.pop %v3481
    %v3483 = vadd.f32 %v3480, 1.0
    %v3484 = vadd.f32 %v3482, 1.0
    %v3485 = vrcp.pop %v3483
    %v3486 = vmul.f32 %v3483, %v3485
    %v3487 = vsub.f32 1.0, %v3486
    %v3488 = vmul.f32 %v3485, %v3487
    %v3489 = vadd.f32 %v3485, %v3488
    %vm3490 = vweird.f32 %v3483
    %vm3491 = vweird.f32 %v3485
    %vm3492 = vmor %vm3490, %vm3491
    %v3493 = vsel %vm3492, %v3485, %v3489
    %v3494 = vand.u32 2147483647, %v3483
    %vm3495 = vcmp.eq.f32.partialorder %v3494, 8.507059e+37
    %v3496 = vand.u32 %v3483, 2147483648
    %v3497 = vor.u32 1.1754944e-38, %v3496
    %v3498 = vsel %vm3495, %v3497, %v3493
    %v3499 = vmul.f32 1.0, %v3498
    %v3500 = vrcp.pop %v3484
    %v3501 = vmul.f32 %v3484, %v3500
    %v3502 = vsub.f32 1.0, %v3501
    %v3503 = vmul.f32 %v3500, %v3502
    %v3504 = vadd.f32 %v3500, %v3503
    %vm3505 = vweird.f32 %v3484
    %vm3506 = vweird.f32 %v3500
    %vm3507 = vmor %vm3505, %vm3506
    %v3508 = vsel %vm3507, %v3500, %v3504
    %v3509 = vand.u32 2147483647, %v3484
    %vm3510 = vcmp.eq.f32.partialorder %v3509, 8.507059e+37
    %v3511 = vand.u32 %v3484, 2147483648
    %v3512 = vor.u32 1.1754944e-38, %v3511
    %v3513 = vsel %vm3510, %v3512, %v3508
    %v3514 = vmul.f32 1.0, %v3513
    %v3515 = vmul.f32 %v3459, %v3431
    %v3516 = vmul.f32 %v3474, %v3433
    %v3517 = vadd.f32 %v3389, %v3515
    %v3518 = vadd.f32 %v3391, %v3516
    %v3519 = vtanh.pop %v3517
    %v3520 = vtanh.pop %v3518
    %v3521 = vsub.f32 1.0, %v3499
    %v3522 = vsub.f32 1.0, %v3514
    %v3523 = vmul.f32 %v3521, %v3519
    %v3524 = vmul.f32 %v3522, %v3520
    %v3525 = vmul.f32 %v3499, %v2888
    %v3526 = vmul.f32 %v3514, %v2889
    %v3527 = vadd.f32 %v3523, %v3525
    %v3528 = vadd.f32 %v3524, %v3526
    %v3529 = vpack.c.bf16 %v3528, %v3527
    %3530 = vmatpush.bf16.msra.mxu0 0
    %3531 = vmatpush.bf16.msra.mxu0 0
    %3532 = vmatpush.bf16.msra.mxu0 0
    %3533 = vmatpush.bf16.msra.mxu0 0
    %3534 = vmatpush.bf16.msra.mxu0 0
    %3535 = vmatpush.bf16.msra.mxu0 0
    %3536 = vmatpush.bf16.msra.mxu0 0
    %3537 = vmatpush.bf16.msra.mxu0 %v3529
    %3538 = vmatmul.bf16.gmra.mxu0 %v1198
    %v3539 = vpop.f32.mrf.mxu0
    %v3540 = vadd.f32 0.0, %v3539
    %v3541 = vpop.f32.mrf.mxu0
    %v3542 = vadd.f32 0.0, %v3541
    %3543 = vmatmul.bf16.gmra.mxu0 %v1201
    %v3544 = vpop.f32.mrf.mxu0
    %v3545 = vadd.f32 0.0, %v3544
    %v3546 = vpop.f32.mrf.mxu0
    %v3547 = vadd.f32 0.0, %v3546
    %3548 = vdwg.mxu0
    %v3549 = vpack.c.bf16 %v3542, %v3540
    %v3550 = vpack.c.bf16 %v3547, %v3545
    %3551 = vmatpush.bf16.msra.mxu0 %v1472
    %3552 = vmatpush.bf16.msra.mxu0 %v1464
    %3553 = vmatpush.bf16.msra.mxu0 %v1456
    %3554 = vmatpush.bf16.msra.mxu0 %v1448
    %3555 = vmatpush.bf16.msra.mxu0 %v1440
    %3556 = vmatpush.bf16.msra.mxu0 %v1432
    %3557 = vmatpush.bf16.msra.mxu0 %v1424
    %3558 = vmatpush.bf16.msra.mxu0 %v1416
    %3559 = vmatmul.bf16.gmra.mxu0 %v3549
    %v3560 = vpop.f32.mrf.mxu0
    %v3561 = vadd.f32 0.0, %v3560
    %v3562 = vpop.f32.mrf.mxu0
    %v3563 = vadd.f32 0.0, %v3562
    %3564 = vmatmul.bf16.gmra.mxu0 %v3550
    %v3565 = vpop.f32.mrf.mxu0
    %v3566 = vadd.f32 0.0, %v3565
    %v3567 = vpop.f32.mrf.mxu0
    %v3568 = vadd.f32 0.0, %v3567
    %3569 = vdwg.mxu0
    %3570 = vmatpush.bf16.msra.mxu0 %v1473
    %3571 = vmatpush.bf16.msra.mxu0 %v1465
    %3572 = vmatpush.bf16.msra.mxu0 %v1457
    %3573 = vmatpush.bf16.msra.mxu0 %v1449
    %3574 = vmatpush.bf16.msra.mxu0 %v1441
    %3575 = vmatpush.bf16.msra.mxu0 %v1433
    %3576 = vmatpush.bf16.msra.mxu0 %v1425
    %3577 = vmatpush.bf16.msra.mxu0 %v1417
    %3578 = vmatmul.bf16.gmra.mxu0 %v3549
    %v3579 = vpop.f32.mrf.mxu0
    %v3580 = vadd.f32 0.0, %v3579
    %v3581 = vpop.f32.mrf.mxu0
    %v3582 = vadd.f32 0.0, %v3581
    %3583 = vmatmul.bf16.gmra.mxu0 %v3550
    %v3584 = vpop.f32.mrf.mxu0
    %v3585 = vadd.f32 0.0, %v3584
    %v3586 = vpop.f32.mrf.mxu0
    %v3587 = vadd.f32 0.0, %v3586
    %3588 = vdwg.mxu0
    %3589 = vmatpush.bf16.msra.mxu0 %v1474
    %3590 = vmatpush.bf16.msra.mxu0 %v1466
    %3591 = vmatpush.bf16.msra.mxu0 %v1458
    %3592 = vmatpush.bf16.msra.mxu0 %v1450
    %3593 = vmatpush.bf16.msra.mxu0 %v1442
    %3594 = vmatpush.bf16.msra.mxu0 %v1434
    %3595 = vmatpush.bf16.msra.mxu0 %v1426
    %3596 = vmatpush.bf16.msra.mxu0 %v1418
    %3597 = vmatmul.bf16.gmra.mxu0 %v3549
    %v3598 = vpop.f32.mrf.mxu0
    %v3599 = vadd.f32 0.0, %v3598
    %v3600 = vpop.f32.mrf.mxu0
    %v3601 = vadd.f32 0.0, %v3600
    %3602 = vmatmul.bf16.gmra.mxu0 %v3550
    %v3603 = vpop.f32.mrf.mxu0
    %v3604 = vadd.f32 0.0, %v3603
    %v3605 = vpop.f32.mrf.mxu0
    %v3606 = vadd.f32 0.0, %v3605
    %3607 = vdwg.mxu0
    %3608 = vmatpush.bf16.msra.mxu0 %v1475
    %3609 = vmatpush.bf16.msra.mxu0 %v1467
    %3610 = vmatpush.bf16.msra.mxu0 %v1459
    %3611 = vmatpush.bf16.msra.mxu0 %v1451
    %3612 = vmatpush.bf16.msra.mxu0 %v1443
    %3613 = vmatpush.bf16.msra.mxu0 %v1435
    %3614 = vmatpush.bf16.msra.mxu0 %v1427
    %3615 = vmatpush.bf16.msra.mxu0 %v1419
    %3616 = vmatmul.bf16.gmra.mxu0 %v3549
    %v3617 = vpop.f32.mrf.mxu0
    %v3618 = vadd.f32 0.0, %v3617
    %v3619 = vpop.f32.mrf.mxu0
    %v3620 = vadd.f32 0.0, %v3619
    %3621 = vmatmul.bf16.gmra.mxu0 %v3550
    %v3622 = vpop.f32.mrf.mxu0
    %v3623 = vadd.f32 0.0, %v3622
    %v3624 = vpop.f32.mrf.mxu0
    %v3625 = vadd.f32 0.0, %v3624
    %3626 = vdwg.mxu0
    %3627 = vmatpush.bf16.msra.mxu0 %v1476
    %3628 = vmatpush.bf16.msra.mxu0 %v1468
    %3629 = vmatpush.bf16.msra.mxu0 %v1460
    %3630 = vmatpush.bf16.msra.mxu0 %v1452
    %3631 = vmatpush.bf16.msra.mxu0 %v1444
    %3632 = vmatpush.bf16.msra.mxu0 %v1436
    %3633 = vmatpush.bf16.msra.mxu0 %v1428
    %3634 = vmatpush.bf16.msra.mxu0 %v1420
    %3635 = vmatmul.bf16.gmra.mxu0 %v3549
    %v3636 = vpop.f32.mrf.mxu0
    %v3637 = vadd.f32 0.0, %v3636
    %v3638 = vpop.f32.mrf.mxu0
    %v3639 = vadd.f32 0.0, %v3638
    %3640 = vmatmul.bf16.gmra.mxu0 %v3550
    %v3641 = vpop.f32.mrf.mxu0
    %v3642 = vadd.f32 0.0, %v3641
    %v3643 = vpop.f32.mrf.mxu0
    %v3644 = vadd.f32 0.0, %v3643
    %3645 = vdwg.mxu0
    %3646 = vmatpush.bf16.msra.mxu0 %v1477
    %3647 = vmatpush.bf16.msra.mxu0 %v1469
    %3648 = vmatpush.bf16.msra.mxu0 %v1461
    %3649 = vmatpush.bf16.msra.mxu0 %v1453
    %3650 = vmatpush.bf16.msra.mxu0 %v1445
    %3651 = vmatpush.bf16.msra.mxu0 %v1437
    %3652 = vmatpush.bf16.msra.mxu0 %v1429
    %3653 = vmatpush.bf16.msra.mxu0 %v1421
    %3654 = vmatmul.bf16.gmra.mxu0 %v3549
    %v3655 = vpop.f32.mrf.mxu0
    %v3656 = vadd.f32 0.0, %v3655
    %v3657 = vpop.f32.mrf.mxu0
    %v3658 = vadd.f32 0.0, %v3657
    %3659 = vmatmul.bf16.gmra.mxu0 %v3550
    %v3660 = vpop.f32.mrf.mxu0
    %v3661 = vadd.f32 0.0, %v3660
    %v3662 = vpop.f32.mrf.mxu0
    %v3663 = vadd.f32 0.0, %v3662
    %3664 = vdwg.mxu0
    %3665 = vmatpush.bf16.msra.mxu0 %v1478
    %3666 = vmatpush.bf16.msra.mxu0 %v1470
    %3667 = vmatpush.bf16.msra.mxu0 %v1462
    %3668 = vmatpush.bf16.msra.mxu0 %v1454
    %3669 = vmatpush.bf16.msra.mxu0 %v1446
    %3670 = vmatpush.bf16.msra.mxu0 %v1438
    %3671 = vmatpush.bf16.msra.mxu0 %v1430
    %3672 = vmatpush.bf16.msra.mxu0 %v1422
    %3673 = vmatmul.bf16.gmra.mxu0 %v3549
    %v3674 = vpop.f32.mrf.mxu0
    %v3675 = vadd.f32 0.0, %v3674
    %v3676 = vpop.f32.mrf.mxu0
    %v3677 = vadd.f32 0.0, %v3676
    %3678 = vmatmul.bf16.gmra.mxu0 %v3550
    %v3679 = vpop.f32.mrf.mxu0
    %v3680 = vadd.f32 0.0, %v3679
    %v3681 = vpop.f32.mrf.mxu0
    %v3682 = vadd.f32 0.0, %v3681
    %3683 = vdwg.mxu0
    %3684 = vmatpush.bf16.msra.mxu0 %v1479
    %3685 = vmatpush.bf16.msra.mxu0 %v1471
    %3686 = vmatpush.bf16.msra.mxu0 %v1463
    %3687 = vmatpush.bf16.msra.mxu0 %v1455
    %3688 = vmatpush.bf16.msra.mxu0 %v1447
    %3689 = vmatpush.bf16.msra.mxu0 %v1439
    %3690 = vmatpush.bf16.msra.mxu0 %v1431
    %3691 = vmatpush.bf16.msra.mxu0 %v1423
    %3692 = vmatmul.bf16.gmra.mxu0 %v3549
    %v3693 = vpop.f32.mrf.mxu0
    %v3694 = vadd.f32 0.0, %v3693
    %v3695 = vpop.f32.mrf.mxu0
    %v3696 = vadd.f32 0.0, %v3695
    %3697 = vmatmul.bf16.gmra.mxu0 %v3550
    %v3698 = vpop.f32.mrf.mxu0
    %v3699 = vadd.f32 0.0, %v3698
    %v3700 = vpop.f32.mrf.mxu0
    %v3701 = vadd.f32 0.0, %v3700
    %3702 = vdwg.mxu0
    %v3703 = vpack.c.bf16 %v3580, %v3561
    %v3704 = vpack.c.bf16 %v3618, %v3599
    %v3705 = vpack.c.bf16 %v3656, %v3637
    %v3706 = vpack.c.bf16 %v3694, %v3675
    %v3707 = vpack.c.bf16 %v3582, %v3563
    %v3708 = vpack.c.bf16 %v3620, %v3601
    %v3709 = vpack.c.bf16 %v3658, %v3639
    %v3710 = vpack.c.bf16 %v3696, %v3677
    %v3711 = vpack.c.bf16 %v3585, %v3566
    %v3712 = vpack.c.bf16 %v3623, %v3604
    %v3713 = vpack.c.bf16 %v3661, %v3642
    %v3714 = vpack.c.bf16 %v3699, %v3680
    %v3715 = vpack.c.bf16 %v3587, %v3568
    %v3716 = vpack.c.bf16 %v3625, %v3606
    %v3717 = vpack.c.bf16 %v3663, %v3644
    %v3718 = vpack.c.bf16 %v3701, %v3682
    %v3719 = vunpack.c.l.bf16 %v3703
    %v3720 = vunpack.c.h.bf16 %v3703
    %v3721 = vunpack.c.l.bf16 %v3704
    %v3722 = vunpack.c.h.bf16 %v3704
    %v3723 = vunpack.c.l.bf16 %v3705
    %v3724 = vunpack.c.h.bf16 %v3705
    %v3725 = vunpack.c.l.bf16 %v3706
    %v3726 = vunpack.c.h.bf16 %v3706
    %v3727 = vunpack.c.l.bf16 %v3707
    %v3728 = vunpack.c.h.bf16 %v3707
    %v3729 = vunpack.c.l.bf16 %v3708
    %v3730 = vunpack.c.h.bf16 %v3708
    %v3731 = vunpack.c.l.bf16 %v3709
    %v3732 = vunpack.c.h.bf16 %v3709
    %v3733 = vunpack.c.l.bf16 %v3710
    %v3734 = vunpack.c.h.bf16 %v3710
    %v3735 = vunpack.c.l.bf16 %v3711
    %v3736 = vunpack.c.h.bf16 %v3711
    %v3737 = vunpack.c.l.bf16 %v3712
    %v3738 = vunpack.c.h.bf16 %v3712
    %v3739 = vunpack.c.l.bf16 %v3713
    %v3740 = vunpack.c.h.bf16 %v3713
    %v3741 = vunpack.c.l.bf16 %v3714
    %v3742 = vunpack.c.h.bf16 %v3714
    %v3743 = vunpack.c.l.bf16 %v3715
    %v3744 = vunpack.c.h.bf16 %v3715
    %v3745 = vunpack.c.l.bf16 %v3716
    %v3746 = vunpack.c.h.bf16 %v3716
    %v3747 = vunpack.c.l.bf16 %v3717
    %v3748 = vunpack.c.h.bf16 %v3717
    %v3749 = vunpack.c.l.bf16 %v3718
    %v3750 = vunpack.c.h.bf16 %v3718
    %v3751 = vmul.f32 %v3719, %v1744
    %v3752 = vmul.f32 %v3720, %v1745
    %v3753 = vmul.f32 %v3721, %v1746
    %v3754 = vmul.f32 %v3722, %v1747
    %v3755 = vmul.f32 %v3723, %v1748
    %v3756 = vmul.f32 %v3724, %v1749
    %v3757 = vmul.f32 %v3725, %v1750
    %v3758 = vmul.f32 %v3726, %v1751
    %v3759 = vmul.f32 %v3727, %v1752
    %v3760 = vmul.f32 %v3728, %v1753
    %v3761 = vmul.f32 %v3729, %v1754
    %v3762 = vmul.f32 %v3730, %v1755
    %v3763 = vmul.f32 %v3731, %v1756
    %v3764 = vmul.f32 %v3732, %v1757
    %v3765 = vmul.f32 %v3733, %v1758
    %v3766 = vmul.f32 %v3734, %v1759
    %v3767 = vmul.f32 %v3735, %v1760
    %v3768 = vmul.f32 %v3736, %v1761
    %v3769 = vmul.f32 %v3737, %v1762
    %v3770 = vmul.f32 %v3738, %v1763
    %v3771 = vmul.f32 %v3739, %v1764
    %v3772 = vmul.f32 %v3740, %v1765
    %v3773 = vmul.f32 %v3741, %v1766
    %v3774 = vmul.f32 %v3742, %v1767
    %v3775 = vmul.f32 %v3743, %v1768
    %v3776 = vmul.f32 %v3744, %v1769
    %v3777 = vmul.f32 %v3745, %v1770
    %v3778 = vmul.f32 %v3746, %v1771
    %v3779 = vmul.f32 %v3747, %v1772
    %v3780 = vmul.f32 %v3748, %v1773
    %v3781 = vmul.f32 %v3749, %v1774
    %v3782 = vmul.f32 %v3750, %v1775
    %v3783 = vpack.c.bf16 %v3759, %v3751
    %v3784 = vpack.c.bf16 %v3760, %v3752
    %v3785 = vpack.c.bf16 %v3761, %v3753
    %v3786 = vpack.c.bf16 %v3762, %v3754
    %v3787 = vpack.c.bf16 %v3763, %v3755
    %v3788 = vpack.c.bf16 %v3764, %v3756
    %v3789 = vpack.c.bf16 %v3765, %v3757
    %v3790 = vpack.c.bf16 %v3766, %v3758
    %v3791 = vpack.c.bf16 %v3775, %v3767
    %v3792 = vpack.c.bf16 %v3776, %v3768
    %v3793 = vpack.c.bf16 %v3777, %v3769
    %v3794 = vpack.c.bf16 %v3778, %v3770
    %v3795 = vpack.c.bf16 %v3779, %v3771
    %v3796 = vpack.c.bf16 %v3780, %v3772
    %v3797 = vpack.c.bf16 %v3781, %v3773
    %v3798 = vpack.c.bf16 %v3782, %v3774
    %3799 = vmatpush.bf16.msra.mxu0 %v2087
    %3800 = vmatpush.bf16.msra.mxu0 %v2086
    %3801 = vmatpush.bf16.msra.mxu0 %v2085
    %3802 = vmatpush.bf16.msra.mxu0 %v2084
    %3803 = vmatpush.bf16.msra.mxu0 %v2083
    %3804 = vmatpush.bf16.msra.mxu0 %v2082
    %3805 = vmatpush.bf16.msra.mxu0 %v2081
    %3806 = vmatpush.bf16.msra.mxu0 %v2080
    %3807 = vmatmul.bf16.gmra.mxu0 %v3783
    %v3808 = vpop.f32.mrf.mxu0
    %v3809 = vadd.f32 0.0, %v3808
    %v3810 = vpop.f32.mrf.mxu0
    %v3811 = vadd.f32 0.0, %v3810
    %3812 = vmatmul.bf16.gmra.mxu0 %v3791
    %v3813 = vpop.f32.mrf.mxu0
    %v3814 = vadd.f32 0.0, %v3813
    %v3815 = vpop.f32.mrf.mxu0
    %v3816 = vadd.f32 0.0, %v3815
    %3817 = vdwg.mxu0
    %3818 = vmatpush.bf16.msra.mxu0 %v2095
    %3819 = vmatpush.bf16.msra.mxu0 %v2094
    %3820 = vmatpush.bf16.msra.mxu0 %v2093
    %3821 = vmatpush.bf16.msra.mxu0 %v2092
    %3822 = vmatpush.bf16.msra.mxu0 %v2091
    %3823 = vmatpush.bf16.msra.mxu0 %v2090
    %3824 = vmatpush.bf16.msra.mxu0 %v2089
    %3825 = vmatpush.bf16.msra.mxu0 %v2088
    %3826 = vmatmul.bf16.gmra.mxu0 %v3784
    %v3827 = vpop.f32.mrf.mxu0
    %v3828 = vadd.f32 %v3809, %v3827
    %v3829 = vpop.f32.mrf.mxu0
    %v3830 = vadd.f32 %v3811, %v3829
    %3831 = vmatmul.bf16.gmra.mxu0 %v3792
    %v3832 = vpop.f32.mrf.mxu0
    %v3833 = vadd.f32 %v3814, %v3832
    %v3834 = vpop.f32.mrf.mxu0
    %v3835 = vadd.f32 %v3816, %v3834
    %3836 = vdwg.mxu0
    %3837 = vmatpush.bf16.msra.mxu0 %v2103
    %3838 = vmatpush.bf16.msra.mxu0 %v2102
    %3839 = vmatpush.bf16.msra.mxu0 %v2101
    %3840 = vmatpush.bf16.msra.mxu0 %v2100
    %3841 = vmatpush.bf16.msra.mxu0 %v2099
    %3842 = vmatpush.bf16.msra.mxu0 %v2098
    %3843 = vmatpush.bf16.msra.mxu0 %v2097
    %3844 = vmatpush.bf16.msra.mxu0 %v2096
    %3845 = vmatmul.bf16.gmra.mxu0 %v3785
    %v3846 = vpop.f32.mrf.mxu0
    %v3847 = vadd.f32 %v3828, %v3846
    %v3848 = vpop.f32.mrf.mxu0
    %v3849 = vadd.f32 %v3830, %v3848
    %3850 = vmatmul.bf16.gmra.mxu0 %v3793
    %v3851 = vpop.f32.mrf.mxu0
    %v3852 = vadd.f32 %v3833, %v3851
    %v3853 = vpop.f32.mrf.mxu0
    %v3854 = vadd.f32 %v3835, %v3853
    %3855 = vdwg.mxu0
    %3856 = vmatpush.bf16.msra.mxu0 %v2111
    %3857 = vmatpush.bf16.msra.mxu0 %v2110
    %3858 = vmatpush.bf16.msra.mxu0 %v2109
    %3859 = vmatpush.bf16.msra.mxu0 %v2108
    %3860 = vmatpush.bf16.msra.mxu0 %v2107
    %3861 = vmatpush.bf16.msra.mxu0 %v2106
    %3862 = vmatpush.bf16.msra.mxu0 %v2105
    %3863 = vmatpush.bf16.msra.mxu0 %v2104
    %3864 = vmatmul.bf16.gmra.mxu0 %v3786
    %v3865 = vpop.f32.mrf.mxu0
    %v3866 = vadd.f32 %v3847, %v3865
    %v3867 = vpop.f32.mrf.mxu0
    %v3868 = vadd.f32 %v3849, %v3867
    %3869 = vmatmul.bf16.gmra.mxu0 %v3794
    %v3870 = vpop.f32.mrf.mxu0
    %v3871 = vadd.f32 %v3852, %v3870
    %v3872 = vpop.f32.mrf.mxu0
    %v3873 = vadd.f32 %v3854, %v3872
    %3874 = vdwg.mxu0
    %3875 = vmatpush.bf16.msra.mxu0 %v2119
    %3876 = vmatpush.bf16.msra.mxu0 %v2118
    %3877 = vmatpush.bf16.msra.mxu0 %v2117
    %3878 = vmatpush.bf16.msra.mxu0 %v2116
    %3879 = vmatpush.bf16.msra.mxu0 %v2115
    %3880 = vmatpush.bf16.msra.mxu0 %v2114
    %3881 = vmatpush.bf16.msra.mxu0 %v2113
    %3882 = vmatpush.bf16.msra.mxu0 %v2112
    %3883 = vmatmul.bf16.gmra.mxu0 %v3787
    %v3884 = vpop.f32.mrf.mxu0
    %v3885 = vadd.f32 %v3866, %v3884
    %v3886 = vpop.f32.mrf.mxu0
    %v3887 = vadd.f32 %v3868, %v3886
    %3888 = vmatmul.bf16.gmra.mxu0 %v3795
    %v3889 = vpop.f32.mrf.mxu0
    %v3890 = vadd.f32 %v3871, %v3889
    %v3891 = vpop.f32.mrf.mxu0
    %v3892 = vadd.f32 %v3873, %v3891
    %3893 = vdwg.mxu0
    %3894 = vmatpush.bf16.msra.mxu0 %v2127
    %3895 = vmatpush.bf16.msra.mxu0 %v2126
    %3896 = vmatpush.bf16.msra.mxu0 %v2125
    %3897 = vmatpush.bf16.msra.mxu0 %v2124
    %3898 = vmatpush.bf16.msra.mxu0 %v2123
    %3899 = vmatpush.bf16.msra.mxu0 %v2122
    %3900 = vmatpush.bf16.msra.mxu0 %v2121
    %3901 = vmatpush.bf16.msra.mxu0 %v2120
    %3902 = vmatmul.bf16.gmra.mxu0 %v3788
    %v3903 = vpop.f32.mrf.mxu0
    %v3904 = vadd.f32 %v3885, %v3903
    %v3905 = vpop.f32.mrf.mxu0
    %v3906 = vadd.f32 %v3887, %v3905
    %3907 = vmatmul.bf16.gmra.mxu0 %v3796
    %v3908 = vpop.f32.mrf.mxu0
    %v3909 = vadd.f32 %v3890, %v3908
    %v3910 = vpop.f32.mrf.mxu0
    %v3911 = vadd.f32 %v3892, %v3910
    %3912 = vdwg.mxu0
    %3913 = vmatpush.bf16.msra.mxu0 %v2135
    %3914 = vmatpush.bf16.msra.mxu0 %v2134
    %3915 = vmatpush.bf16.msra.mxu0 %v2133
    %3916 = vmatpush.bf16.msra.mxu0 %v2132
    %3917 = vmatpush.bf16.msra.mxu0 %v2131
    %3918 = vmatpush.bf16.msra.mxu0 %v2130
    %3919 = vmatpush.bf16.msra.mxu0 %v2129
    %3920 = vmatpush.bf16.msra.mxu0 %v2128
    %3921 = vmatmul.bf16.gmra.mxu0 %v3789
    %v3922 = vpop.f32.mrf.mxu0
    %v3923 = vadd.f32 %v3904, %v3922
    %v3924 = vpop.f32.mrf.mxu0
    %v3925 = vadd.f32 %v3906, %v3924
    %3926 = vmatmul.bf16.gmra.mxu0 %v3797
    %v3927 = vpop.f32.mrf.mxu0
    %v3928 = vadd.f32 %v3909, %v3927
    %v3929 = vpop.f32.mrf.mxu0
    %v3930 = vadd.f32 %v3911, %v3929
    %3931 = vdwg.mxu0
    %3932 = vmatpush.bf16.msra.mxu0 %v2143
    %3933 = vmatpush.bf16.msra.mxu0 %v2142
    %3934 = vmatpush.bf16.msra.mxu0 %v2141
    %3935 = vmatpush.bf16.msra.mxu0 %v2140
    %3936 = vmatpush.bf16.msra.mxu0 %v2139
    %3937 = vmatpush.bf16.msra.mxu0 %v2138
    %3938 = vmatpush.bf16.msra.mxu0 %v2137
    %3939 = vmatpush.bf16.msra.mxu0 %v2136
    %3940 = vmatmul.bf16.gmra.mxu0 %v3790
    %v3941 = vpop.f32.mrf.mxu0
    %v3942 = vadd.f32 %v3923, %v3941
    %v3943 = vpop.f32.mrf.mxu0
    %v3944 = vadd.f32 %v3925, %v3943
    %3945 = vmatmul.bf16.gmra.mxu0 %v3798
    %v3946 = vpop.f32.mrf.mxu0
    %v3947 = vadd.f32 %v3928, %v3946
    %v3948 = vpop.f32.mrf.mxu0
    %v3949 = vadd.f32 %v3930, %v3948
    %3950 = vdwg.mxu0
    %v3951 = vpack.c.bf16 %v3944, %v3942
    %v3952 = vpack.c.bf16 %v3949, %v3947
    %3953 = vmatpush.bf16.msra.mxu0 0
    %3954 = vmatpush.bf16.msra.mxu0 0
    %3955 = vmatpush.bf16.msra.mxu0 0
    %3956 = vmatpush.bf16.msra.mxu0 0
    %3957 = vmatpush.bf16.msra.mxu0 0
    %3958 = vmatpush.bf16.msra.mxu0 0
    %3959 = vmatpush.bf16.msra.mxu0 %v3952
    %3960 = vmatpush.bf16.msra.mxu0 %v3951
    %3961 = vmatmul.bf16.gmra.mxu0 %v2369
    %v3962 = vpop.f32.mrf.mxu0
    %v3963 = vadd.f32 0.0, %v3962
    %v3964 = vpop.f32.mrf.mxu0
    %v3965 = vadd.f32 0.0, %v3964
    %3966 = vdwg.mxu0
    %v3967 = vmul.f32 %v3963, %v1156
    %v3968 = vmul.f32 %v3965, %v1161
    %3969 = vmatpush.bf16.msra.mxu0 %v2426
    %3970 = vmatpush.bf16.msra.mxu0 %v2425
    %3971 = vmatpush.bf16.msra.mxu0 %v2424
    %3972 = vmatpush.bf16.msra.mxu0 %v2423
    %3973 = vmatpush.bf16.msra.mxu0 %v2422
    %3974 = vmatpush.bf16.msra.mxu0 %v2421
    %3975 = vmatpush.bf16.msra.mxu0 %v2420
    %3976 = vmatpush.bf16.msra.mxu0 %v2419
    %3977 = vmatmul.bf16.gmra.mxu0 %v3529
    %v3978 = vpop.f32.mrf.mxu0
    %v3979 = vadd.f32 0.0, %v3978
    %v3980 = vpop.f32.mrf.mxu0
    %v3981 = vadd.f32 0.0, %v3980
    %3982 = vdwg.mxu0
    %v3983 = vadd.f32 %v3967, %v3979
    %v3984 = vadd.f32 %v3968, %v3981
    %v3985 = vadd.f32 %v3983, %v1165
    %v3986 = vadd.f32 %v3984, %v1165
    %v3987 = vmax.f32 %v3985, 0.0
    %v3988 = vmax.f32 %v3986, 0.0
    %v3989 = vpack.c.bf16 %v3988, %v3987
    %3990 = vmatpush.bf16.msra.mxu0 %v2557
    %3991 = vmatpush.bf16.msra.mxu0 %v2554
    %3992 = vmatpush.bf16.msra.mxu0 %v2551
    %3993 = vmatpush.bf16.msra.mxu0 %v2548
    %3994 = vmatpush.bf16.msra.mxu0 %v2545
    %3995 = vmatpush.bf16.msra.mxu0 %v2542
    %3996 = vmatpush.bf16.msra.mxu0 %v2539
    %3997 = vmatpush.bf16.msra.mxu0 %v2536
    %3998 = vmatmul.bf16.gmra.mxu0 %v3989
    %v3999 = vpop.f32.mrf.mxu0
    %v4000 = vadd.f32 %v1169, %v3999
    %v4001 = vpop.f32.mrf.mxu0
    %v4002 = vadd.f32 %v1169, %v4001
    %4003 = vdwg.mxu0
    %4004 = vmatpush.bf16.msra.mxu0 %v2558
    %4005 = vmatpush.bf16.msra.mxu0 %v2555
    %4006 = vmatpush.bf16.msra.mxu0 %v2552
    %4007 = vmatpush.bf16.msra.mxu0 %v2549
    %4008 = vmatpush.bf16.msra.mxu0 %v2546
    %4009 = vmatpush.bf16.msra.mxu0 %v2543
    %4010 = vmatpush.bf16.msra.mxu0 %v2540
    %4011 = vmatpush.bf16.msra.mxu0 %v2537
    %4012 = vmatmul.bf16.gmra.mxu0 %v3989
    %v4013 = vpop.f32.mrf.mxu0
    %v4014 = vadd.f32 %v1170, %v4013
    %v4015 = vpop.f32.mrf.mxu0
    %v4016 = vadd.f32 %v1170, %v4015
    %4017 = vdwg.mxu0
    %4018 = vmatpush.bf16.msra.mxu0 %v2559
    %4019 = vmatpush.bf16.msra.mxu0 %v2556
    %4020 = vmatpush.bf16.msra.mxu0 %v2553
    %4021 = vmatpush.bf16.msra.mxu0 %v2550
    %4022 = vmatpush.bf16.msra.mxu0 %v2547
    %4023 = vmatpush.bf16.msra.mxu0 %v2544
    %4024 = vmatpush.bf16.msra.mxu0 %v2541
    %4025 = vmatpush.bf16.msra.mxu0 %v2538
    %4026 = vmatmul.bf16.gmra.mxu0 %v3989
    %v4027 = vpop.f32.mrf.mxu0
    %v4028 = vadd.f32 %v1171, %v4027
    %v4029 = vpop.f32.mrf.mxu0
    %v4030 = vadd.f32 %v1171, %v4029
    %4031 = vdwg.mxu0
    %4032 = vmatpush.bf16.msra.mxu0 %v2727
    %4033 = vmatpush.bf16.msra.mxu0 %v2724
    %4034 = vmatpush.bf16.msra.mxu0 %v2721
    %4035 = vmatpush.bf16.msra.mxu0 %v2718
    %4036 = vmatpush.bf16.msra.mxu0 %v2715
    %4037 = vmatpush.bf16.msra.mxu0 %v2712
    %4038 = vmatpush.bf16.msra.mxu0 %v2709
    %4039 = vmatpush.bf16.msra.mxu0 %v2706
    %4040 = vmatmul.bf16.gmra.mxu0 %v3529
    %v4041 = vpop.f32.mrf.mxu0
    %v4042 = vadd.f32 %v1177, %v4041
    %v4043 = vpop.f32.mrf.mxu0
    %v4044 = vadd.f32 %v1177, %v4043
    %4045 = vdwg.mxu0
    %4046 = vmatpush.bf16.msra.mxu0 %v2728
    %4047 = vmatpush.bf16.msra.mxu0 %v2725
    %4048 = vmatpush.bf16.msra.mxu0 %v2722
    %4049 = vmatpush.bf16.msra.mxu0 %v2719
    %4050 = vmatpush.bf16.msra.mxu0 %v2716
    %4051 = vmatpush.bf16.msra.mxu0 %v2713
    %4052 = vmatpush.bf16.msra.mxu0 %v2710
    %4053 = vmatpush.bf16.msra.mxu0 %v2707
    %4054 = vmatmul.bf16.gmra.mxu0 %v3529
    %v4055 = vpop.f32.mrf.mxu0
    %v4056 = vadd.f32 %v1178, %v4055
    %v4057 = vpop.f32.mrf.mxu0
    %v4058 = vadd.f32 %v1178, %v4057
    %4059 = vdwg.mxu0
    %4060 = vmatpush.bf16.msra.mxu0 %v2729
    %4061 = vmatpush.bf16.msra.mxu0 %v2726
    %4062 = vmatpush.bf16.msra.mxu0 %v2723
    %4063 = vmatpush.bf16.msra.mxu0 %v2720
    %4064 = vmatpush.bf16.msra.mxu0 %v2717
    %4065 = vmatpush.bf16.msra.mxu0 %v2714
    %4066 = vmatpush.bf16.msra.mxu0 %v2711
    %4067 = vmatpush.bf16.msra.mxu0 %v2708
    %4068 = vmatmul.bf16.gmra.mxu0 %v3529
    %v4069 = vpop.f32.mrf.mxu0
    %v4070 = vadd.f32 %v1179, %v4069
    %v4071 = vpop.f32.mrf.mxu0
    %v4072 = vadd.f32 %v1179, %v4071
    %4073 = vdwg.mxu0
    %v4074 = vadd.f32 %v4000, %v4042
    %v4075 = vadd.f32 %v4002, %v4044
    %v4076 = vxor.u32 %v4074, 2147483648
    %v4077 = vxor.u32 %v4075, 2147483648
    %v4078 = vmul.f32 %v4076, 1.442695
    %v4079 = vpow.pop %v4078
    %v4080 = vmul.f32 %v4077, 1.442695
    %v4081 = vpow.pop %v4080
    %v4082 = vadd.f32 %v4079, 1.0
    %v4083 = vadd.f32 %v4081, 1.0
    %v4084 = vrcp.pop %v4082
    %v4085 = vmul.f32 %v4082, %v4084
    %v4086 = vsub.f32 1.0, %v4085
    %v4087 = vmul.f32 %v4084, %v4086
    %v4088 = vadd.f32 %v4084, %v4087
    %vm4089 = vweird.f32 %v4082
    %vm4090 = vweird.f32 %v4084
    %vm4091 = vmor %vm4089, %vm4090
    %v4092 = vsel %vm4091, %v4084, %v4088
    %v4093 = vand.u32 2147483647, %v4082
    %vm4094 = vcmp.eq.f32.partialorder %v4093, 8.507059e+37
    %v4095 = vand.u32 %v4082, 2147483648
    %v4096 = vor.u32 1.1754944e-38, %v4095
    %v4097 = vsel %vm4094, %v4096, %v4092
    %v4098 = vmul.f32 1.0, %v4097
    %v4099 = vrcp.pop %v4083
    %v4100 = vmul.f32 %v4083, %v4099
    %v4101 = vsub.f32 1.0, %v4100
    %v4102 = vmul.f32 %v4099, %v4101
    %v4103 = vadd.f32 %v4099, %v4102
    %vm4104 = vweird.f32 %v4083
    %vm4105 = vweird.f32 %v4099
    %vm4106 = vmor %vm4104, %vm4105
    %v4107 = vsel %vm4106, %v4099, %v4103
    %v4108 = vand.u32 2147483647, %v4083
    %vm4109 = vcmp.eq.f32.partialorder %v4108, 8.507059e+37
    %v4110 = vand.u32 %v4083, 2147483648
    %v4111 = vor.u32 1.1754944e-38, %v4110
    %v4112 = vsel %vm4109, %v4111, %v4107
    %v4113 = vmul.f32 1.0, %v4112
    %v4114 = vadd.f32 %v4014, %v4056
    %v4115 = vadd.f32 %v4016, %v4058
    %v4116 = vxor.u32 %v4114, 2147483648
    %v4117 = vxor.u32 %v4115, 2147483648
    %v4118 = vmul.f32 %v4116, 1.442695
    %v4119 = vpow.pop %v4118
    %v4120 = vmul.f32 %v4117, 1.442695
    %v4121 = vpow.pop %v4120
    %v4122 = vadd.f32 %v4119, 1.0
    %v4123 = vadd.f32 %v4121, 1.0
    %v4124 = vrcp.pop %v4122
    %v4125 = vmul.f32 %v4122, %v4124
    %v4126 = vsub.f32 1.0, %v4125
    %v4127 = vmul.f32 %v4124, %v4126
    %v4128 = vadd.f32 %v4124, %v4127
    %vm4129 = vweird.f32 %v4122
    %vm4130 = vweird.f32 %v4124
    %vm4131 = vmor %vm4129, %vm4130
    %v4132 = vsel %vm4131, %v4124, %v4128
    %v4133 = vand.u32 2147483647, %v4122
    %vm4134 = vcmp.eq.f32.partialorder %v4133, 8.507059e+37
    %v4135 = vand.u32 %v4122, 2147483648
    %v4136 = vor.u32 1.1754944e-38, %v4135
    %v4137 = vsel %vm4134, %v4136, %v4132
    %v4138 = vmul.f32 1.0, %v4137
    %v4139 = vrcp.pop %v4123
    %v4140 = vmul.f32 %v4123, %v4139
    %v4141 = vsub.f32 1.0, %v4140
    %v4142 = vmul.f32 %v4139, %v4141
    %v4143 = vadd.f32 %v4139, %v4142
    %vm4144 = vweird.f32 %v4123
    %vm4145 = vweird.f32 %v4139
    %vm4146 = vmor %vm4144, %vm4145
    %v4147 = vsel %vm4146, %v4139, %v4143
    %v4148 = vand.u32 2147483647, %v4123
    %vm4149 = vcmp.eq.f32.partialorder %v4148, 8.507059e+37
    %v4150 = vand.u32 %v4123, 2147483648
    %v4151 = vor.u32 1.1754944e-38, %v4150
    %v4152 = vsel %vm4149, %v4151, %v4147
    %v4153 = vmul.f32 1.0, %v4152
    %v4154 = vmul.f32 %v4098, %v4070
    %v4155 = vmul.f32 %v4113, %v4072
    %v4156 = vadd.f32 %v4028, %v4154
    %v4157 = vadd.f32 %v4030, %v4155
    %v4158 = vtanh.pop %v4156
    %v4159 = vtanh.pop %v4157
    %v4160 = vsub.f32 1.0, %v4138
    %v4161 = vsub.f32 1.0, %v4153
    %v4162 = vmul.f32 %v4160, %v4158
    %v4163 = vmul.f32 %v4161, %v4159
    %v4164 = vmul.f32 %v4138, %v3527
    %v4165 = vmul.f32 %v4153, %v3528
    %v4166 = vadd.f32 %v4162, %v4164
    %v4167 = vadd.f32 %v4163, %v4165
    %4168 = vst [vmem:[#allocation17] sm:$0xff] %v4166
    %4169 = vst [vmem:[#allocation17 + $0x8] sm:$0xff] %v4167
    // Predicated region
    $region106: #{tpu_custom_call.1} parent=1 // pred_check
      _
    $region107: #{tpu_custom_call.1} parent=1 // pred_check_branch
      %4171 = sbr.rel (0) target = $region109
    $region108: #{tpu_custom_call.1} parent=1 // pred_region
      %4173 = vsyncadd [#allocation4], 0
      %s4174 = sshll.u32 [#allocation17], 4
      %s4175 = int_to_ptr.vmem [resolvable:$true] %s4174
      %s4176 = sshll.u32 %s17, 4
      %s4177 = int_to_ptr.hbm [resolvable:$true] %s4176
      %4182 = dma.vmem_to_hbm [thread:$0]  %s4175, 256, %s4177, [#allocation4], 128, 128, 8
    $region109: #{tpu_custom_call.1} parent=1 // pred_fallthru
      _
    // Predicated region
    $region110: #{tpu_custom_call.1} parent=1 // pred_check
      _
    $region111: #{tpu_custom_call.1} parent=1 // pred_check_branch
      %4184 = sbr.rel (0) target = $region113
    $region112: #{tpu_custom_call.1} parent=1 // pred_region
      %4186 = dma.done [#allocation4], 256
    $region113: #{tpu_custom_call.1} parent=1 // pred_fallthru
      _
    %4187 = vsyncpa [#allocation3], 1
    %4188 = vsyncpa [#allocation6], 1
    %4189 = vsyncpa [#allocation9], 1
    %4190 = vsyncpa [#allocation12], 1
    %4191 = vsyncpa [#allocation15], 1
    %4192 = vsyncpa [#allocation4], 1

</llo_original>
